<compile_context>
chip_gen: v7x
topology: tpu7x:2x2x1
jax: 0.10.0
libtpu: 0.0.40
codegen_flags: <defaults>
</compile_context>

<pallas_src>
import jax
import jax.numpy as jnp
from jax.experimental import pallas as pl
from jax.experimental.pallas import tpu as pltpu


def _round_up(x, m):
    return (x + m - 1) // m * m


def _pad2d(w, rows, cols):
    return jnp.pad(w, ((0, rows - w.shape[0]), (0, cols - w.shape[1])))


def _pad1d(v, n):
    return jnp.pad(v, (0, n - v.shape[0]))


# ---------------------------------------------------------------------------
# Kernel
# ---------------------------------------------------------------------------

def _make_gru_kernel(hp, t_blk, seq_len, needs_mask):
    """Build the recurrence kernel.

    Ref layout per grid step (one grid step == t_blk time steps):
      gx_ref:  (Bp, t_blk, 3*Hp)  precomputed x @ [Wz_x|Wr_x|Wh_x] + biases
                                  (possibly bf16 in HBM; cast to f32 on load)
      wzr_ref: (Hp, 2*Hp) f32     fused hidden weights for z,r (act on h)
      whh_ref: (Hp, Hp)   f32     hidden weights for candidate (act on r*h)
      h_ref:   (Bp, Hp)   f32     output block; constant index map keeps it
                                  VMEM-resident -> carries h across grid steps.
    """

    def kernel(gx_ref, wzr_ref, whh_ref, h_ref):
        @pl.when(pl.program_id(0) == 0)
        def _init():
            h_ref[...] = jnp.zeros_like(h_ref)

        # Grid-invariant weights: load once per grid step, outside the loop.
        wzr = wzr_ref[...]
        whh = whh_ref[...]
        t0 = pl.program_id(0) * t_blk

        h = h_ref[...]
        # Static unroll (t_blk is small, <= 64): all time slices are static.
        for i in range(t_blk):
            gx = gx_ref[:, i, :].astype(jnp.float32)              # (Bp, 3*Hp)
            zr_pre = gx[:, : 2 * hp] + jnp.dot(
                h, wzr, preferred_element_type=jnp.float32)
            zr = 0.5 * (jnp.tanh(0.5 * zr_pre) + 1.0)              # == sigmoid
            z = zr[:, :hp]
            r = zr[:, hp:]
            h_tilde = jnp.tanh(
                gx[:, 2 * hp:] + jnp.dot(
                    r * h, whh, preferred_element_type=jnp.float32))
            h_new = h + z * (h_tilde - h)
            if needs_mask:
                # Tail time steps beyond the real sequence length are no-ops.
                h_new = jnp.where(t0 + i < seq_len, h_new, h)
            h = h_new
        h_ref[...] = h

    return kernel


# ---------------------------------------------------------------------------
# Parameter preparation
# ---------------------------------------------------------------------------

def prepare_kernel_params(params, input_size, hidden_size, lane_multiple=128):
    """Fuse / transpose / pad the per-gate Linear params into kernel layout.

    Each Linear has weight (H, I+H) acting on [x, h] and bias (H,).  Split into
    the x part (I, H) and h part (H, H), transpose to (in, out), fuse the three
    gates along the output dim, zero-pad H up to a lane multiple.  All weights
    stay f32 (the matmuls are f32 everywhere for backend portability).
    """
    I, H = input_size, hidden_size
    Hp = _round_up(H, lane_multiple)

    def split(w):
        wt = w.T                        # (I+H, H)
        return wt[:I, :], wt[I:, :]     # (I, H), (H, H)

    wz_x, wz_h = split(params["W_z"])
    wr_x, wr_h = split(params["W_r"])
    wh_x, wh_h = split(params["W_h"])

    wx = jnp.concatenate(
        [_pad2d(wz_x, I, Hp), _pad2d(wr_x, I, Hp), _pad2d(wh_x, I, Hp)], axis=1)
    bias = jnp.concatenate(
        [_pad1d(params["b_z"], Hp), _pad1d(params["b_r"], Hp),
         _pad1d(params["b_h"], Hp)])
    wzr_h = jnp.concatenate([_pad2d(wz_h, Hp, Hp), _pad2d(wr_h, Hp, Hp)], axis=1)
    whh = _pad2d(wh_h, Hp, Hp)

    return dict(
        Wx=wx.astype(jnp.float32),          # (I, 3*Hp)
        b=bias.astype(jnp.float32),         # (3*Hp,)
        Wzr_h=wzr_h.astype(jnp.float32),    # (Hp, 2*Hp)
        Wh_h=whh.astype(jnp.float32),       # (Hp, Hp)
        hidden_size=H,
        hidden_padded=Hp,
        input_size=I,
    )


# ---------------------------------------------------------------------------
# VMEM-aware time blocking
# ---------------------------------------------------------------------------

_VMEM_BUDGET_BYTES = 40 << 20        # conservative: fits v7x's 64 MiB VMEM
_DEFAULT_SCOPED_VMEM = 32 << 20      # default scoped limit on v6e/v7x
_MAX_T_BLK = 64                      # bound on static unroll length


def _vmem_needed_bytes(t_blk, bp, hp, gx_itemsize):
    gx_block = bp * t_blk * 3 * hp * gx_itemsize     # double-buffered input
    weights = (hp * 2 * hp + hp * hp) * 4            # f32, double-buffered
    h_out = bp * hp * 4
    return 2 * gx_block + 2 * weights + 2 * h_out


def _select_time_block(seq_len, bp, hp, gx_itemsize):
    t_blk = min(_round_up(max(seq_len, 1), 8), _MAX_T_BLK)
    while t_blk > 8 and _vmem_needed_bytes(t_blk, bp, hp, gx_itemsize) > _VMEM_BUDGET_BYTES:
        t_blk -= 8
    return t_blk


# ---------------------------------------------------------------------------
# Forward wrapper
# ---------------------------------------------------------------------------

def gru_forward(inputs, kparams, gx_dtype=jnp.bfloat16, t_blk=None):
    """inputs: (B, S, I) f32. Returns the final hidden state (B, H) f32."""
    B, S, I = inputs.shape
    H = kparams["hidden_size"]
    Hp = kparams["hidden_padded"]
    Bp = _round_up(B, 8)

    x = inputs
    if Bp != B:
        x = jnp.pad(x, ((0, Bp - B), (0, 0), (0, 0)))

    # Hoisted input projection (no sequential dependency): one big f32 matmul
    # for all time steps.  Batch-major output -> no materialized transpose of
    # the projected tensor; gate biases folded in; stored in gx_dtype (bf16 by
    # default) to halve the per-step HBM stream into the recurrence.
    gx = jnp.einsum("bsi,ih->bsh", x, kparams["Wx"],
                    preferred_element_type=jnp.float32) + kparams["b"]
    gx = gx.astype(gx_dtype)                                     # (Bp, S, 3*Hp)

    gx_itemsize = jnp.dtype(gx_dtype).itemsize
    if t_blk is None:
        t_blk = _select_time_block(S, Bp, Hp, gx_itemsize)
    assert t_blk > 0 and t_blk % 8 == 0, "t_blk must be a positive multiple of 8"

    # Pad the time axis up to a multiple of t_blk; tail steps masked in-kernel.
    S_pad = _round_up(S, t_blk)
    if S_pad != S:
        gx = jnp.pad(gx, ((0, 0), (0, S_pad - S), (0, 0)))

    needed = _vmem_needed_bytes(t_blk, Bp, Hp, gx_itemsize)
    vmem_limit = None if needed <= _DEFAULT_SCOPED_VMEM else needed + (2 << 20)

    kernel = _make_gru_kernel(Hp, t_blk, S, needs_mask=(S_pad != S))

    grid_spec = pltpu.PrefetchScalarGridSpec(
        num_scalar_prefetch=0,
        grid=(S_pad // t_blk,),
        in_specs=[
            pl.BlockSpec((Bp, t_blk, 3 * Hp), lambda tb: (0, tb, 0)),
            pl.BlockSpec((Hp, 2 * Hp), lambda tb: (0, 0)),
            pl.BlockSpec((Hp, Hp), lambda tb: (0, 0)),
        ],
        out_specs=pl.BlockSpec((Bp, Hp), lambda tb: (0, 0)),
    )

    h = pl.pallas_call(
        kernel,
        out_shape=jax.ShapeDtypeStruct((Bp, Hp), jnp.float32),
        grid_spec=grid_spec,
        compiler_params=pltpu.CompilerParams(
            dimension_semantics=("arbitrary",),      # true recurrence over time
            vmem_limit_bytes=vmem_limit),
    )(gx, kparams["Wzr_h"], kparams["Wh_h"])

    return h[:B, :H]


# ---------------------------------------------------------------------------
# Reference & init
# ---------------------------------------------------------------------------

def init_params(key, input_size, hidden_size):
    """Per-gate params matching nn.Linear(I+H, H): weight (H, I+H), bias (H,)."""
    I, H = input_size, hidden_size
    ks = jax.random.split(key, 6)
    bound = 1.0 / jnp.sqrt(jnp.float32(I + H))

    def lin(kw, kb):
        w = jax.random.uniform(kw, (H, I + H), jnp.float32, -bound, bound)
        b = jax.random.uniform(kb, (H,), jnp.float32, -bound, bound)
        return w, b

    W_z, b_z = lin(ks[0], ks[1])
    W_r, b_r = lin(ks[2], ks[3])
    W_h, b_h = lin(ks[4], ks[5])
    return dict(W_z=W_z, b_z=b_z, W_r=W_r, b_r=b_r, W_h=W_h, b_h=b_h)


def gru_reference(inputs, params):
    """Pure-JAX f32 reference mirroring the PyTorch forward exactly."""
    B, S, I = inputs.shape
    H = params["b_z"].shape[0]
    h0 = jnp.zeros((B, H), jnp.float32)

    def step(h, x_t):
        combined = jnp.concatenate([x_t, h], axis=1)
        z = jax.nn.sigmoid(combined @ params["W_z"].T + params["b_z"])
        r = jax.nn.sigmoid(combined @ params["W_r"].T + params["b_r"])
        combined_r = jnp.concatenate([x_t, r * h], axis=1)
        h_tilde = jnp.tanh(combined_r @ params["W_h"].T + params["b_h"])
        return (1.0 - z) * h + z * h_tilde, None

    h, _ = jax.lax.scan(step, h0, jnp.transpose(inputs, (1, 0, 2)))
    return h


if __name__ == "__main__":
    B, S, I, H = 2, 8, 16, 32

    key = jax.random.PRNGKey(0)
    k_x, k_p = jax.random.split(key)
    x = jax.random.normal(k_x, (B, S, I), jnp.float32)
    params = init_params(k_p, I, H)
    ref = gru_reference(x, params)

    kp = prepare_kernel_params(params, I, H)

    # Exact-math path: f32 gx stream, tight tolerance.
    out_f32 = jax.block_until_ready(gru_forward(x, kp, gx_dtype=jnp.float32))
    assert out_f32.shape == (B, H)
    assert jnp.allclose(out_f32, ref, atol=1e-4, rtol=1e-4), "f32 kernel mismatch"

    # Bandwidth-optimized path: bf16 gx stream (all dots stay f32).
    out_bf16 = jax.block_until_ready(gru_forward(x, kp, gx_dtype=jnp.bfloat16))
    assert out_bf16.shape == (B, H)
    assert jnp.allclose(out_bf16, ref, atol=5e-2, rtol=5e-2), "bf16-gx kernel mismatch"

    # Odd sequence length exercises the padded-time / in-kernel masking path.
    S_odd = 11
    x_odd = jax.random.normal(jax.random.PRNGKey(1), (B, S_odd, I), jnp.float32)
    ref_odd = gru_reference(x_odd, params)
    out_odd = jax.block_until_ready(gru_forward(x_odd, kp, gx_dtype=jnp.float32))
    assert out_odd.shape == (B, H)
    assert jnp.allclose(out_odd, ref_odd, atol=1e-4, rtol=1e-4), "odd-S kernel mismatch"

    print("KERNEL_OK")
</pallas_src>

<mosaic_0001>
module attributes {stable_mosaic.version = 11 : i64} {
  func.func @kernel(%arg0: i32, %arg1: memref<8x8x384xf32, #tpu.memory_space<vmem>>, %arg2: memref<128x256xf32, #tpu.memory_space<vmem>>, %arg3: memref<128x128xf32, #tpu.memory_space<vmem>>, %arg4: memref<8x128xf32, #tpu.memory_space<vmem>>) attributes {dimension_semantics = [#tpu.dimension_semantics<arbitrary>], iteration_bounds = array<i64: 1>, scalar_prefetch = 0 : i64, scratch_operands = 0 : i64, tpu.core_type = #tpu.core_type<tc>, window_params = [{transform_indices = @transform_0, window_bounds = array<i64: 8, 8, 384>}, {pipeline_mode = #tpu.pipeline_mode<synchronous>, transform_indices = @transform_1, window_bounds = array<i64: 128, 256>}, {pipeline_mode = #tpu.pipeline_mode<synchronous>, transform_indices = @transform_2, window_bounds = array<i64: 128, 128>}, {pipeline_mode = #tpu.pipeline_mode<synchronous>, transform_indices = @transform_3, window_bounds = array<i64: 8, 128>}]} {
    %c0_i32 = arith.constant 0 : i32
    %0 = arith.cmpi eq, %arg0, %c0_i32 : i32
    %1 = arith.extui %0 : i1 to i32
    %c0_i32_0 = arith.constant 0 : i32
    %2 = arith.cmpi ne, %1, %c0_i32_0 : i32
    scf.if %2 {
      %cst_64 = arith.constant 0.000000e+00 : f32
      %183 = vector.broadcast %cst_64 : f32 to vector<8x128xf32>
      %c0_65 = arith.constant 0 : index
      %c0_66 = arith.constant 0 : index
      %184 = vector.load %arg4[%c0_65, %c0_66] : memref<8x128xf32, #tpu.memory_space<vmem>>, vector<8x128xf32>
      tpu.vector_store %arg4[%c0_65, %c0_66], %183 {strides = array<i32>} : memref<8x128xf32, #tpu.memory_space<vmem>>, vector<8x128xf32>,
    } else {
    }
    %c0 = arith.constant 0 : index
    %c0_1 = arith.constant 0 : index
    %3 = vector.load %arg2[%c0, %c0_1] : memref<128x256xf32, #tpu.memory_space<vmem>>, vector<128x256xf32>
    %c0_2 = arith.constant 0 : index
    %c0_3 = arith.constant 0 : index
    %4 = vector.load %arg3[%c0_2, %c0_3] : memref<128x128xf32, #tpu.memory_space<vmem>>, vector<128x128xf32>
    %c0_4 = arith.constant 0 : index
    %c0_5 = arith.constant 0 : index
    %5 = vector.load %arg4[%c0_4, %c0_5] : memref<8x128xf32, #tpu.memory_space<vmem>>, vector<8x128xf32>
    %c0_6 = arith.constant 0 : index
    %c0_7 = arith.constant 0 : index
    %c0_8 = arith.constant 0 : index
    %6 = vector.load %arg1[%c0_6, %c0_7, %c0_8] : memref<8x8x384xf32, #tpu.memory_space<vmem>>, vector<8x1x384xf32>
    %7 = vector.shape_cast %6 : vector<8x1x384xf32> to vector<8x384xf32>
    %8 = vector.extract_strided_slice %7 {offsets = [0, 0], sizes = [8, 256], strides = [1, 1]} : vector<8x384xf32> to vector<8x256xf32>
    %cst = arith.constant dense<0.000000e+00> : vector<8x256xf32>
    %9 = tpu.matmul %5, %3, %cst {dimension_numbers = #tpu.dot_dimension_numbers<[1], [0], [0], [1], [0, 0, 1, 1], [], []>} : vector<8x128xf32>, vector<128x256xf32>, vector<8x256xf32> -> vector<8x256xf32>
    %10 = arith.addf %8, %9 : vector<8x256xf32>
    %cst_9 = arith.constant 5.000000e-01 : f32
    %11 = vector.broadcast %cst_9 : f32 to vector<8x256xf32>
    %12 = arith.mulf %11, %10 : vector<8x256xf32>
    %13 = math.tanh %12 : vector<8x256xf32>
    %cst_10 = arith.constant 1.000000e+00 : f32
    %14 = vector.broadcast %cst_10 : f32 to vector<8x256xf32>
    %15 = arith.addf %13, %14 : vector<8x256xf32>
    %cst_11 = arith.constant 5.000000e-01 : f32
    %16 = vector.broadcast %cst_11 : f32 to vector<8x256xf32>
    %17 = arith.mulf %16, %15 : vector<8x256xf32>
    %18 = vector.extract_strided_slice %17 {offsets = [0, 0], sizes = [8, 128], strides = [1, 1]} : vector<8x256xf32> to vector<8x128xf32>
    %19 = vector.extract_strided_slice %17 {offsets = [0, 128], sizes = [8, 128], strides = [1, 1]} : vector<8x256xf32> to vector<8x128xf32>
    %20 = vector.extract_strided_slice %7 {offsets = [0, 256], sizes = [8, 128], strides = [1, 1]} : vector<8x384xf32> to vector<8x128xf32>
    %21 = arith.mulf %19, %5 : vector<8x128xf32>
    %cst_12 = arith.constant dense<0.000000e+00> : vector<8x128xf32>
    %22 = tpu.matmul %21, %4, %cst_12 {dimension_numbers = #tpu.dot_dimension_numbers<[1], [0], [0], [1], [0, 0, 1, 1], [], []>} : vector<8x128xf32>, vector<128x128xf32>, vector<8x128xf32> -> vector<8x128xf32>
    %23 = arith.addf %20, %22 : vector<8x128xf32>
    %24 = math.tanh %23 : vector<8x128xf32>
    %25 = arith.subf %24, %5 : vector<8x128xf32>
    %26 = arith.mulf %18, %25 : vector<8x128xf32>
    %27 = arith.addf %5, %26 : vector<8x128xf32>
    %c0_13 = arith.constant 0 : index
    %c1 = arith.constant 1 : index
    %c0_14 = arith.constant 0 : index
    %28 = vector.load %arg1[%c0_13, %c1, %c0_14] : memref<8x8x384xf32, #tpu.memory_space<vmem>>, vector<8x1x384xf32>
    %29 = vector.shape_cast %28 : vector<8x1x384xf32> to vector<8x384xf32>
    %30 = vector.extract_strided_slice %29 {offsets = [0, 0], sizes = [8, 256], strides = [1, 1]} : vector<8x384xf32> to vector<8x256xf32>
    %cst_15 = arith.constant dense<0.000000e+00> : vector<8x256xf32>
    %31 = tpu.matmul %27, %3, %cst_15 {dimension_numbers = #tpu.dot_dimension_numbers<[1], [0], [0], [1], [0, 0, 1, 1], [], []>} : vector<8x128xf32>, vector<128x256xf32>, vector<8x256xf32> -> vector<8x256xf32>
    %32 = arith.addf %30, %31 : vector<8x256xf32>
    %cst_16 = arith.constant 5.000000e-01 : f32
    %33 = vector.broadcast %cst_16 : f32 to vector<8x256xf32>
    %34 = arith.mulf %33, %32 : vector<8x256xf32>
    %35 = math.tanh %34 : vector<8x256xf32>
    %cst_17 = arith.constant 1.000000e+00 : f32
    %36 = vector.broadcast %cst_17 : f32 to vector<8x256xf32>
    %37 = arith.addf %35, %36 : vector<8x256xf32>
    %cst_18 = arith.constant 5.000000e-01 : f32
    %38 = vector.broadcast %cst_18 : f32 to vector<8x256xf32>
    %39 = arith.mulf %38, %37 : vector<8x256xf32>
    %40 = vector.extract_strided_slice %39 {offsets = [0, 0], sizes = [8, 128], strides = [1, 1]} : vector<8x256xf32> to vector<8x128xf32>
    %41 = vector.extract_strided_slice %39 {offsets = [0, 128], sizes = [8, 128], strides = [1, 1]} : vector<8x256xf32> to vector<8x128xf32>
    %42 = vector.extract_strided_slice %29 {offsets = [0, 256], sizes = [8, 128], strides = [1, 1]} : vector<8x384xf32> to vector<8x128xf32>
    %43 = arith.mulf %41, %27 : vector<8x128xf32>
    %cst_19 = arith.constant dense<0.000000e+00> : vector<8x128xf32>
    %44 = tpu.matmul %43, %4, %cst_19 {dimension_numbers = #tpu.dot_dimension_numbers<[1], [0], [0], [1], [0, 0, 1, 1], [], []>} : vector<8x128xf32>, vector<128x128xf32>, vector<8x128xf32> -> vector<8x128xf32>
    %45 = arith.addf %42, %44 : vector<8x128xf32>
    %46 = math.tanh %45 : vector<8x128xf32>
    %47 = arith.subf %46, %27 : vector<8x128xf32>
    %48 = arith.mulf %40, %47 : vector<8x128xf32>
    %49 = arith.addf %27, %48 : vector<8x128xf32>
    %c0_20 = arith.constant 0 : index
    %c2 = arith.constant 2 : index
    %c0_21 = arith.constant 0 : index
    %50 = vector.load %arg1[%c0_20, %c2, %c0_21] : memref<8x8x384xf32, #tpu.memory_space<vmem>>, vector<8x1x384xf32>
    %51 = vector.shape_cast %50 : vector<8x1x384xf32> to vector<8x384xf32>
    %52 = vector.extract_strided_slice %51 {offsets = [0, 0], sizes = [8, 256], strides = [1, 1]} : vector<8x384xf32> to vector<8x256xf32>
    %cst_22 = arith.constant dense<0.000000e+00> : vector<8x256xf32>
    %53 = tpu.matmul %49, %3, %cst_22 {dimension_numbers = #tpu.dot_dimension_numbers<[1], [0], [0], [1], [0, 0, 1, 1], [], []>} : vector<8x128xf32>, vector<128x256xf32>, vector<8x256xf32> -> vector<8x256xf32>
    %54 = arith.addf %52, %53 : vector<8x256xf32>
    %cst_23 = arith.constant 5.000000e-01 : f32
    %55 = vector.broadcast %cst_23 : f32 to vector<8x256xf32>
    %56 = arith.mulf %55, %54 : vector<8x256xf32>
    %57 = math.tanh %56 : vector<8x256xf32>
    %cst_24 = arith.constant 1.000000e+00 : f32
    %58 = vector.broadcast %cst_24 : f32 to vector<8x256xf32>
    %59 = arith.addf %57, %58 : vector<8x256xf32>
    %cst_25 = arith.constant 5.000000e-01 : f32
    %60 = vector.broadcast %cst_25 : f32 to vector<8x256xf32>
    %61 = arith.mulf %60, %59 : vector<8x256xf32>
    %62 = vector.extract_strided_slice %61 {offsets = [0, 0], sizes = [8, 128], strides = [1, 1]} : vector<8x256xf32> to vector<8x128xf32>
    %63 = vector.extract_strided_slice %61 {offsets = [0, 128], sizes = [8, 128], strides = [1, 1]} : vector<8x256xf32> to vector<8x128xf32>
    %64 = vector.extract_strided_slice %51 {offsets = [0, 256], sizes = [8, 128], strides = [1, 1]} : vector<8x384xf32> to vector<8x128xf32>
    %65 = arith.mulf %63, %49 : vector<8x128xf32>
    %cst_26 = arith.constant dense<0.000000e+00> : vector<8x128xf32>
    %66 = tpu.matmul %65, %4, %cst_26 {dimension_numbers = #tpu.dot_dimension_numbers<[1], [0], [0], [1], [0, 0, 1, 1], [], []>} : vector<8x128xf32>, vector<128x128xf32>, vector<8x128xf32> -> vector<8x128xf32>
    %67 = arith.addf %64, %66 : vector<8x128xf32>
    %68 = math.tanh %67 : vector<8x128xf32>
    %69 = arith.subf %68, %49 : vector<8x128xf32>
    %70 = arith.mulf %62, %69 : vector<8x128xf32>
    %71 = arith.addf %49, %70 : vector<8x128xf32>
    %c0_27 = arith.constant 0 : index
    %c3 = arith.constant 3 : index
    %c0_28 = arith.constant 0 : index
    %72 = vector.load %arg1[%c0_27, %c3, %c0_28] : memref<8x8x384xf32, #tpu.memory_space<vmem>>, vector<8x1x384xf32>
    %73 = vector.shape_cast %72 : vector<8x1x384xf32> to vector<8x384xf32>
    %74 = vector.extract_strided_slice %73 {offsets = [0, 0], sizes = [8, 256], strides = [1, 1]} : vector<8x384xf32> to vector<8x256xf32>
    %cst_29 = arith.constant dense<0.000000e+00> : vector<8x256xf32>
    %75 = tpu.matmul %71, %3, %cst_29 {dimension_numbers = #tpu.dot_dimension_numbers<[1], [0], [0], [1], [0, 0, 1, 1], [], []>} : vector<8x128xf32>, vector<128x256xf32>, vector<8x256xf32> -> vector<8x256xf32>
    %76 = arith.addf %74, %75 : vector<8x256xf32>
    %cst_30 = arith.constant 5.000000e-01 : f32
    %77 = vector.broadcast %cst_30 : f32 to vector<8x256xf32>
    %78 = arith.mulf %77, %76 : vector<8x256xf32>
    %79 = math.tanh %78 : vector<8x256xf32>
    %cst_31 = arith.constant 1.000000e+00 : f32
    %80 = vector.broadcast %cst_31 : f32 to vector<8x256xf32>
    %81 = arith.addf %79, %80 : vector<8x256xf32>
    %cst_32 = arith.constant 5.000000e-01 : f32
    %82 = vector.broadcast %cst_32 : f32 to vector<8x256xf32>
    %83 = arith.mulf %82, %81 : vector<8x256xf32>
    %84 = vector.extract_strided_slice %83 {offsets = [0, 0], sizes = [8, 128], strides = [1, 1]} : vector<8x256xf32> to vector<8x128xf32>
    %85 = vector.extract_strided_slice %83 {offsets = [0, 128], sizes = [8, 128], strides = [1, 1]} : vector<8x256xf32> to vector<8x128xf32>
    %86 = vector.extract_strided_slice %73 {offsets = [0, 256], sizes = [8, 128], strides = [1, 1]} : vector<8x384xf32> to vector<8x128xf32>
    %87 = arith.mulf %85, %71 : vector<8x128xf32>
    %cst_33 = arith.constant dense<0.000000e+00> : vector<8x128xf32>
    %88 = tpu.matmul %87, %4, %cst_33 {dimension_numbers = #tpu.dot_dimension_numbers<[1], [0], [0], [1], [0, 0, 1, 1], [], []>} : vector<8x128xf32>, vector<128x128xf32>, vector<8x128xf32> -> vector<8x128xf32>
    %89 = arith.addf %86, %88 : vector<8x128xf32>
    %90 = math.tanh %89 : vector<8x128xf32>
    %91 = arith.subf %90, %71 : vector<8x128xf32>
    %92 = arith.mulf %84, %91 : vector<8x128xf32>
    %93 = arith.addf %71, %92 : vector<8x128xf32>
    %c0_34 = arith.constant 0 : index
    %c4 = arith.constant 4 : index
    %c0_35 = arith.constant 0 : index
    %94 = vector.load %arg1[%c0_34, %c4, %c0_35] : memref<8x8x384xf32, #tpu.memory_space<vmem>>, vector<8x1x384xf32>
    %95 = vector.shape_cast %94 : vector<8x1x384xf32> to vector<8x384xf32>
    %96 = vector.extract_strided_slice %95 {offsets = [0, 0], sizes = [8, 256], strides = [1, 1]} : vector<8x384xf32> to vector<8x256xf32>
    %cst_36 = arith.constant dense<0.000000e+00> : vector<8x256xf32>
    %97 = tpu.matmul %93, %3, %cst_36 {dimension_numbers = #tpu.dot_dimension_numbers<[1], [0], [0], [1], [0, 0, 1, 1], [], []>} : vector<8x128xf32>, vector<128x256xf32>, vector<8x256xf32> -> vector<8x256xf32>
    %98 = arith.addf %96, %97 : vector<8x256xf32>
    %cst_37 = arith.constant 5.000000e-01 : f32
    %99 = vector.broadcast %cst_37 : f32 to vector<8x256xf32>
    %100 = arith.mulf %99, %98 : vector<8x256xf32>
    %101 = math.tanh %100 : vector<8x256xf32>
    %cst_38 = arith.constant 1.000000e+00 : f32
    %102 = vector.broadcast %cst_38 : f32 to vector<8x256xf32>
    %103 = arith.addf %101, %102 : vector<8x256xf32>
    %cst_39 = arith.constant 5.000000e-01 : f32
    %104 = vector.broadcast %cst_39 : f32 to vector<8x256xf32>
    %105 = arith.mulf %104, %103 : vector<8x256xf32>
    %106 = vector.extract_strided_slice %105 {offsets = [0, 0], sizes = [8, 128], strides = [1, 1]} : vector<8x256xf32> to vector<8x128xf32>
    %107 = vector.extract_strided_slice %105 {offsets = [0, 128], sizes = [8, 128], strides = [1, 1]} : vector<8x256xf32> to vector<8x128xf32>
    %108 = vector.extract_strided_slice %95 {offsets = [0, 256], sizes = [8, 128], strides = [1, 1]} : vector<8x384xf32> to vector<8x128xf32>
    %109 = arith.mulf %107, %93 : vector<8x128xf32>
    %cst_40 = arith.constant dense<0.000000e+00> : vector<8x128xf32>
    %110 = tpu.matmul %109, %4, %cst_40 {dimension_numbers = #tpu.dot_dimension_numbers<[1], [0], [0], [1], [0, 0, 1, 1], [], []>} : vector<8x128xf32>, vector<128x128xf32>, vector<8x128xf32> -> vector<8x128xf32>
    %111 = arith.addf %108, %110 : vector<8x128xf32>
    %112 = math.tanh %111 : vector<8x128xf32>
    %113 = arith.subf %112, %93 : vector<8x128xf32>
    %114 = arith.mulf %106, %113 : vector<8x128xf32>
    %115 = arith.addf %93, %114 : vector<8x128xf32>
    %c0_41 = arith.constant 0 : index
    %c5 = arith.constant 5 : index
    %c0_42 = arith.constant 0 : index
    %116 = vector.load %arg1[%c0_41, %c5, %c0_42] : memref<8x8x384xf32, #tpu.memory_space<vmem>>, vector<8x1x384xf32>
    %117 = vector.shape_cast %116 : vector<8x1x384xf32> to vector<8x384xf32>
    %118 = vector.extract_strided_slice %117 {offsets = [0, 0], sizes = [8, 256], strides = [1, 1]} : vector<8x384xf32> to vector<8x256xf32>
    %cst_43 = arith.constant dense<0.000000e+00> : vector<8x256xf32>
    %119 = tpu.matmul %115, %3, %cst_43 {dimension_numbers = #tpu.dot_dimension_numbers<[1], [0], [0], [1], [0, 0, 1, 1], [], []>} : vector<8x128xf32>, vector<128x256xf32>, vector<8x256xf32> -> vector<8x256xf32>
    %120 = arith.addf %118, %119 : vector<8x256xf32>
    %cst_44 = arith.constant 5.000000e-01 : f32
    %121 = vector.broadcast %cst_44 : f32 to vector<8x256xf32>
    %122 = arith.mulf %121, %120 : vector<8x256xf32>
    %123 = math.tanh %122 : vector<8x256xf32>
    %cst_45 = arith.constant 1.000000e+00 : f32
    %124 = vector.broadcast %cst_45 : f32 to vector<8x256xf32>
    %125 = arith.addf %123, %124 : vector<8x256xf32>
    %cst_46 = arith.constant 5.000000e-01 : f32
    %126 = vector.broadcast %cst_46 : f32 to vector<8x256xf32>
    %127 = arith.mulf %126, %125 : vector<8x256xf32>
    %128 = vector.extract_strided_slice %127 {offsets = [0, 0], sizes = [8, 128], strides = [1, 1]} : vector<8x256xf32> to vector<8x128xf32>
    %129 = vector.extract_strided_slice %127 {offsets = [0, 128], sizes = [8, 128], strides = [1, 1]} : vector<8x256xf32> to vector<8x128xf32>
    %130 = vector.extract_strided_slice %117 {offsets = [0, 256], sizes = [8, 128], strides = [1, 1]} : vector<8x384xf32> to vector<8x128xf32>
    %131 = arith.mulf %129, %115 : vector<8x128xf32>
    %cst_47 = arith.constant dense<0.000000e+00> : vector<8x128xf32>
    %132 = tpu.matmul %131, %4, %cst_47 {dimension_numbers = #tpu.dot_dimension_numbers<[1], [0], [0], [1], [0, 0, 1, 1], [], []>} : vector<8x128xf32>, vector<128x128xf32>, vector<8x128xf32> -> vector<8x128xf32>
    %133 = arith.addf %130, %132 : vector<8x128xf32>
    %134 = math.tanh %133 : vector<8x128xf32>
    %135 = arith.subf %134, %115 : vector<8x128xf32>
    %136 = arith.mulf %128, %135 : vector<8x128xf32>
    %137 = arith.addf %115, %136 : vector<8x128xf32>
    %c0_48 = arith.constant 0 : index
    %c6 = arith.constant 6 : index
    %c0_49 = arith.constant 0 : index
    %138 = vector.load %arg1[%c0_48, %c6, %c0_49] : memref<8x8x384xf32, #tpu.memory_space<vmem>>, vector<8x1x384xf32>
    %139 = vector.shape_cast %138 : vector<8x1x384xf32> to vector<8x384xf32>
    %140 = vector.extract_strided_slice %139 {offsets = [0, 0], sizes = [8, 256], strides = [1, 1]} : vector<8x384xf32> to vector<8x256xf32>
    %cst_50 = arith.constant dense<0.000000e+00> : vector<8x256xf32>
    %141 = tpu.matmul %137, %3, %cst_50 {dimension_numbers = #tpu.dot_dimension_numbers<[1], [0], [0], [1], [0, 0, 1, 1], [], []>} : vector<8x128xf32>, vector<128x256xf32>, vector<8x256xf32> -> vector<8x256xf32>
    %142 = arith.addf %140, %141 : vector<8x256xf32>
    %cst_51 = arith.constant 5.000000e-01 : f32
    %143 = vector.broadcast %cst_51 : f32 to vector<8x256xf32>
    %144 = arith.mulf %143, %142 : vector<8x256xf32>
    %145 = math.tanh %144 : vector<8x256xf32>
    %cst_52 = arith.constant 1.000000e+00 : f32
    %146 = vector.broadcast %cst_52 : f32 to vector<8x256xf32>
    %147 = arith.addf %145, %146 : vector<8x256xf32>
    %cst_53 = arith.constant 5.000000e-01 : f32
    %148 = vector.broadcast %cst_53 : f32 to vector<8x256xf32>
    %149 = arith.mulf %148, %147 : vector<8x256xf32>
    %150 = vector.extract_strided_slice %149 {offsets = [0, 0], sizes = [8, 128], strides = [1, 1]} : vector<8x256xf32> to vector<8x128xf32>
    %151 = vector.extract_strided_slice %149 {offsets = [0, 128], sizes = [8, 128], strides = [1, 1]} : vector<8x256xf32> to vector<8x128xf32>
    %152 = vector.extract_strided_slice %139 {offsets = [0, 256], sizes = [8, 128], strides = [1, 1]} : vector<8x384xf32> to vector<8x128xf32>
    %153 = arith.mulf %151, %137 : vector<8x128xf32>
    %cst_54 = arith.constant dense<0.000000e+00> : vector<8x128xf32>
    %154 = tpu.matmul %153, %4, %cst_54 {dimension_numbers = #tpu.dot_dimension_numbers<[1], [0], [0], [1], [0, 0, 1, 1], [], []>} : vector<8x128xf32>, vector<128x128xf32>, vector<8x128xf32> -> vector<8x128xf32>
    %155 = arith.addf %152, %154 : vector<8x128xf32>
    %156 = math.tanh %155 : vector<8x128xf32>
    %157 = arith.subf %156, %137 : vector<8x128xf32>
    %158 = arith.mulf %150, %157 : vector<8x128xf32>
    %159 = arith.addf %137, %158 : vector<8x128xf32>
    %c0_55 = arith.constant 0 : index
    %c7 = arith.constant 7 : index
    %c0_56 = arith.constant 0 : index
    %160 = vector.load %arg1[%c0_55, %c7, %c0_56] : memref<8x8x384xf32, #tpu.memory_space<vmem>>, vector<8x1x384xf32>
    %161 = vector.shape_cast %160 : vector<8x1x384xf32> to vector<8x384xf32>
    %162 = vector.extract_strided_slice %161 {offsets = [0, 0], sizes = [8, 256], strides = [1, 1]} : vector<8x384xf32> to vector<8x256xf32>
    %cst_57 = arith.constant dense<0.000000e+00> : vector<8x256xf32>
    %163 = tpu.matmul %159, %3, %cst_57 {dimension_numbers = #tpu.dot_dimension_numbers<[1], [0], [0], [1], [0, 0, 1, 1], [], []>} : vector<8x128xf32>, vector<128x256xf32>, vector<8x256xf32> -> vector<8x256xf32>
    %164 = arith.addf %162, %163 : vector<8x256xf32>
    %cst_58 = arith.constant 5.000000e-01 : f32
    %165 = vector.broadcast %cst_58 : f32 to vector<8x256xf32>
    %166 = arith.mulf %165, %164 : vector<8x256xf32>
    %167 = math.tanh %166 : vector<8x256xf32>
    %cst_59 = arith.constant 1.000000e+00 : f32
    %168 = vector.broadcast %cst_59 : f32 to vector<8x256xf32>
    %169 = arith.addf %167, %168 : vector<8x256xf32>
    %cst_60 = arith.constant 5.000000e-01 : f32
    %170 = vector.broadcast %cst_60 : f32 to vector<8x256xf32>
    %171 = arith.mulf %170, %169 : vector<8x256xf32>
    %172 = vector.extract_strided_slice %171 {offsets = [0, 0], sizes = [8, 128], strides = [1, 1]} : vector<8x256xf32> to vector<8x128xf32>
    %173 = vector.extract_strided_slice %171 {offsets = [0, 128], sizes = [8, 128], strides = [1, 1]} : vector<8x256xf32> to vector<8x128xf32>
    %174 = vector.extract_strided_slice %161 {offsets = [0, 256], sizes = [8, 128], strides = [1, 1]} : vector<8x384xf32> to vector<8x128xf32>
    %175 = arith.mulf %173, %159 : vector<8x128xf32>
    %cst_61 = arith.constant dense<0.000000e+00> : vector<8x128xf32>
    %176 = tpu.matmul %175, %4, %cst_61 {dimension_numbers = #tpu.dot_dimension_numbers<[1], [0], [0], [1], [0, 0, 1, 1], [], []>} : vector<8x128xf32>, vector<128x128xf32>, vector<8x128xf32> -> vector<8x128xf32>
    %177 = arith.addf %174, %176 : vector<8x128xf32>
    %178 = math.tanh %177 : vector<8x128xf32>
    %179 = arith.subf %178, %159 : vector<8x128xf32>
    %180 = arith.mulf %172, %179 : vector<8x128xf32>
    %181 = arith.addf %159, %180 : vector<8x128xf32>
    %c0_62 = arith.constant 0 : index
    %c0_63 = arith.constant 0 : index
    %182 = vector.load %arg4[%c0_62, %c0_63] : memref<8x128xf32, #tpu.memory_space<vmem>>, vector<8x128xf32>
    tpu.vector_store %arg4[%c0_62, %c0_63], %181 {strides = array<i32>} : memref<8x128xf32, #tpu.memory_space<vmem>>, vector<8x128xf32>,
    return
  }
  func.func @transform_0(%arg0: i32) -> (i32, i32, i32) {
    %c0_i32 = arith.constant 0 : i32
    %c0_i32_0 = arith.constant 0 : i32
    %c0_i32_1 = arith.constant 0 : i32
    return %c0_i32, %arg0, %c0_i32_0 : i32, i32, i32
  }
  func.func @transform_1(%arg0: i32) -> (i32, i32) {
    %c0_i32 = arith.constant 0 : i32
    %c0_i32_0 = arith.constant 0 : i32
    %c0_i32_1 = arith.constant 0 : i32
    return %c0_i32, %c0_i32_0 : i32, i32
  }
  func.func @transform_2(%arg0: i32) -> (i32, i32) {
    %c0_i32 = arith.constant 0 : i32
    %c0_i32_0 = arith.constant 0 : i32
    %c0_i32_1 = arith.constant 0 : i32
    return %c0_i32, %c0_i32_0 : i32, i32
  }
  func.func @transform_3(%arg0: i32) -> (i32, i32) {
    %c0_i32 = arith.constant 0 : i32
    %c0_i32_0 = arith.constant 0 : i32
    %c0_i32_1 = arith.constant 0 : i32
    return %c0_i32, %c0_i32_0 : i32, i32
  }
}

</mosaic_0001>

<llo_original>
// kernel: tpu_custom_call.1
$region0: #{tpu_custom_call.1}
  #allocation0 [shape = 'u32[]', space=smem, size = 0x4, offset = 0x4, fixed_abs, tag = 'smem constant byte address 0x4 - core index']
  #allocation1 [shape = 'u32[144,128]{1,0:T(1,128)}', space=vmem, size = 0x12000, scoped, tag = 'internal scratch']
  %s0 = inlined_call_operand.hbm [shape: f32[8,8,384], index: 0, kind: input, shape index: {}]
  %s1 = inlined_call_operand.hbm [shape: f32[128,256], index: 1, kind: input, shape index: {}]
  %s2 = inlined_call_operand.hbm [shape: f32[128,128], index: 2, kind: input, shape index: {}]
  %s3 = inlined_call_operand.hbm [shape: f32[8,128], index: 3, kind: output, shape index: {}]
  %s4 = sld [smem:[#allocation0]]
  $region38: #{tpu_custom_call.1} parent=0
    _
  %s6 = ssub.s32 1, %s4
  %s7 = scalar_select 0, %s6, %s4
  $region1: #{tpu_custom_call.1} parent=0
    #allocation2 [shape = 'u8[98304]{0}', space=vmem, size = 0x18000, scoped, tag = 'input window, operand 0, single buffered']
    #allocation3 [shape = 's32[1]{0}', space=sflag, size = 0x4, scoped, tag = 'scoped memory for tpu_custom_call.1']
    #allocation4 [shape = 's32[1]{0}', space=sflag, size = 0x4, scoped, tag = 'scoped memory for tpu_custom_call.1']
    #allocation5 [shape = 'u8[131072]{0}', space=vmem, size = 0x20000, scoped, tag = 'input window, operand 1, single buffered']
    #allocation6 [shape = 's32[1]{0}', space=sflag, size = 0x4, scoped, tag = 'scoped memory for tpu_custom_call.1']
    #allocation7 [shape = 'u8[65536]{0}', space=vmem, size = 0x10000, scoped, tag = 'input window, operand 2, single buffered']
    #allocation8 [shape = 'u8[4096]{0}', space=vmem, size = 0x1000, scoped, tag = 'output window, operand 0, single buffered']
    %8 = vsyncpa [#allocation3], 0
    %9 = vsyncpa [#allocation6], 0
    %10 = vsyncpa [#allocation4], 0
    // Predicated region
    $region2: #{tpu_custom_call.1} parent=1 // pred_check
      _
    $region3: #{tpu_custom_call.1} parent=1 // pred_check_branch
      %12 = sbr.rel (0) target = $region5
    $region4: #{tpu_custom_call.1} parent=1 // pred_region
      %s14 = ssub.s32 3072, 3072
      %15 = vsyncadd [#allocation3], %s14
      %s16 = sshll.u32 [#allocation2], 4
      %s17 = int_to_ptr.vmem [resolvable:$true] %s16
      %22 = dma.hbm_to_vmem [thread:$0]  %s0, 3072, %s17, [#allocation3], 384, 384, 24
    $region5: #{tpu_custom_call.1} parent=1 // pred_fallthru
      _
    // Predicated region
    $region6: #{tpu_custom_call.1} parent=1 // pred_check
      _
    $region7: #{tpu_custom_call.1} parent=1 // pred_check_branch
      %24 = sbr.rel (0) target = $region9
    $region8: #{tpu_custom_call.1} parent=1 // pred_region
      %s26 = ssub.s32 4096, 4096
      %27 = vsyncadd [#allocation6], %s26
      %s28 = sshll.u32 [#allocation5], 4
      %s29 = int_to_ptr.vmem [resolvable:$true] %s28
      %34 = dma.hbm_to_vmem [thread:$0]  %s1, 4096, %s29, [#allocation6], 256, 256, 16
    $region9: #{tpu_custom_call.1} parent=1 // pred_fallthru
      _
    // Predicated region
    $region10: #{tpu_custom_call.1} parent=1 // pred_check
      _
    $region11: #{tpu_custom_call.1} parent=1 // pred_check_branch
      %36 = sbr.rel (0) target = $region13
    $region12: #{tpu_custom_call.1} parent=1 // pred_region
      %s38 = ssub.s32 2048, 2048
      %39 = vsyncadd [#allocation6], %s38
      %s40 = sshll.u32 [#allocation7], 4
      %s41 = int_to_ptr.vmem [resolvable:$true] %s40
      %46 = dma.hbm_to_vmem [thread:$0]  %s2, 2048, %s41, [#allocation6], 128, 128, 8
    $region13: #{tpu_custom_call.1} parent=1 // pred_fallthru
      _
    // Predicated region
    $region14: #{tpu_custom_call.1} parent=1 // pred_check
      _
    $region15: #{tpu_custom_call.1} parent=1 // pred_check_branch
      %48 = sbr.rel (0) target = $region17
    $region16: #{tpu_custom_call.1} parent=1 // pred_region
      %49 = dma.done [#allocation3], 3072
    $region17: #{tpu_custom_call.1} parent=1 // pred_fallthru
      _
    // Predicated region
    $region18: #{tpu_custom_call.1} parent=1 // pred_check
      _
    $region19: #{tpu_custom_call.1} parent=1 // pred_check_branch
      %51 = sbr.rel (0) target = $region21
    $region20: #{tpu_custom_call.1} parent=1 // pred_region
      %52 = dma.done [#allocation6], 4096
    $region21: #{tpu_custom_call.1} parent=1 // pred_fallthru
      _
    // Predicated region
    $region22: #{tpu_custom_call.1} parent=1 // pred_check
      _
    $region23: #{tpu_custom_call.1} parent=1 // pred_check_branch
      %54 = sbr.rel (0) target = $region25
    $region24: #{tpu_custom_call.1} parent=1 // pred_region
      %55 = dma.done [#allocation6], 2048
    $region25: #{tpu_custom_call.1} parent=1 // pred_fallthru
      _
    %p56 = scmp.eq.s32.totalorder 0, 0
    // Predicated region
    $region26: #{tpu_custom_call.1} parent=1 // pred_check
      %p57 = pneg %p56
    $region27: #{tpu_custom_call.1} parent=1 // pred_check_branch
      %59 = sbr.rel (%p57) target = $region29
    $region28: #{tpu_custom_call.1} parent=1 // pred_region
      %60 = vst [vmem:[#allocation8] sm:$0xff] 0.0
    $region29: #{tpu_custom_call.1} parent=1 // pred_fallthru
      _
    %v61 = vld [vmem:[#allocation5] sm:$0xff]
    %v62 = vld [vmem:[#allocation5 + $0x8] sm:$0xff]
    %v63 = vld [vmem:[#allocation5 + $0x10] sm:$0xff]
    %v64 = vld [vmem:[#allocation5 + $0x18] sm:$0xff]
    %v65 = vld [vmem:[#allocation5 + $0x20] sm:$0xff]
    %v66 = vld [vmem:[#allocation5 + $0x28] sm:$0xff]
    %v67 = vld [vmem:[#allocation5 + $0x30] sm:$0xff]
    %v68 = vld [vmem:[#allocation5 + $0x38] sm:$0xff]
    %v69 = vld [vmem:[#allocation5 + $0x40] sm:$0xff]
    %v70 = vld [vmem:[#allocation5 + $0x48] sm:$0xff]
    %v71 = vld [vmem:[#allocation5 + $0x50] sm:$0xff]
    %v72 = vld [vmem:[#allocation5 + $0x58] sm:$0xff]
    %v73 = vld [vmem:[#allocation5 + $0x60] sm:$0xff]
    %v74 = vld [vmem:[#allocation5 + $0x68] sm:$0xff]
    %v75 = vld [vmem:[#allocation5 + $0x70] sm:$0xff]
    %v76 = vld [vmem:[#allocation5 + $0x78] sm:$0xff]
    %v77 = vld [vmem:[#allocation5 + $0x80] sm:$0xff]
    %v78 = vld [vmem:[#allocation5 + $0x88] sm:$0xff]
    %v79 = vld [vmem:[#allocation5 + $0x90] sm:$0xff]
    %v80 = vld [vmem:[#allocation5 + $0x98] sm:$0xff]
    %v81 = vld [vmem:[#allocation5 + $0xa0] sm:$0xff]
    %v82 = vld [vmem:[#allocation5 + $0xa8] sm:$0xff]
    %v83 = vld [vmem:[#allocation5 + $0xb0] sm:$0xff]
    %v84 = vld [vmem:[#allocation5 + $0xb8] sm:$0xff]
    %v85 = vld [vmem:[#allocation5 + $0xc0] sm:$0xff]
    %v86 = vld [vmem:[#allocation5 + $0xc8] sm:$0xff]
    %v87 = vld [vmem:[#allocation5 + $0xd0] sm:$0xff]
    %v88 = vld [vmem:[#allocation5 + $0xd8] sm:$0xff]
    %v89 = vld [vmem:[#allocation5 + $0xe0] sm:$0xff]
    %v90 = vld [vmem:[#allocation5 + $0xe8] sm:$0xff]
    %v91 = vld [vmem:[#allocation5 + $0xf0] sm:$0xff]
    %v92 = vld [vmem:[#allocation5 + $0xf8] sm:$0xff]
    %v93 = vld [vmem:[#allocation7] sm:$0xff]
    %v94 = vld [vmem:[#allocation7 + $0x8] sm:$0xff]
    %v95 = vld [vmem:[#allocation7 + $0x10] sm:$0xff]
    %v96 = vld [vmem:[#allocation7 + $0x18] sm:$0xff]
    %v97 = vld [vmem:[#allocation7 + $0x20] sm:$0xff]
    %v98 = vld [vmem:[#allocation7 + $0x28] sm:$0xff]
    %v99 = vld [vmem:[#allocation7 + $0x30] sm:$0xff]
    %v100 = vld [vmem:[#allocation7 + $0x38] sm:$0xff]
    %v101 = vld [vmem:[#allocation7 + $0x40] sm:$0xff]
    %v102 = vld [vmem:[#allocation7 + $0x48] sm:$0xff]
    %v103 = vld [vmem:[#allocation7 + $0x50] sm:$0xff]
    %v104 = vld [vmem:[#allocation7 + $0x58] sm:$0xff]
    %v105 = vld [vmem:[#allocation7 + $0x60] sm:$0xff]
    %v106 = vld [vmem:[#allocation7 + $0x68] sm:$0xff]
    %v107 = vld [vmem:[#allocation7 + $0x70] sm:$0xff]
    %v108 = vld [vmem:[#allocation7 + $0x78] sm:$0xff]
    %v109 = vld [vmem:[#allocation8] sm:$0xff]
    %v110 = vld [vmem:[#allocation2] ss:$8 sm:$0x7]
    %s111 = scalar_lea.vmem [#allocation2], 24
    %v112 = vld [vmem:[%s111] ss:$8 sm:$0x7]
    %s113 = scalar_lea.vmem [#allocation2], 48
    %v114 = vld [vmem:[%s113] ss:$8 sm:$0x7]
    %s115 = scalar_lea.vmem [#allocation2], 72
    %v116 = vld [vmem:[%s115] ss:$8 sm:$0x7]
    %s117 = scalar_lea.vmem [#allocation2], 96
    %v118 = vld [vmem:[%s117] ss:$8 sm:$0x7]
    %s119 = scalar_lea.vmem [#allocation2], 120
    %v120 = vld [vmem:[%s119] ss:$8 sm:$0x7]
    %s121 = scalar_lea.vmem [#allocation2], 144
    %v122 = vld [vmem:[%s121] ss:$8 sm:$0x7]
    %s123 = scalar_lea.vmem [#allocation2], 168
    %v124 = vld [vmem:[%s123] ss:$8 sm:$0x7]
    %125 = vmatprep.subr.mxu0 %v62
    %126 = vmatpush1.msra.mxu0 %v61
    %127 = vmatprep.subr.mxu0 %v64
    %128 = vmatpush1.msra.mxu0 %v63
    %129 = vmatprep.subr.mxu0 %v66
    %130 = vmatpush1.msra.mxu0 %v65
    %131 = vmatprep.subr.mxu0 %v68
    %132 = vmatpush1.msra.mxu0 %v67
    %133 = vmatprep.subr.mxu0 %v70
    %134 = vmatpush1.msra.mxu0 %v69
    %135 = vmatprep.subr.mxu0 %v72
    %136 = vmatpush1.msra.mxu0 %v71
    %137 = vmatprep.subr.mxu0 %v74
    %138 = vmatpush1.msra.mxu0 %v73
    %139 = vmatprep.subr.mxu0 %v76
    %140 = vmatpush1.msra.mxu0 %v75
    %141 = vmatprep.subr.mxu0 %v78
    %142 = vmatpush1.msra.mxu0 %v77
    %143 = vmatprep.subr.mxu0 %v80
    %144 = vmatpush1.msra.mxu0 %v79
    %145 = vmatprep.subr.mxu0 %v82
    %146 = vmatpush1.msra.mxu0 %v81
    %147 = vmatprep.subr.mxu0 %v84
    %148 = vmatpush1.msra.mxu0 %v83
    %149 = vmatprep.subr.mxu0 %v86
    %150 = vmatpush1.msra.mxu0 %v85
    %151 = vmatprep.subr.mxu0 %v88
    %152 = vmatpush1.msra.mxu0 %v87
    %153 = vmatprep.subr.mxu0 %v90
    %154 = vmatpush1.msra.mxu0 %v89
    %155 = vmatprep.subr.mxu0 %v92
    %156 = vmatpush1.msra.mxu0 %v91
    %157 = vmatprep.subr.mxu0 0.0
    %158 = vmatpush1.msra.mxu0 0.0
    %159 = vmatprep.subr.mxu0 0.0
    %160 = vmatpush1.msra.mxu0 0.0
    %161 = vmatprep.subr.mxu0 0.0
    %162 = vmatpush1.msra.mxu0 0.0
    %163 = vmatprep.subr.mxu0 0.0
    %164 = vmatpush1.msra.mxu0 0.0
    %165 = vmatprep.subr.mxu0 0.0
    %166 = vmatpush1.msra.mxu0 0.0
    %167 = vmatprep.subr.mxu0 0.0
    %168 = vmatpush1.msra.mxu0 0.0
    %169 = vmatprep.subr.mxu0 0.0
    %170 = vmatpush1.msra.mxu0 0.0
    %171 = vmatprep.subr.mxu0 0.0
    %172 = vmatpush1.msra.mxu0 0.0
    %173 = vmatprep.subr.mxu0 0.0
    %174 = vmatpush1.msra.mxu0 0.0
    %175 = vmatprep.subr.mxu0 0.0
    %176 = vmatpush1.msra.mxu0 0.0
    %177 = vmatprep.subr.mxu0 0.0
    %178 = vmatpush1.msra.mxu0 0.0
    %179 = vmatprep.subr.mxu0 0.0
    %180 = vmatpush1.msra.mxu0 0.0
    %181 = vmatprep.subr.mxu0 0.0
    %182 = vmatpush1.msra.mxu0 0.0
    %183 = vmatprep.subr.mxu0 0.0
    %184 = vmatpush1.msra.mxu0 0.0
    %185 = vmatprep.subr.mxu0 0.0
    %186 = vmatpush1.msra.mxu0 0.0
    %187 = vmatprep.subr.mxu0 0.0
    %188 = vmatpush1.msra.mxu0 0.0
    %189 = vmatprep.mubr.f32.mxu0 0.0
    %190 = vmatmul.mubr.f32.gmra.mrb[0].mxu0 %v109
    %v191 = vpop.f32.mrb[0].mxu0
    %v192 = vadd.f32 0.0, %v191
    %v193 = vpop.f32.mrb[0].mxu0
    %v194 = vadd.f32 0.0, %v193
    %195 = vdwg.mxu0
    %v198 = vcombine.low %v192, %v194
    %v199 = vcombine.high %v192, %v194
    %v201 = vunpack.c.l.s4 1966171168
    %v202 = vunpack.c.0.s8 %v201
    %v203 = vlaneseq
    %v204 = vshrl.u32 %v203, 7
    %v205 = vsub.s32 %v202, %v204
    %v206 = vrot.slane %v198, %v205
    %v208 = vunpack.c.l.s4 1966171168
    %v209 = vunpack.c.0.s8 %v208
    %v210 = vlaneseq
    %v211 = vshrl.u32 %v210, 7
    %v212 = vsub.s32 %v209, %v211
    %v213 = vrot.slane %v199, %v212
    %v214 = vcombine.high %v206, %v206
    %v215 = vcombine.high %v213, %v213
    %v217 = vunpack.c.l.s4 1966171168
    %v218 = vunpack.c.0.s8 %v217
    %v219 = vlaneseq
    %v220 = vshrl.u32 %v219, 7
    %v221 = vsub.s32 %v218, %v220
    %v222 = vrot.slane %v206, %v221
    %v224 = vunpack.c.l.s4 1966171168
    %v225 = vunpack.c.0.s8 %v224
    %v226 = vlaneseq
    %v227 = vshrl.u32 %v226, 7
    %v228 = vsub.s32 %v225, %v227
    %v229 = vrot.slane %v213, %v228
    %v231 = vunpack.c.l.s4 1966171168
    %v232 = vunpack.c.0.s8 %v231
    %v233 = vlaneseq
    %v234 = vshrl.u32 %v233, 7
    %v235 = vsub.s32 %v232, %v234
    %v236 = vrot.slane %v214, %v235
    %v238 = vunpack.c.l.s4 1966171168
    %v239 = vunpack.c.0.s8 %v238
    %v240 = vlaneseq
    %v241 = vshrl.u32 %v240, 7
    %v242 = vsub.s32 %v239, %v241
    %v243 = vrot.slane %v215, %v242
    %v244 = vcombine.high %v222, %v222
    %v245 = vcombine.high %v229, %v229
    %v246 = vcombine.high %v236, %v236
    %v247 = vcombine.high %v243, %v243
    %v256 = vadd.f32 %v110, %v222
    %v257 = vadd.f32 %v112, %v236
    %v258 = vadd.f32 %v114, %v244
    %v259 = vadd.f32 %v116, %v246
    %v260 = vadd.f32 %v118, %v229
    %v261 = vadd.f32 %v120, %v243
    %v262 = vadd.f32 %v122, %v245
    %v263 = vadd.f32 %v124, %v247
    %v264 = vmul.f32 %v256, 0.5
    %v265 = vmul.f32 %v257, 0.5
    %v266 = vmul.f32 %v258, 0.5
    %v267 = vmul.f32 %v259, 0.5
    %v268 = vmul.f32 %v260, 0.5
    %v269 = vmul.f32 %v261, 0.5
    %v270 = vmul.f32 %v262, 0.5
    %v271 = vmul.f32 %v263, 0.5
    %v272 = vtanh.pop %v264
    %v273 = vtanh.pop %v265
    %v274 = vtanh.pop %v266
    %v275 = vtanh.pop %v267
    %v276 = vtanh.pop %v268
    %v277 = vtanh.pop %v269
    %v278 = vtanh.pop %v270
    %v279 = vtanh.pop %v271
    %v280 = vadd.f32 %v272, 1.0
    %v281 = vadd.f32 %v273, 1.0
    %v282 = vadd.f32 %v274, 1.0
    %v283 = vadd.f32 %v275, 1.0
    %v284 = vadd.f32 %v276, 1.0
    %v285 = vadd.f32 %v277, 1.0
    %v286 = vadd.f32 %v278, 1.0
    %v287 = vadd.f32 %v279, 1.0
    %v288 = vmul.f32 %v280, 0.5
    %v289 = vmul.f32 %v281, 0.5
    %v290 = vmul.f32 %v282, 0.5
    %v291 = vmul.f32 %v283, 0.5
    %v292 = vmul.f32 %v284, 0.5
    %v293 = vmul.f32 %v285, 0.5
    %v294 = vmul.f32 %v286, 0.5
    %v295 = vmul.f32 %v287, 0.5
    %v304 = vrot.slane %v288, 1
    %v305 = vrot.slane %v289, 1
    %v306 = vrot.slane %v290, 1
    %v307 = vrot.slane %v291, 1
    %v308 = vrot.slane %v292, 1
    %v309 = vrot.slane %v293, 1
    %v310 = vrot.slane %v294, 1
    %v311 = vrot.slane %v295, 1
    %v321 = vcombine.high %v109, %v109
    %v323 = vunpack.c.l.s4 1966171168
    %v324 = vunpack.c.0.s8 %v323
    %v325 = vlaneseq
    %v326 = vshrl.u32 %v325, 7
    %v327 = vsub.s32 %v324, %v326
    %v328 = vrot.slane %v109, %v327
    %v330 = vunpack.c.l.s4 1966171168
    %v331 = vunpack.c.0.s8 %v330
    %v332 = vlaneseq
    %v333 = vshrl.u32 %v332, 7
    %v334 = vsub.s32 %v331, %v333
    %v335 = vrot.slane %v321, %v334
    %v336 = vcombine.high %v328, %v328
    %v337 = vcombine.high %v335, %v335
    %v339 = vunpack.c.l.s4 1966171168
    %v340 = vunpack.c.0.s8 %v339
    %v341 = vlaneseq
    %v342 = vshrl.u32 %v341, 7
    %v343 = vsub.s32 %v340, %v342
    %v344 = vrot.slane %v328, %v343
    %v346 = vunpack.c.l.s4 1966171168
    %v347 = vunpack.c.0.s8 %v346
    %v348 = vlaneseq
    %v349 = vshrl.u32 %v348, 7
    %v350 = vsub.s32 %v347, %v349
    %v351 = vrot.slane %v335, %v350
    %v353 = vunpack.c.l.s4 1966171168
    %v354 = vunpack.c.0.s8 %v353
    %v355 = vlaneseq
    %v356 = vshrl.u32 %v355, 7
    %v357 = vsub.s32 %v354, %v356
    %v358 = vrot.slane %v336, %v357
    %v360 = vunpack.c.l.s4 1966171168
    %v361 = vunpack.c.0.s8 %v360
    %v362 = vlaneseq
    %v363 = vshrl.u32 %v362, 7
    %v364 = vsub.s32 %v361, %v363
    %v365 = vrot.slane %v337, %v364
    %v366 = vcombine.high %v344, %v344
    %v367 = vcombine.high %v351, %v351
    %v368 = vcombine.high %v358, %v358
    %v369 = vcombine.high %v365, %v365
    %v378 = vmul.f32 %v304, %v344
    %v379 = vmul.f32 %v305, %v358
    %v380 = vmul.f32 %v306, %v366
    %v381 = vmul.f32 %v307, %v368
    %v382 = vmul.f32 %v308, %v351
    %v383 = vmul.f32 %v309, %v365
    %v384 = vmul.f32 %v310, %v367
    %v385 = vmul.f32 %v311, %v369
    %v394 = vcombine.low %v378, %v379
    %v395 = vcombine.low %v380, %v381
    %v396 = vcombine.low %v382, %v383
    %v397 = vcombine.low %v384, %v385
    %v399 = vunpack.c.l.s4 1966171168
    %v400 = vunpack.c.0.s8 %v399
    %v401 = vlaneseq
    %v402 = vshrl.u32 %v401, 7
    %v403 = vsub.s32 %v400, %v402
    %v404 = vrot.slane %v394, %v403
    %v406 = vunpack.c.l.s4 1966171168
    %v407 = vunpack.c.0.s8 %v406
    %v408 = vlaneseq
    %v409 = vshrl.u32 %v408, 7
    %v410 = vsub.s32 %v407, %v409
    %v411 = vrot.slane %v395, %v410
    %v413 = vunpack.c.l.s4 1966171168
    %v414 = vunpack.c.0.s8 %v413
    %v415 = vlaneseq
    %v416 = vshrl.u32 %v415, 7
    %v417 = vsub.s32 %v414, %v416
    %v418 = vrot.slane %v396, %v417
    %v420 = vunpack.c.l.s4 1966171168
    %v421 = vunpack.c.0.s8 %v420
    %v422 = vlaneseq
    %v423 = vshrl.u32 %v422, 7
    %v424 = vsub.s32 %v421, %v423
    %v425 = vrot.slane %v397, %v424
    %v426 = vcombine.low %v404, %v411
    %v427 = vcombine.low %v418, %v425
    %v429 = vunpack.c.l.s4 1966171168
    %v430 = vunpack.c.0.s8 %v429
    %v431 = vlaneseq
    %v432 = vshrl.u32 %v431, 7
    %v433 = vsub.s32 %v430, %v432
    %v434 = vrot.slane %v426, %v433
    %v436 = vunpack.c.l.s4 1966171168
    %v437 = vunpack.c.0.s8 %v436
    %v438 = vlaneseq
    %v439 = vshrl.u32 %v438, 7
    %v440 = vsub.s32 %v437, %v439
    %v441 = vrot.slane %v427, %v440
    %v442 = vcombine.low %v434, %v441
    %444 = vmatprep.subr.mxu0 0.0
    %445 = vmatpush1.msra.mxu0 %v93
    %446 = vmatprep.subr.mxu0 0.0
    %447 = vmatpush1.msra.mxu0 %v94
    %448 = vmatprep.subr.mxu0 0.0
    %449 = vmatpush1.msra.mxu0 %v95
    %450 = vmatprep.subr.mxu0 0.0
    %451 = vmatpush1.msra.mxu0 %v96
    %452 = vmatprep.subr.mxu0 0.0
    %453 = vmatpush1.msra.mxu0 %v97
    %454 = vmatprep.subr.mxu0 0.0
    %455 = vmatpush1.msra.mxu0 %v98
    %456 = vmatprep.subr.mxu0 0.0
    %457 = vmatpush1.msra.mxu0 %v99
    %458 = vmatprep.subr.mxu0 0.0
    %459 = vmatpush1.msra.mxu0 %v100
    %460 = vmatprep.subr.mxu0 0.0
    %461 = vmatpush1.msra.mxu0 %v101
    %462 = vmatprep.subr.mxu0 0.0
    %463 = vmatpush1.msra.mxu0 %v102
    %464 = vmatprep.subr.mxu0 0.0
    %465 = vmatpush1.msra.mxu0 %v103
    %466 = vmatprep.subr.mxu0 0.0
    %467 = vmatpush1.msra.mxu0 %v104
    %468 = vmatprep.subr.mxu0 0.0
    %469 = vmatpush1.msra.mxu0 %v105
    %470 = vmatprep.subr.mxu0 0.0
    %471 = vmatpush1.msra.mxu0 %v106
    %472 = vmatprep.subr.mxu0 0.0
    %473 = vmatpush1.msra.mxu0 %v107
    %474 = vmatprep.subr.mxu0 0.0
    %475 = vmatpush1.msra.mxu0 %v108
    %476 = vmatprep.subr.mxu0 0.0
    %477 = vmatpush1.msra.mxu0 0.0
    %478 = vmatprep.subr.mxu0 0.0
    %479 = vmatpush1.msra.mxu0 0.0
    %480 = vmatprep.subr.mxu0 0.0
    %481 = vmatpush1.msra.mxu0 0.0
    %482 = vmatprep.subr.mxu0 0.0
    %483 = vmatpush1.msra.mxu0 0.0
    %484 = vmatprep.subr.mxu0 0.0
    %485 = vmatpush1.msra.mxu0 0.0
    %486 = vmatprep.subr.mxu0 0.0
    %487 = vmatpush1.msra.mxu0 0.0
    %488 = vmatprep.subr.mxu0 0.0
    %489 = vmatpush1.msra.mxu0 0.0
    %490 = vmatprep.subr.mxu0 0.0
    %491 = vmatpush1.msra.mxu0 0.0
    %492 = vmatprep.subr.mxu0 0.0
    %493 = vmatpush1.msra.mxu0 0.0
    %494 = vmatprep.subr.mxu0 0.0
    %495 = vmatpush1.msra.mxu0 0.0
    %496 = vmatprep.subr.mxu0 0.0
    %497 = vmatpush1.msra.mxu0 0.0
    %498 = vmatprep.subr.mxu0 0.0
    %499 = vmatpush1.msra.mxu0 0.0
    %500 = vmatprep.subr.mxu0 0.0
    %501 = vmatpush1.msra.mxu0 0.0
    %502 = vmatprep.subr.mxu0 0.0
    %503 = vmatpush1.msra.mxu0 0.0
    %504 = vmatprep.subr.mxu0 0.0
    %505 = vmatpush1.msra.mxu0 0.0
    %506 = vmatprep.subr.mxu0 0.0
    %507 = vmatpush1.msra.mxu0 0.0
    %508 = vmatprep.mubr.f32.mxu0 0.0
    %509 = vmatmul.mubr.f32.gmra.mrb[0].mxu0 %v442
    %v510 = vpop.f32.mrb[0].mxu0
    %v511 = vadd.f32 0.0, %v510
    %v512 = vpop.f32.mrb[0].mxu0
    %513 = vdwg.mxu0
    %v522 = vrot.slane %v110, 2
    %v523 = vrot.slane %v112, 2
    %v524 = vrot.slane %v114, 2
    %v525 = vrot.slane %v116, 2
    %v526 = vrot.slane %v118, 2
    %v527 = vrot.slane %v120, 2
    %v528 = vrot.slane %v122, 2
    %v529 = vrot.slane %v124, 2
    %v539 = vcombine.high %v511, %v511
    %v541 = vunpack.c.l.s4 1966171168
    %v542 = vunpack.c.0.s8 %v541
    %v543 = vlaneseq
    %v544 = vshrl.u32 %v543, 7
    %v545 = vsub.s32 %v542, %v544
    %v546 = vrot.slane %v511, %v545
    %v548 = vunpack.c.l.s4 1966171168
    %v549 = vunpack.c.0.s8 %v548
    %v550 = vlaneseq
    %v551 = vshrl.u32 %v550, 7
    %v552 = vsub.s32 %v549, %v551
    %v553 = vrot.slane %v539, %v552
    %v554 = vcombine.high %v546, %v546
    %v555 = vcombine.high %v553, %v553
    %v557 = vunpack.c.l.s4 1966171168
    %v558 = vunpack.c.0.s8 %v557
    %v559 = vlaneseq
    %v560 = vshrl.u32 %v559, 7
    %v561 = vsub.s32 %v558, %v560
    %v562 = vrot.slane %v546, %v561
    %v564 = vunpack.c.l.s4 1966171168
    %v565 = vunpack.c.0.s8 %v564
    %v566 = vlaneseq
    %v567 = vshrl.u32 %v566, 7
    %v568 = vsub.s32 %v565, %v567
    %v569 = vrot.slane %v553, %v568
    %v571 = vunpack.c.l.s4 1966171168
    %v572 = vunpack.c.0.s8 %v571
    %v573 = vlaneseq
    %v574 = vshrl.u32 %v573, 7
    %v575 = vsub.s32 %v572, %v574
    %v576 = vrot.slane %v554, %v575
    %v578 = vunpack.c.l.s4 1966171168
    %v579 = vunpack.c.0.s8 %v578
    %v580 = vlaneseq
    %v581 = vshrl.u32 %v580, 7
    %v582 = vsub.s32 %v579, %v581
    %v583 = vrot.slane %v555, %v582
    %v584 = vcombine.high %v562, %v562
    %v585 = vcombine.high %v569, %v569
    %v586 = vcombine.high %v576, %v576
    %v587 = vcombine.high %v583, %v583
    %v596 = vadd.f32 %v522, %v562
    %v597 = vadd.f32 %v523, %v576
    %v598 = vadd.f32 %v524, %v584
    %v599 = vadd.f32 %v525, %v586
    %v600 = vadd.f32 %v526, %v569
    %v601 = vadd.f32 %v527, %v583
    %v602 = vadd.f32 %v528, %v585
    %v603 = vadd.f32 %v529, %v587
    %v604 = vtanh.pop %v596
    %v605 = vtanh.pop %v597
    %v606 = vtanh.pop %v598
    %v607 = vtanh.pop %v599
    %v608 = vtanh.pop %v600
    %v609 = vtanh.pop %v601
    %v610 = vtanh.pop %v602
    %v611 = vtanh.pop %v603
    %v612 = vsub.f32 %v604, %v344
    %v613 = vsub.f32 %v605, %v358
    %v614 = vsub.f32 %v606, %v366
    %v615 = vsub.f32 %v607, %v368
    %v616 = vsub.f32 %v608, %v351
    %v617 = vsub.f32 %v609, %v365
    %v618 = vsub.f32 %v610, %v367
    %v619 = vsub.f32 %v611, %v369
    %v620 = vmul.f32 %v288, %v612
    %v621 = vmul.f32 %v289, %v613
    %v622 = vmul.f32 %v290, %v614
    %v623 = vmul.f32 %v291, %v615
    %v624 = vmul.f32 %v292, %v616
    %v625 = vmul.f32 %v293, %v617
    %v626 = vmul.f32 %v294, %v618
    %v627 = vmul.f32 %v295, %v619
    %v636 = vcombine.low %v620, %v621
    %v637 = vcombine.low %v622, %v623
    %v638 = vcombine.low %v624, %v625
    %v639 = vcombine.low %v626, %v627
    %v641 = vunpack.c.l.s4 1966171168
    %v642 = vunpack.c.0.s8 %v641
    %v643 = vlaneseq
    %v644 = vshrl.u32 %v643, 7
    %v645 = vsub.s32 %v642, %v644
    %v646 = vrot.slane %v636, %v645
    %v648 = vunpack.c.l.s4 1966171168
    %v649 = vunpack.c.0.s8 %v648
    %v650 = vlaneseq
    %v651 = vshrl.u32 %v650, 7
    %v652 = vsub.s32 %v649, %v651
    %v653 = vrot.slane %v637, %v652
    %v655 = vunpack.c.l.s4 1966171168
    %v656 = vunpack.c.0.s8 %v655
    %v657 = vlaneseq
    %v658 = vshrl.u32 %v657, 7
    %v659 = vsub.s32 %v656, %v658
    %v660 = vrot.slane %v638, %v659
    %v662 = vunpack.c.l.s4 1966171168
    %v663 = vunpack.c.0.s8 %v662
    %v664 = vlaneseq
    %v665 = vshrl.u32 %v664, 7
    %v666 = vsub.s32 %v663, %v665
    %v667 = vrot.slane %v639, %v666
    %v668 = vcombine.low %v646, %v653
    %v669 = vcombine.low %v660, %v667
    %v671 = vunpack.c.l.s4 1966171168
    %v672 = vunpack.c.0.s8 %v671
    %v673 = vlaneseq
    %v674 = vshrl.u32 %v673, 7
    %v675 = vsub.s32 %v672, %v674
    %v676 = vrot.slane %v668, %v675
    %v678 = vunpack.c.l.s4 1966171168
    %v679 = vunpack.c.0.s8 %v678
    %v680 = vlaneseq
    %v681 = vshrl.u32 %v680, 7
    %v682 = vsub.s32 %v679, %v681
    %v683 = vrot.slane %v669, %v682
    %v684 = vcombine.low %v676, %v683
    %v686 = vadd.f32 %v109, %v684
    %s687 = scalar_lea.vmem [#allocation2], 1
    %v688 = vld [vmem:[%s687] ss:$8 sm:$0x7]
    %s689 = scalar_lea.vmem [#allocation2], 25
    %v690 = vld [vmem:[%s689] ss:$8 sm:$0x7]
    %s691 = scalar_lea.vmem [#allocation2], 49
    %v692 = vld [vmem:[%s691] ss:$8 sm:$0x7]
    %s693 = scalar_lea.vmem [#allocation2], 73
    %v694 = vld [vmem:[%s693] ss:$8 sm:$0x7]
    %s695 = scalar_lea.vmem [#allocation2], 97
    %v696 = vld [vmem:[%s695] ss:$8 sm:$0x7]
    %s697 = scalar_lea.vmem [#allocation2], 121
    %v698 = vld [vmem:[%s697] ss:$8 sm:$0x7]
    %s699 = scalar_lea.vmem [#allocation2], 145
    %v700 = vld [vmem:[%s699] ss:$8 sm:$0x7]
    %s701 = scalar_lea.vmem [#allocation2], 169
    %v702 = vld [vmem:[%s701] ss:$8 sm:$0x7]
    %703 = vmatprep.subr.mxu0 %v62
    %704 = vmatpush1.msra.mxu0 %v61
    %705 = vmatprep.subr.mxu0 %v64
    %706 = vmatpush1.msra.mxu0 %v63
    %707 = vmatprep.subr.mxu0 %v66
    %708 = vmatpush1.msra.mxu0 %v65
    %709 = vmatprep.subr.mxu0 %v68
    %710 = vmatpush1.msra.mxu0 %v67
    %711 = vmatprep.subr.mxu0 %v70
    %712 = vmatpush1.msra.mxu0 %v69
    %713 = vmatprep.subr.mxu0 %v72
    %714 = vmatpush1.msra.mxu0 %v71
    %715 = vmatprep.subr.mxu0 %v74
    %716 = vmatpush1.msra.mxu0 %v73
    %717 = vmatprep.subr.mxu0 %v76
    %718 = vmatpush1.msra.mxu0 %v75
    %719 = vmatprep.subr.mxu0 %v78
    %720 = vmatpush1.msra.mxu0 %v77
    %721 = vmatprep.subr.mxu0 %v80
    %722 = vmatpush1.msra.mxu0 %v79
    %723 = vmatprep.subr.mxu0 %v82
    %724 = vmatpush1.msra.mxu0 %v81
    %725 = vmatprep.subr.mxu0 %v84
    %726 = vmatpush1.msra.mxu0 %v83
    %727 = vmatprep.subr.mxu0 %v86
    %728 = vmatpush1.msra.mxu0 %v85
    %729 = vmatprep.subr.mxu0 %v88
    %730 = vmatpush1.msra.mxu0 %v87
    %731 = vmatprep.subr.mxu0 %v90
    %732 = vmatpush1.msra.mxu0 %v89
    %733 = vmatprep.subr.mxu0 %v92
    %734 = vmatpush1.msra.mxu0 %v91
    %735 = vmatprep.subr.mxu0 0.0
    %736 = vmatpush1.msra.mxu0 0.0
    %737 = vmatprep.subr.mxu0 0.0
    %738 = vmatpush1.msra.mxu0 0.0
    %739 = vmatprep.subr.mxu0 0.0
    %740 = vmatpush1.msra.mxu0 0.0
    %741 = vmatprep.subr.mxu0 0.0
    %742 = vmatpush1.msra.mxu0 0.0
    %743 = vmatprep.subr.mxu0 0.0
    %744 = vmatpush1.msra.mxu0 0.0
    %745 = vmatprep.subr.mxu0 0.0
    %746 = vmatpush1.msra.mxu0 0.0
    %747 = vmatprep.subr.mxu0 0.0
    %748 = vmatpush1.msra.mxu0 0.0
    %749 = vmatprep.subr.mxu0 0.0
    %750 = vmatpush1.msra.mxu0 0.0
    %751 = vmatprep.subr.mxu0 0.0
    %752 = vmatpush1.msra.mxu0 0.0
    %753 = vmatprep.subr.mxu0 0.0
    %754 = vmatpush1.msra.mxu0 0.0
    %755 = vmatprep.subr.mxu0 0.0
    %756 = vmatpush1.msra.mxu0 0.0
    %757 = vmatprep.subr.mxu0 0.0
    %758 = vmatpush1.msra.mxu0 0.0
    %759 = vmatprep.subr.mxu0 0.0
    %760 = vmatpush1.msra.mxu0 0.0
    %761 = vmatprep.subr.mxu0 0.0
    %762 = vmatpush1.msra.mxu0 0.0
    %763 = vmatprep.subr.mxu0 0.0
    %764 = vmatpush1.msra.mxu0 0.0
    %765 = vmatprep.subr.mxu0 0.0
    %766 = vmatpush1.msra.mxu0 0.0
    %767 = vmatprep.mubr.f32.mxu0 0.0
    %768 = vmatmul.mubr.f32.gmra.mrb[0].mxu0 %v686
    %v769 = vpop.f32.mrb[0].mxu0
    %v770 = vadd.f32 0.0, %v769
    %v771 = vpop.f32.mrb[0].mxu0
    %v772 = vadd.f32 0.0, %v771
    %773 = vdwg.mxu0
    %v776 = vcombine.low %v770, %v772
    %v777 = vcombine.high %v770, %v772
    %v779 = vunpack.c.l.s4 1966171168
    %v780 = vunpack.c.0.s8 %v779
    %v781 = vlaneseq
    %v782 = vshrl.u32 %v781, 7
    %v783 = vsub.s32 %v780, %v782
    %v784 = vrot.slane %v776, %v783
    %v786 = vunpack.c.l.s4 1966171168
    %v787 = vunpack.c.0.s8 %v786
    %v788 = vlaneseq
    %v789 = vshrl.u32 %v788, 7
    %v790 = vsub.s32 %v787, %v789
    %v791 = vrot.slane %v777, %v790
    %v792 = vcombine.high %v784, %v784
    %v793 = vcombine.high %v791, %v791
    %v795 = vunpack.c.l.s4 1966171168
    %v796 = vunpack.c.0.s8 %v795
    %v797 = vlaneseq
    %v798 = vshrl.u32 %v797, 7
    %v799 = vsub.s32 %v796, %v798
    %v800 = vrot.slane %v784, %v799
    %v802 = vunpack.c.l.s4 1966171168
    %v803 = vunpack.c.0.s8 %v802
    %v804 = vlaneseq
    %v805 = vshrl.u32 %v804, 7
    %v806 = vsub.s32 %v803, %v805
    %v807 = vrot.slane %v791, %v806
    %v809 = vunpack.c.l.s4 1966171168
    %v810 = vunpack.c.0.s8 %v809
    %v811 = vlaneseq
    %v812 = vshrl.u32 %v811, 7
    %v813 = vsub.s32 %v810, %v812
    %v814 = vrot.slane %v792, %v813
    %v816 = vunpack.c.l.s4 1966171168
    %v817 = vunpack.c.0.s8 %v816
    %v818 = vlaneseq
    %v819 = vshrl.u32 %v818, 7
    %v820 = vsub.s32 %v817, %v819
    %v821 = vrot.slane %v793, %v820
    %v822 = vcombine.high %v800, %v800
    %v823 = vcombine.high %v807, %v807
    %v824 = vcombine.high %v814, %v814
    %v825 = vcombine.high %v821, %v821
    %v834 = vadd.f32 %v688, %v800
    %v835 = vadd.f32 %v690, %v814
    %v836 = vadd.f32 %v692, %v822
    %v837 = vadd.f32 %v694, %v824
    %v838 = vadd.f32 %v696, %v807
    %v839 = vadd.f32 %v698, %v821
    %v840 = vadd.f32 %v700, %v823
    %v841 = vadd.f32 %v702, %v825
    %v842 = vmul.f32 %v834, 0.5
    %v843 = vmul.f32 %v835, 0.5
    %v844 = vmul.f32 %v836, 0.5
    %v845 = vmul.f32 %v837, 0.5
    %v846 = vmul.f32 %v838, 0.5
    %v847 = vmul.f32 %v839, 0.5
    %v848 = vmul.f32 %v840, 0.5
    %v849 = vmul.f32 %v841, 0.5
    %v850 = vtanh.pop %v842
    %v851 = vtanh.pop %v843
    %v852 = vtanh.pop %v844
    %v853 = vtanh.pop %v845
    %v854 = vtanh.pop %v846
    %v855 = vtanh.pop %v847
    %v856 = vtanh.pop %v848
    %v857 = vtanh.pop %v849
    %v858 = vadd.f32 %v850, 1.0
    %v859 = vadd.f32 %v851, 1.0
    %v860 = vadd.f32 %v852, 1.0
    %v861 = vadd.f32 %v853, 1.0
    %v862 = vadd.f32 %v854, 1.0
    %v863 = vadd.f32 %v855, 1.0
    %v864 = vadd.f32 %v856, 1.0
    %v865 = vadd.f32 %v857, 1.0
    %v866 = vmul.f32 %v858, 0.5
    %v867 = vmul.f32 %v859, 0.5
    %v868 = vmul.f32 %v860, 0.5
    %v869 = vmul.f32 %v861, 0.5
    %v870 = vmul.f32 %v862, 0.5
    %v871 = vmul.f32 %v863, 0.5
    %v872 = vmul.f32 %v864, 0.5
    %v873 = vmul.f32 %v865, 0.5
    %v882 = vrot.slane %v866, 1
    %v883 = vrot.slane %v867, 1
    %v884 = vrot.slane %v868, 1
    %v885 = vrot.slane %v869, 1
    %v886 = vrot.slane %v870, 1
    %v887 = vrot.slane %v871, 1
    %v888 = vrot.slane %v872, 1
    %v889 = vrot.slane %v873, 1
    %v899 = vcombine.high %v686, %v686
    %v901 = vunpack.c.l.s4 1966171168
    %v902 = vunpack.c.0.s8 %v901
    %v903 = vlaneseq
    %v904 = vshrl.u32 %v903, 7
    %v905 = vsub.s32 %v902, %v904
    %v906 = vrot.slane %v686, %v905
    %v908 = vunpack.c.l.s4 1966171168
    %v909 = vunpack.c.0.s8 %v908
    %v910 = vlaneseq
    %v911 = vshrl.u32 %v910, 7
    %v912 = vsub.s32 %v909, %v911
    %v913 = vrot.slane %v899, %v912
    %v914 = vcombine.high %v906, %v906
    %v915 = vcombine.high %v913, %v913
    %v917 = vunpack.c.l.s4 1966171168
    %v918 = vunpack.c.0.s8 %v917
    %v919 = vlaneseq
    %v920 = vshrl.u32 %v919, 7
    %v921 = vsub.s32 %v918, %v920
    %v922 = vrot.slane %v906, %v921
    %v924 = vunpack.c.l.s4 1966171168
    %v925 = vunpack.c.0.s8 %v924
    %v926 = vlaneseq
    %v927 = vshrl.u32 %v926, 7
    %v928 = vsub.s32 %v925, %v927
    %v929 = vrot.slane %v913, %v928
    %v931 = vunpack.c.l.s4 1966171168
    %v932 = vunpack.c.0.s8 %v931
    %v933 = vlaneseq
    %v934 = vshrl.u32 %v933, 7
    %v935 = vsub.s32 %v932, %v934
    %v936 = vrot.slane %v914, %v935
    %v938 = vunpack.c.l.s4 1966171168
    %v939 = vunpack.c.0.s8 %v938
    %v940 = vlaneseq
    %v941 = vshrl.u32 %v940, 7
    %v942 = vsub.s32 %v939, %v941
    %v943 = vrot.slane %v915, %v942
    %v944 = vcombine.high %v922, %v922
    %v945 = vcombine.high %v929, %v929
    %v946 = vcombine.high %v936, %v936
    %v947 = vcombine.high %v943, %v943
    %v956 = vmul.f32 %v882, %v922
    %v957 = vmul.f32 %v883, %v936
    %v958 = vmul.f32 %v884, %v944
    %v959 = vmul.f32 %v885, %v946
    %v960 = vmul.f32 %v886, %v929
    %v961 = vmul.f32 %v887, %v943
    %v962 = vmul.f32 %v888, %v945
    %v963 = vmul.f32 %v889, %v947
    %v972 = vcombine.low %v956, %v957
    %v973 = vcombine.low %v958, %v959
    %v974 = vcombine.low %v960, %v961
    %v975 = vcombine.low %v962, %v963
    %v977 = vunpack.c.l.s4 1966171168
    %v978 = vunpack.c.0.s8 %v977
    %v979 = vlaneseq
    %v980 = vshrl.u32 %v979, 7
    %v981 = vsub.s32 %v978, %v980
    %v982 = vrot.slane %v972, %v981
    %v984 = vunpack.c.l.s4 1966171168
    %v985 = vunpack.c.0.s8 %v984
    %v986 = vlaneseq
    %v987 = vshrl.u32 %v986, 7
    %v988 = vsub.s32 %v985, %v987
    %v989 = vrot.slane %v973, %v988
    %v991 = vunpack.c.l.s4 1966171168
    %v992 = vunpack.c.0.s8 %v991
    %v993 = vlaneseq
    %v994 = vshrl.u32 %v993, 7
    %v995 = vsub.s32 %v992, %v994
    %v996 = vrot.slane %v974, %v995
    %v998 = vunpack.c.l.s4 1966171168
    %v999 = vunpack.c.0.s8 %v998
    %v1000 = vlaneseq
    %v1001 = vshrl.u32 %v1000, 7
    %v1002 = vsub.s32 %v999, %v1001
    %v1003 = vrot.slane %v975, %v1002
    %v1004 = vcombine.low %v982, %v989
    %v1005 = vcombine.low %v996, %v1003
    %v1007 = vunpack.c.l.s4 1966171168
    %v1008 = vunpack.c.0.s8 %v1007
    %v1009 = vlaneseq
    %v1010 = vshrl.u32 %v1009, 7
    %v1011 = vsub.s32 %v1008, %v1010
    %v1012 = vrot.slane %v1004, %v1011
    %v1014 = vunpack.c.l.s4 1966171168
    %v1015 = vunpack.c.0.s8 %v1014
    %v1016 = vlaneseq
    %v1017 = vshrl.u32 %v1016, 7
    %v1018 = vsub.s32 %v1015, %v1017
    %v1019 = vrot.slane %v1005, %v1018
    %v1020 = vcombine.low %v1012, %v1019
    %1022 = vmatprep.subr.mxu0 0.0
    %1023 = vmatpush1.msra.mxu0 %v93
    %1024 = vmatprep.subr.mxu0 0.0
    %1025 = vmatpush1.msra.mxu0 %v94
    %1026 = vmatprep.subr.mxu0 0.0
    %1027 = vmatpush1.msra.mxu0 %v95
    %1028 = vmatprep.subr.mxu0 0.0
    %1029 = vmatpush1.msra.mxu0 %v96
    %1030 = vmatprep.subr.mxu0 0.0
    %1031 = vmatpush1.msra.mxu0 %v97
    %1032 = vmatprep.subr.mxu0 0.0
    %1033 = vmatpush1.msra.mxu0 %v98
    %1034 = vmatprep.subr.mxu0 0.0
    %1035 = vmatpush1.msra.mxu0 %v99
    %1036 = vmatprep.subr.mxu0 0.0
    %1037 = vmatpush1.msra.mxu0 %v100
    %1038 = vmatprep.subr.mxu0 0.0
    %1039 = vmatpush1.msra.mxu0 %v101
    %1040 = vmatprep.subr.mxu0 0.0
    %1041 = vmatpush1.msra.mxu0 %v102
    %1042 = vmatprep.subr.mxu0 0.0
    %1043 = vmatpush1.msra.mxu0 %v103
    %1044 = vmatprep.subr.mxu0 0.0
    %1045 = vmatpush1.msra.mxu0 %v104
    %1046 = vmatprep.subr.mxu0 0.0
    %1047 = vmatpush1.msra.mxu0 %v105
    %1048 = vmatprep.subr.mxu0 0.0
    %1049 = vmatpush1.msra.mxu0 %v106
    %1050 = vmatprep.subr.mxu0 0.0
    %1051 = vmatpush1.msra.mxu0 %v107
    %1052 = vmatprep.subr.mxu0 0.0
    %1053 = vmatpush1.msra.mxu0 %v108
    %1054 = vmatprep.subr.mxu0 0.0
    %1055 = vmatpush1.msra.mxu0 0.0
    %1056 = vmatprep.subr.mxu0 0.0
    %1057 = vmatpush1.msra.mxu0 0.0
    %1058 = vmatprep.subr.mxu0 0.0
    %1059 = vmatpush1.msra.mxu0 0.0
    %1060 = vmatprep.subr.mxu0 0.0
    %1061 = vmatpush1.msra.mxu0 0.0
    %1062 = vmatprep.subr.mxu0 0.0
    %1063 = vmatpush1.msra.mxu0 0.0
    %1064 = vmatprep.subr.mxu0 0.0
    %1065 = vmatpush1.msra.mxu0 0.0
    %1066 = vmatprep.subr.mxu0 0.0
    %1067 = vmatpush1.msra.mxu0 0.0
    %1068 = vmatprep.subr.mxu0 0.0
    %1069 = vmatpush1.msra.mxu0 0.0
    %1070 = vmatprep.subr.mxu0 0.0
    %1071 = vmatpush1.msra.mxu0 0.0
    %1072 = vmatprep.subr.mxu0 0.0
    %1073 = vmatpush1.msra.mxu0 0.0
    %1074 = vmatprep.subr.mxu0 0.0
    %1075 = vmatpush1.msra.mxu0 0.0
    %1076 = vmatprep.subr.mxu0 0.0
    %1077 = vmatpush1.msra.mxu0 0.0
    %1078 = vmatprep.subr.mxu0 0.0
    %1079 = vmatpush1.msra.mxu0 0.0
    %1080 = vmatprep.subr.mxu0 0.0
    %1081 = vmatpush1.msra.mxu0 0.0
    %1082 = vmatprep.subr.mxu0 0.0
    %1083 = vmatpush1.msra.mxu0 0.0
    %1084 = vmatprep.subr.mxu0 0.0
    %1085 = vmatpush1.msra.mxu0 0.0
    %1086 = vmatprep.mubr.f32.mxu0 0.0
    %1087 = vmatmul.mubr.f32.gmra.mrb[0].mxu0 %v1020
    %v1088 = vpop.f32.mrb[0].mxu0
    %v1089 = vadd.f32 0.0, %v1088
    %v1090 = vpop.f32.mrb[0].mxu0
    %1091 = vdwg.mxu0
    %v1100 = vrot.slane %v688, 2
    %v1101 = vrot.slane %v690, 2
    %v1102 = vrot.slane %v692, 2
    %v1103 = vrot.slane %v694, 2
    %v1104 = vrot.slane %v696, 2
    %v1105 = vrot.slane %v698, 2
    %v1106 = vrot.slane %v700, 2
    %v1107 = vrot.slane %v702, 2
    %v1117 = vcombine.high %v1089, %v1089
    %v1119 = vunpack.c.l.s4 1966171168
    %v1120 = vunpack.c.0.s8 %v1119
    %v1121 = vlaneseq
    %v1122 = vshrl.u32 %v1121, 7
    %v1123 = vsub.s32 %v1120, %v1122
    %v1124 = vrot.slane %v1089, %v1123
    %v1126 = vunpack.c.l.s4 1966171168
    %v1127 = vunpack.c.0.s8 %v1126
    %v1128 = vlaneseq
    %v1129 = vshrl.u32 %v1128, 7
    %v1130 = vsub.s32 %v1127, %v1129
    %v1131 = vrot.slane %v1117, %v1130
    %v1132 = vcombine.high %v1124, %v1124
    %v1133 = vcombine.high %v1131, %v1131
    %v1135 = vunpack.c.l.s4 1966171168
    %v1136 = vunpack.c.0.s8 %v1135
    %v1137 = vlaneseq
    %v1138 = vshrl.u32 %v1137, 7
    %v1139 = vsub.s32 %v1136, %v1138
    %v1140 = vrot.slane %v1124, %v1139
    %v1142 = vunpack.c.l.s4 1966171168
    %v1143 = vunpack.c.0.s8 %v1142
    %v1144 = vlaneseq
    %v1145 = vshrl.u32 %v1144, 7
    %v1146 = vsub.s32 %v1143, %v1145
    %v1147 = vrot.slane %v1131, %v1146
    %v1149 = vunpack.c.l.s4 1966171168
    %v1150 = vunpack.c.0.s8 %v1149
    %v1151 = vlaneseq
    %v1152 = vshrl.u32 %v1151, 7
    %v1153 = vsub.s32 %v1150, %v1152
    %v1154 = vrot.slane %v1132, %v1153
    %v1156 = vunpack.c.l.s4 1966171168
    %v1157 = vunpack.c.0.s8 %v1156
    %v1158 = vlaneseq
    %v1159 = vshrl.u32 %v1158, 7
    %v1160 = vsub.s32 %v1157, %v1159
    %v1161 = vrot.slane %v1133, %v1160
    %v1162 = vcombine.high %v1140, %v1140
    %v1163 = vcombine.high %v1147, %v1147
    %v1164 = vcombine.high %v1154, %v1154
    %v1165 = vcombine.high %v1161, %v1161
    %v1174 = vadd.f32 %v1100, %v1140
    %v1175 = vadd.f32 %v1101, %v1154
    %v1176 = vadd.f32 %v1102, %v1162
    %v1177 = vadd.f32 %v1103, %v1164
    %v1178 = vadd.f32 %v1104, %v1147
    %v1179 = vadd.f32 %v1105, %v1161
    %v1180 = vadd.f32 %v1106, %v1163
    %v1181 = vadd.f32 %v1107, %v1165
    %v1182 = vtanh.pop %v1174
    %v1183 = vtanh.pop %v1175
    %v1184 = vtanh.pop %v1176
    %v1185 = vtanh.pop %v1177
    %v1186 = vtanh.pop %v1178
    %v1187 = vtanh.pop %v1179
    %v1188 = vtanh.pop %v1180
    %v1189 = vtanh.pop %v1181
    %v1190 = vsub.f32 %v1182, %v922
    %v1191 = vsub.f32 %v1183, %v936
    %v1192 = vsub.f32 %v1184, %v944
    %v1193 = vsub.f32 %v1185, %v946
    %v1194 = vsub.f32 %v1186, %v929
    %v1195 = vsub.f32 %v1187, %v943
    %v1196 = vsub.f32 %v1188, %v945
    %v1197 = vsub.f32 %v1189, %v947
    %v1198 = vmul.f32 %v866, %v1190
    %v1199 = vmul.f32 %v867, %v1191
    %v1200 = vmul.f32 %v868, %v1192
    %v1201 = vmul.f32 %v869, %v1193
    %v1202 = vmul.f32 %v870, %v1194
    %v1203 = vmul.f32 %v871, %v1195
    %v1204 = vmul.f32 %v872, %v1196
    %v1205 = vmul.f32 %v873, %v1197
    %v1214 = vcombine.low %v1198, %v1199
    %v1215 = vcombine.low %v1200, %v1201
    %v1216 = vcombine.low %v1202, %v1203
    %v1217 = vcombine.low %v1204, %v1205
    %v1219 = vunpack.c.l.s4 1966171168
    %v1220 = vunpack.c.0.s8 %v1219
    %v1221 = vlaneseq
    %v1222 = vshrl.u32 %v1221, 7
    %v1223 = vsub.s32 %v1220, %v1222
    %v1224 = vrot.slane %v1214, %v1223
    %v1226 = vunpack.c.l.s4 1966171168
    %v1227 = vunpack.c.0.s8 %v1226
    %v1228 = vlaneseq
    %v1229 = vshrl.u32 %v1228, 7
    %v1230 = vsub.s32 %v1227, %v1229
    %v1231 = vrot.slane %v1215, %v1230
    %v1233 = vunpack.c.l.s4 1966171168
    %v1234 = vunpack.c.0.s8 %v1233
    %v1235 = vlaneseq
    %v1236 = vshrl.u32 %v1235, 7
    %v1237 = vsub.s32 %v1234, %v1236
    %v1238 = vrot.slane %v1216, %v1237
    %v1240 = vunpack.c.l.s4 1966171168
    %v1241 = vunpack.c.0.s8 %v1240
    %v1242 = vlaneseq
    %v1243 = vshrl.u32 %v1242, 7
    %v1244 = vsub.s32 %v1241, %v1243
    %v1245 = vrot.slane %v1217, %v1244
    %v1246 = vcombine.low %v1224, %v1231
    %v1247 = vcombine.low %v1238, %v1245
    %v1249 = vunpack.c.l.s4 1966171168
    %v1250 = vunpack.c.0.s8 %v1249
    %v1251 = vlaneseq
    %v1252 = vshrl.u32 %v1251, 7
    %v1253 = vsub.s32 %v1250, %v1252
    %v1254 = vrot.slane %v1246, %v1253
    %v1256 = vunpack.c.l.s4 1966171168
    %v1257 = vunpack.c.0.s8 %v1256
    %v1258 = vlaneseq
    %v1259 = vshrl.u32 %v1258, 7
    %v1260 = vsub.s32 %v1257, %v1259
    %v1261 = vrot.slane %v1247, %v1260
    %v1262 = vcombine.low %v1254, %v1261
    %v1264 = vadd.f32 %v686, %v1262
    %s1265 = scalar_lea.vmem [#allocation2], 2
    %v1266 = vld [vmem:[%s1265] ss:$8 sm:$0x7]
    %s1267 = scalar_lea.vmem [#allocation2], 26
    %v1268 = vld [vmem:[%s1267] ss:$8 sm:$0x7]
    %s1269 = scalar_lea.vmem [#allocation2], 50
    %v1270 = vld [vmem:[%s1269] ss:$8 sm:$0x7]
    %s1271 = scalar_lea.vmem [#allocation2], 74
    %v1272 = vld [vmem:[%s1271] ss:$8 sm:$0x7]
    %s1273 = scalar_lea.vmem [#allocation2], 98
    %v1274 = vld [vmem:[%s1273] ss:$8 sm:$0x7]
    %s1275 = scalar_lea.vmem [#allocation2], 122
    %v1276 = vld [vmem:[%s1275] ss:$8 sm:$0x7]
    %s1277 = scalar_lea.vmem [#allocation2], 146
    %v1278 = vld [vmem:[%s1277] ss:$8 sm:$0x7]
    %s1279 = scalar_lea.vmem [#allocation2], 170
    %v1280 = vld [vmem:[%s1279] ss:$8 sm:$0x7]
    %1281 = vmatprep.subr.mxu0 %v62
    %1282 = vmatpush1.msra.mxu0 %v61
    %1283 = vmatprep.subr.mxu0 %v64
    %1284 = vmatpush1.msra.mxu0 %v63
    %1285 = vmatprep.subr.mxu0 %v66
    %1286 = vmatpush1.msra.mxu0 %v65
    %1287 = vmatprep.subr.mxu0 %v68
    %1288 = vmatpush1.msra.mxu0 %v67
    %1289 = vmatprep.subr.mxu0 %v70
    %1290 = vmatpush1.msra.mxu0 %v69
    %1291 = vmatprep.subr.mxu0 %v72
    %1292 = vmatpush1.msra.mxu0 %v71
    %1293 = vmatprep.subr.mxu0 %v74
    %1294 = vmatpush1.msra.mxu0 %v73
    %1295 = vmatprep.subr.mxu0 %v76
    %1296 = vmatpush1.msra.mxu0 %v75
    %1297 = vmatprep.subr.mxu0 %v78
    %1298 = vmatpush1.msra.mxu0 %v77
    %1299 = vmatprep.subr.mxu0 %v80
    %1300 = vmatpush1.msra.mxu0 %v79
    %1301 = vmatprep.subr.mxu0 %v82
    %1302 = vmatpush1.msra.mxu0 %v81
    %1303 = vmatprep.subr.mxu0 %v84
    %1304 = vmatpush1.msra.mxu0 %v83
    %1305 = vmatprep.subr.mxu0 %v86
    %1306 = vmatpush1.msra.mxu0 %v85
    %1307 = vmatprep.subr.mxu0 %v88
    %1308 = vmatpush1.msra.mxu0 %v87
    %1309 = vmatprep.subr.mxu0 %v90
    %1310 = vmatpush1.msra.mxu0 %v89
    %1311 = vmatprep.subr.mxu0 %v92
    %1312 = vmatpush1.msra.mxu0 %v91
    %1313 = vmatprep.subr.mxu0 0.0
    %1314 = vmatpush1.msra.mxu0 0.0
    %1315 = vmatprep.subr.mxu0 0.0
    %1316 = vmatpush1.msra.mxu0 0.0
    %1317 = vmatprep.subr.mxu0 0.0
    %1318 = vmatpush1.msra.mxu0 0.0
    %1319 = vmatprep.subr.mxu0 0.0
    %1320 = vmatpush1.msra.mxu0 0.0
    %1321 = vmatprep.subr.mxu0 0.0
    %1322 = vmatpush1.msra.mxu0 0.0
    %1323 = vmatprep.subr.mxu0 0.0
    %1324 = vmatpush1.msra.mxu0 0.0
    %1325 = vmatprep.subr.mxu0 0.0
    %1326 = vmatpush1.msra.mxu0 0.0
    %1327 = vmatprep.subr.mxu0 0.0
    %1328 = vmatpush1.msra.mxu0 0.0
    %1329 = vmatprep.subr.mxu0 0.0
    %1330 = vmatpush1.msra.mxu0 0.0
    %1331 = vmatprep.subr.mxu0 0.0
    %1332 = vmatpush1.msra.mxu0 0.0
    %1333 = vmatprep.subr.mxu0 0.0
    %1334 = vmatpush1.msra.mxu0 0.0
    %1335 = vmatprep.subr.mxu0 0.0
    %1336 = vmatpush1.msra.mxu0 0.0
    %1337 = vmatprep.subr.mxu0 0.0
    %1338 = vmatpush1.msra.mxu0 0.0
    %1339 = vmatprep.subr.mxu0 0.0
    %1340 = vmatpush1.msra.mxu0 0.0
    %1341 = vmatprep.subr.mxu0 0.0
    %1342 = vmatpush1.msra.mxu0 0.0
    %1343 = vmatprep.subr.mxu0 0.0
    %1344 = vmatpush1.msra.mxu0 0.0
    %1345 = vmatprep.mubr.f32.mxu0 0.0
    %1346 = vmatmul.mubr.f32.gmra.mrb[0].mxu0 %v1264
    %v1347 = vpop.f32.mrb[0].mxu0
    %v1348 = vadd.f32 0.0, %v1347
    %v1349 = vpop.f32.mrb[0].mxu0
    %v1350 = vadd.f32 0.0, %v1349
    %1351 = vdwg.mxu0
    %v1354 = vcombine.low %v1348, %v1350
    %v1355 = vcombine.high %v1348, %v1350
    %v1357 = vunpack.c.l.s4 1966171168
    %v1358 = vunpack.c.0.s8 %v1357
    %v1359 = vlaneseq
    %v1360 = vshrl.u32 %v1359, 7
    %v1361 = vsub.s32 %v1358, %v1360
    %v1362 = vrot.slane %v1354, %v1361
    %v1364 = vunpack.c.l.s4 1966171168
    %v1365 = vunpack.c.0.s8 %v1364
    %v1366 = vlaneseq
    %v1367 = vshrl.u32 %v1366, 7
    %v1368 = vsub.s32 %v1365, %v1367
    %v1369 = vrot.slane %v1355, %v1368
    %v1370 = vcombine.high %v1362, %v1362
    %v1371 = vcombine.high %v1369, %v1369
    %v1373 = vunpack.c.l.s4 1966171168
    %v1374 = vunpack.c.0.s8 %v1373
    %v1375 = vlaneseq
    %v1376 = vshrl.u32 %v1375, 7
    %v1377 = vsub.s32 %v1374, %v1376
    %v1378 = vrot.slane %v1362, %v1377
    %v1380 = vunpack.c.l.s4 1966171168
    %v1381 = vunpack.c.0.s8 %v1380
    %v1382 = vlaneseq
    %v1383 = vshrl.u32 %v1382, 7
    %v1384 = vsub.s32 %v1381, %v1383
    %v1385 = vrot.slane %v1369, %v1384
    %v1387 = vunpack.c.l.s4 1966171168
    %v1388 = vunpack.c.0.s8 %v1387
    %v1389 = vlaneseq
    %v1390 = vshrl.u32 %v1389, 7
    %v1391 = vsub.s32 %v1388, %v1390
    %v1392 = vrot.slane %v1370, %v1391
    %v1394 = vunpack.c.l.s4 1966171168
    %v1395 = vunpack.c.0.s8 %v1394
    %v1396 = vlaneseq
    %v1397 = vshrl.u32 %v1396, 7
    %v1398 = vsub.s32 %v1395, %v1397
    %v1399 = vrot.slane %v1371, %v1398
    %v1400 = vcombine.high %v1378, %v1378
    %v1401 = vcombine.high %v1385, %v1385
    %v1402 = vcombine.high %v1392, %v1392
    %v1403 = vcombine.high %v1399, %v1399
    %v1412 = vadd.f32 %v1266, %v1378
    %v1413 = vadd.f32 %v1268, %v1392
    %v1414 = vadd.f32 %v1270, %v1400
    %v1415 = vadd.f32 %v1272, %v1402
    %v1416 = vadd.f32 %v1274, %v1385
    %v1417 = vadd.f32 %v1276, %v1399
    %v1418 = vadd.f32 %v1278, %v1401
    %v1419 = vadd.f32 %v1280, %v1403
    %v1420 = vmul.f32 %v1412, 0.5
    %v1421 = vmul.f32 %v1413, 0.5
    %v1422 = vmul.f32 %v1414, 0.5
    %v1423 = vmul.f32 %v1415, 0.5
    %v1424 = vmul.f32 %v1416, 0.5
    %v1425 = vmul.f32 %v1417, 0.5
    %v1426 = vmul.f32 %v1418, 0.5
    %v1427 = vmul.f32 %v1419, 0.5
    %v1428 = vtanh.pop %v1420
    %v1429 = vtanh.pop %v1421
    %v1430 = vtanh.pop %v1422
    %v1431 = vtanh.pop %v1423
    %v1432 = vtanh.pop %v1424
    %v1433 = vtanh.pop %v1425
    %v1434 = vtanh.pop %v1426
    %v1435 = vtanh.pop %v1427
    %v1436 = vadd.f32 %v1428, 1.0
    %v1437 = vadd.f32 %v1429, 1.0
    %v1438 = vadd.f32 %v1430, 1.0
    %v1439 = vadd.f32 %v1431, 1.0
    %v1440 = vadd.f32 %v1432, 1.0
    %v1441 = vadd.f32 %v1433, 1.0
    %v1442 = vadd.f32 %v1434, 1.0
    %v1443 = vadd.f32 %v1435, 1.0
    %v1444 = vmul.f32 %v1436, 0.5
    %v1445 = vmul.f32 %v1437, 0.5
    %v1446 = vmul.f32 %v1438, 0.5
    %v1447 = vmul.f32 %v1439, 0.5
    %v1448 = vmul.f32 %v1440, 0.5
    %v1449 = vmul.f32 %v1441, 0.5
    %v1450 = vmul.f32 %v1442, 0.5
    %v1451 = vmul.f32 %v1443, 0.5
    %v1460 = vrot.slane %v1444, 1
    %v1461 = vrot.slane %v1445, 1
    %v1462 = vrot.slane %v1446, 1
    %v1463 = vrot.slane %v1447, 1
    %v1464 = vrot.slane %v1448, 1
    %v1465 = vrot.slane %v1449, 1
    %v1466 = vrot.slane %v1450, 1
    %v1467 = vrot.slane %v1451, 1
    %v1477 = vcombine.high %v1264, %v1264
    %v1479 = vunpack.c.l.s4 1966171168
    %v1480 = vunpack.c.0.s8 %v1479
    %v1481 = vlaneseq
    %v1482 = vshrl.u32 %v1481, 7
    %v1483 = vsub.s32 %v1480, %v1482
    %v1484 = vrot.slane %v1264, %v1483
    %v1486 = vunpack.c.l.s4 1966171168
    %v1487 = vunpack.c.0.s8 %v1486
    %v1488 = vlaneseq
    %v1489 = vshrl.u32 %v1488, 7
    %v1490 = vsub.s32 %v1487, %v1489
    %v1491 = vrot.slane %v1477, %v1490
    %v1492 = vcombine.high %v1484, %v1484
    %v1493 = vcombine.high %v1491, %v1491
    %v1495 = vunpack.c.l.s4 1966171168
    %v1496 = vunpack.c.0.s8 %v1495
    %v1497 = vlaneseq
    %v1498 = vshrl.u32 %v1497, 7
    %v1499 = vsub.s32 %v1496, %v1498
    %v1500 = vrot.slane %v1484, %v1499
    %v1502 = vunpack.c.l.s4 1966171168
    %v1503 = vunpack.c.0.s8 %v1502
    %v1504 = vlaneseq
    %v1505 = vshrl.u32 %v1504, 7
    %v1506 = vsub.s32 %v1503, %v1505
    %v1507 = vrot.slane %v1491, %v1506
    %v1509 = vunpack.c.l.s4 1966171168
    %v1510 = vunpack.c.0.s8 %v1509
    %v1511 = vlaneseq
    %v1512 = vshrl.u32 %v1511, 7
    %v1513 = vsub.s32 %v1510, %v1512
    %v1514 = vrot.slane %v1492, %v1513
    %v1516 = vunpack.c.l.s4 1966171168
    %v1517 = vunpack.c.0.s8 %v1516
    %v1518 = vlaneseq
    %v1519 = vshrl.u32 %v1518, 7
    %v1520 = vsub.s32 %v1517, %v1519
    %v1521 = vrot.slane %v1493, %v1520
    %v1522 = vcombine.high %v1500, %v1500
    %v1523 = vcombine.high %v1507, %v1507
    %v1524 = vcombine.high %v1514, %v1514
    %v1525 = vcombine.high %v1521, %v1521
    %v1534 = vmul.f32 %v1460, %v1500
    %v1535 = vmul.f32 %v1461, %v1514
    %v1536 = vmul.f32 %v1462, %v1522
    %v1537 = vmul.f32 %v1463, %v1524
    %v1538 = vmul.f32 %v1464, %v1507
    %v1539 = vmul.f32 %v1465, %v1521
    %v1540 = vmul.f32 %v1466, %v1523
    %v1541 = vmul.f32 %v1467, %v1525
    %v1550 = vcombine.low %v1534, %v1535
    %v1551 = vcombine.low %v1536, %v1537
    %v1552 = vcombine.low %v1538, %v1539
    %v1553 = vcombine.low %v1540, %v1541
    %v1555 = vunpack.c.l.s4 1966171168
    %v1556 = vunpack.c.0.s8 %v1555
    %v1557 = vlaneseq
    %v1558 = vshrl.u32 %v1557, 7
    %v1559 = vsub.s32 %v1556, %v1558
    %v1560 = vrot.slane %v1550, %v1559
    %v1562 = vunpack.c.l.s4 1966171168
    %v1563 = vunpack.c.0.s8 %v1562
    %v1564 = vlaneseq
    %v1565 = vshrl.u32 %v1564, 7
    %v1566 = vsub.s32 %v1563, %v1565
    %v1567 = vrot.slane %v1551, %v1566
    %v1569 = vunpack.c.l.s4 1966171168
    %v1570 = vunpack.c.0.s8 %v1569
    %v1571 = vlaneseq
    %v1572 = vshrl.u32 %v1571, 7
    %v1573 = vsub.s32 %v1570, %v1572
    %v1574 = vrot.slane %v1552, %v1573
    %v1576 = vunpack.c.l.s4 1966171168
    %v1577 = vunpack.c.0.s8 %v1576
    %v1578 = vlaneseq
    %v1579 = vshrl.u32 %v1578, 7
    %v1580 = vsub.s32 %v1577, %v1579
    %v1581 = vrot.slane %v1553, %v1580
    %v1582 = vcombine.low %v1560, %v1567
    %v1583 = vcombine.low %v1574, %v1581
    %v1585 = vunpack.c.l.s4 1966171168
    %v1586 = vunpack.c.0.s8 %v1585
    %v1587 = vlaneseq
    %v1588 = vshrl.u32 %v1587, 7
    %v1589 = vsub.s32 %v1586, %v1588
    %v1590 = vrot.slane %v1582, %v1589
    %v1592 = vunpack.c.l.s4 1966171168
    %v1593 = vunpack.c.0.s8 %v1592
    %v1594 = vlaneseq
    %v1595 = vshrl.u32 %v1594, 7
    %v1596 = vsub.s32 %v1593, %v1595
    %v1597 = vrot.slane %v1583, %v1596
    %v1598 = vcombine.low %v1590, %v1597
    %1600 = vmatprep.subr.mxu0 0.0
    %1601 = vmatpush1.msra.mxu0 %v93
    %1602 = vmatprep.subr.mxu0 0.0
    %1603 = vmatpush1.msra.mxu0 %v94
    %1604 = vmatprep.subr.mxu0 0.0
    %1605 = vmatpush1.msra.mxu0 %v95
    %1606 = vmatprep.subr.mxu0 0.0
    %1607 = vmatpush1.msra.mxu0 %v96
    %1608 = vmatprep.subr.mxu0 0.0
    %1609 = vmatpush1.msra.mxu0 %v97
    %1610 = vmatprep.subr.mxu0 0.0
    %1611 = vmatpush1.msra.mxu0 %v98
    %1612 = vmatprep.subr.mxu0 0.0
    %1613 = vmatpush1.msra.mxu0 %v99
    %1614 = vmatprep.subr.mxu0 0.0
    %1615 = vmatpush1.msra.mxu0 %v100
    %1616 = vmatprep.subr.mxu0 0.0
    %1617 = vmatpush1.msra.mxu0 %v101
    %1618 = vmatprep.subr.mxu0 0.0
    %1619 = vmatpush1.msra.mxu0 %v102
    %1620 = vmatprep.subr.mxu0 0.0
    %1621 = vmatpush1.msra.mxu0 %v103
    %1622 = vmatprep.subr.mxu0 0.0
    %1623 = vmatpush1.msra.mxu0 %v104
    %1624 = vmatprep.subr.mxu0 0.0
    %1625 = vmatpush1.msra.mxu0 %v105
    %1626 = vmatprep.subr.mxu0 0.0
    %1627 = vmatpush1.msra.mxu0 %v106
    %1628 = vmatprep.subr.mxu0 0.0
    %1629 = vmatpush1.msra.mxu0 %v107
    %1630 = vmatprep.subr.mxu0 0.0
    %1631 = vmatpush1.msra.mxu0 %v108
    %1632 = vmatprep.subr.mxu0 0.0
    %1633 = vmatpush1.msra.mxu0 0.0
    %1634 = vmatprep.subr.mxu0 0.0
    %1635 = vmatpush1.msra.mxu0 0.0
    %1636 = vmatprep.subr.mxu0 0.0
    %1637 = vmatpush1.msra.mxu0 0.0
    %1638 = vmatprep.subr.mxu0 0.0
    %1639 = vmatpush1.msra.mxu0 0.0
    %1640 = vmatprep.subr.mxu0 0.0
    %1641 = vmatpush1.msra.mxu0 0.0
    %1642 = vmatprep.subr.mxu0 0.0
    %1643 = vmatpush1.msra.mxu0 0.0
    %1644 = vmatprep.subr.mxu0 0.0
    %1645 = vmatpush1.msra.mxu0 0.0
    %1646 = vmatprep.subr.mxu0 0.0
    %1647 = vmatpush1.msra.mxu0 0.0
    %1648 = vmatprep.subr.mxu0 0.0
    %1649 = vmatpush1.msra.mxu0 0.0
    %1650 = vmatprep.subr.mxu0 0.0
    %1651 = vmatpush1.msra.mxu0 0.0
    %1652 = vmatprep.subr.mxu0 0.0
    %1653 = vmatpush1.msra.mxu0 0.0
    %1654 = vmatprep.subr.mxu0 0.0
    %1655 = vmatpush1.msra.mxu0 0.0
    %1656 = vmatprep.subr.mxu0 0.0
    %1657 = vmatpush1.msra.mxu0 0.0
    %1658 = vmatprep.subr.mxu0 0.0
    %1659 = vmatpush1.msra.mxu0 0.0
    %1660 = vmatprep.subr.mxu0 0.0
    %1661 = vmatpush1.msra.mxu0 0.0
    %1662 = vmatprep.subr.mxu0 0.0
    %1663 = vmatpush1.msra.mxu0 0.0
    %1664 = vmatprep.mubr.f32.mxu0 0.0
    %1665 = vmatmul.mubr.f32.gmra.mrb[0].mxu0 %v1598
    %v1666 = vpop.f32.mrb[0].mxu0
    %v1667 = vadd.f32 0.0, %v1666
    %v1668 = vpop.f32.mrb[0].mxu0
    %1669 = vdwg.mxu0
    %v1678 = vrot.slane %v1266, 2
    %v1679 = vrot.slane %v1268, 2
    %v1680 = vrot.slane %v1270, 2
    %v1681 = vrot.slane %v1272, 2
    %v1682 = vrot.slane %v1274, 2
    %v1683 = vrot.slane %v1276, 2
    %v1684 = vrot.slane %v1278, 2
    %v1685 = vrot.slane %v1280, 2
    %v1695 = vcombine.high %v1667, %v1667
    %v1697 = vunpack.c.l.s4 1966171168
    %v1698 = vunpack.c.0.s8 %v1697
    %v1699 = vlaneseq
    %v1700 = vshrl.u32 %v1699, 7
    %v1701 = vsub.s32 %v1698, %v1700
    %v1702 = vrot.slane %v1667, %v1701
    %v1704 = vunpack.c.l.s4 1966171168
    %v1705 = vunpack.c.0.s8 %v1704
    %v1706 = vlaneseq
    %v1707 = vshrl.u32 %v1706, 7
    %v1708 = vsub.s32 %v1705, %v1707
    %v1709 = vrot.slane %v1695, %v1708
    %v1710 = vcombine.high %v1702, %v1702
    %v1711 = vcombine.high %v1709, %v1709
    %v1713 = vunpack.c.l.s4 1966171168
    %v1714 = vunpack.c.0.s8 %v1713
    %v1715 = vlaneseq
    %v1716 = vshrl.u32 %v1715, 7
    %v1717 = vsub.s32 %v1714, %v1716
    %v1718 = vrot.slane %v1702, %v1717
    %v1720 = vunpack.c.l.s4 1966171168
    %v1721 = vunpack.c.0.s8 %v1720
    %v1722 = vlaneseq
    %v1723 = vshrl.u32 %v1722, 7
    %v1724 = vsub.s32 %v1721, %v1723
    %v1725 = vrot.slane %v1709, %v1724
    %v1727 = vunpack.c.l.s4 1966171168
    %v1728 = vunpack.c.0.s8 %v1727
    %v1729 = vlaneseq
    %v1730 = vshrl.u32 %v1729, 7
    %v1731 = vsub.s32 %v1728, %v1730
    %v1732 = vrot.slane %v1710, %v1731
    %v1734 = vunpack.c.l.s4 1966171168
    %v1735 = vunpack.c.0.s8 %v1734
    %v1736 = vlaneseq
    %v1737 = vshrl.u32 %v1736, 7
    %v1738 = vsub.s32 %v1735, %v1737
    %v1739 = vrot.slane %v1711, %v1738
    %v1740 = vcombine.high %v1718, %v1718
    %v1741 = vcombine.high %v1725, %v1725
    %v1742 = vcombine.high %v1732, %v1732
    %v1743 = vcombine.high %v1739, %v1739
    %v1752 = vadd.f32 %v1678, %v1718
    %v1753 = vadd.f32 %v1679, %v1732
    %v1754 = vadd.f32 %v1680, %v1740
    %v1755 = vadd.f32 %v1681, %v1742
    %v1756 = vadd.f32 %v1682, %v1725
    %v1757 = vadd.f32 %v1683, %v1739
    %v1758 = vadd.f32 %v1684, %v1741
    %v1759 = vadd.f32 %v1685, %v1743
    %v1760 = vtanh.pop %v1752
    %v1761 = vtanh.pop %v1753
    %v1762 = vtanh.pop %v1754
    %v1763 = vtanh.pop %v1755
    %v1764 = vtanh.pop %v1756
    %v1765 = vtanh.pop %v1757
    %v1766 = vtanh.pop %v1758
    %v1767 = vtanh.pop %v1759
    %v1768 = vsub.f32 %v1760, %v1500
    %v1769 = vsub.f32 %v1761, %v1514
    %v1770 = vsub.f32 %v1762, %v1522
    %v1771 = vsub.f32 %v1763, %v1524
    %v1772 = vsub.f32 %v1764, %v1507
    %v1773 = vsub.f32 %v1765, %v1521
    %v1774 = vsub.f32 %v1766, %v1523
    %v1775 = vsub.f32 %v1767, %v1525
    %v1776 = vmul.f32 %v1444, %v1768
    %v1777 = vmul.f32 %v1445, %v1769
    %v1778 = vmul.f32 %v1446, %v1770
    %v1779 = vmul.f32 %v1447, %v1771
    %v1780 = vmul.f32 %v1448, %v1772
    %v1781 = vmul.f32 %v1449, %v1773
    %v1782 = vmul.f32 %v1450, %v1774
    %v1783 = vmul.f32 %v1451, %v1775
    %v1792 = vcombine.low %v1776, %v1777
    %v1793 = vcombine.low %v1778, %v1779
    %v1794 = vcombine.low %v1780, %v1781
    %v1795 = vcombine.low %v1782, %v1783
    %v1797 = vunpack.c.l.s4 1966171168
    %v1798 = vunpack.c.0.s8 %v1797
    %v1799 = vlaneseq
    %v1800 = vshrl.u32 %v1799, 7
    %v1801 = vsub.s32 %v1798, %v1800
    %v1802 = vrot.slane %v1792, %v1801
    %v1804 = vunpack.c.l.s4 1966171168
    %v1805 = vunpack.c.0.s8 %v1804
    %v1806 = vlaneseq
    %v1807 = vshrl.u32 %v1806, 7
    %v1808 = vsub.s32 %v1805, %v1807
    %v1809 = vrot.slane %v1793, %v1808
    %v1811 = vunpack.c.l.s4 1966171168
    %v1812 = vunpack.c.0.s8 %v1811
    %v1813 = vlaneseq
    %v1814 = vshrl.u32 %v1813, 7
    %v1815 = vsub.s32 %v1812, %v1814
    %v1816 = vrot.slane %v1794, %v1815
    %v1818 = vunpack.c.l.s4 1966171168
    %v1819 = vunpack.c.0.s8 %v1818
    %v1820 = vlaneseq
    %v1821 = vshrl.u32 %v1820, 7
    %v1822 = vsub.s32 %v1819, %v1821
    %v1823 = vrot.slane %v1795, %v1822
    %v1824 = vcombine.low %v1802, %v1809
    %v1825 = vcombine.low %v1816, %v1823
    %v1827 = vunpack.c.l.s4 1966171168
    %v1828 = vunpack.c.0.s8 %v1827
    %v1829 = vlaneseq
    %v1830 = vshrl.u32 %v1829, 7
    %v1831 = vsub.s32 %v1828, %v1830
    %v1832 = vrot.slane %v1824, %v1831
    %v1834 = vunpack.c.l.s4 1966171168
    %v1835 = vunpack.c.0.s8 %v1834
    %v1836 = vlaneseq
    %v1837 = vshrl.u32 %v1836, 7
    %v1838 = vsub.s32 %v1835, %v1837
    %v1839 = vrot.slane %v1825, %v1838
    %v1840 = vcombine.low %v1832, %v1839
    %v1842 = vadd.f32 %v1264, %v1840
    %s1843 = scalar_lea.vmem [#allocation2], 3
    %v1844 = vld [vmem:[%s1843] ss:$8 sm:$0x7]
    %s1845 = scalar_lea.vmem [#allocation2], 27
    %v1846 = vld [vmem:[%s1845] ss:$8 sm:$0x7]
    %s1847 = scalar_lea.vmem [#allocation2], 51
    %v1848 = vld [vmem:[%s1847] ss:$8 sm:$0x7]
    %s1849 = scalar_lea.vmem [#allocation2], 75
    %v1850 = vld [vmem:[%s1849] ss:$8 sm:$0x7]
    %s1851 = scalar_lea.vmem [#allocation2], 99
    %v1852 = vld [vmem:[%s1851] ss:$8 sm:$0x7]
    %s1853 = scalar_lea.vmem [#allocation2], 123
    %v1854 = vld [vmem:[%s1853] ss:$8 sm:$0x7]
    %s1855 = scalar_lea.vmem [#allocation2], 147
    %v1856 = vld [vmem:[%s1855] ss:$8 sm:$0x7]
    %s1857 = scalar_lea.vmem [#allocation2], 171
    %v1858 = vld [vmem:[%s1857] ss:$8 sm:$0x7]
    %1859 = vmatprep.subr.mxu0 %v62
    %1860 = vmatpush1.msra.mxu0 %v61
    %1861 = vmatprep.subr.mxu0 %v64
    %1862 = vmatpush1.msra.mxu0 %v63
    %1863 = vmatprep.subr.mxu0 %v66
    %1864 = vmatpush1.msra.mxu0 %v65
    %1865 = vmatprep.subr.mxu0 %v68
    %1866 = vmatpush1.msra.mxu0 %v67
    %1867 = vmatprep.subr.mxu0 %v70
    %1868 = vmatpush1.msra.mxu0 %v69
    %1869 = vmatprep.subr.mxu0 %v72
    %1870 = vmatpush1.msra.mxu0 %v71
    %1871 = vmatprep.subr.mxu0 %v74
    %1872 = vmatpush1.msra.mxu0 %v73
    %1873 = vmatprep.subr.mxu0 %v76
    %1874 = vmatpush1.msra.mxu0 %v75
    %1875 = vmatprep.subr.mxu0 %v78
    %1876 = vmatpush1.msra.mxu0 %v77
    %1877 = vmatprep.subr.mxu0 %v80
    %1878 = vmatpush1.msra.mxu0 %v79
    %1879 = vmatprep.subr.mxu0 %v82
    %1880 = vmatpush1.msra.mxu0 %v81
    %1881 = vmatprep.subr.mxu0 %v84
    %1882 = vmatpush1.msra.mxu0 %v83
    %1883 = vmatprep.subr.mxu0 %v86
    %1884 = vmatpush1.msra.mxu0 %v85
    %1885 = vmatprep.subr.mxu0 %v88
    %1886 = vmatpush1.msra.mxu0 %v87
    %1887 = vmatprep.subr.mxu0 %v90
    %1888 = vmatpush1.msra.mxu0 %v89
    %1889 = vmatprep.subr.mxu0 %v92
    %1890 = vmatpush1.msra.mxu0 %v91
    %1891 = vmatprep.subr.mxu0 0.0
    %1892 = vmatpush1.msra.mxu0 0.0
    %1893 = vmatprep.subr.mxu0 0.0
    %1894 = vmatpush1.msra.mxu0 0.0
    %1895 = vmatprep.subr.mxu0 0.0
    %1896 = vmatpush1.msra.mxu0 0.0
    %1897 = vmatprep.subr.mxu0 0.0
    %1898 = vmatpush1.msra.mxu0 0.0
    %1899 = vmatprep.subr.mxu0 0.0
    %1900 = vmatpush1.msra.mxu0 0.0
    %1901 = vmatprep.subr.mxu0 0.0
    %1902 = vmatpush1.msra.mxu0 0.0
    %1903 = vmatprep.subr.mxu0 0.0
    %1904 = vmatpush1.msra.mxu0 0.0
    %1905 = vmatprep.subr.mxu0 0.0
    %1906 = vmatpush1.msra.mxu0 0.0
    %1907 = vmatprep.subr.mxu0 0.0
    %1908 = vmatpush1.msra.mxu0 0.0
    %1909 = vmatprep.subr.mxu0 0.0
    %1910 = vmatpush1.msra.mxu0 0.0
    %1911 = vmatprep.subr.mxu0 0.0
    %1912 = vmatpush1.msra.mxu0 0.0
    %1913 = vmatprep.subr.mxu0 0.0
    %1914 = vmatpush1.msra.mxu0 0.0
    %1915 = vmatprep.subr.mxu0 0.0
    %1916 = vmatpush1.msra.mxu0 0.0
    %1917 = vmatprep.subr.mxu0 0.0
    %1918 = vmatpush1.msra.mxu0 0.0
    %1919 = vmatprep.subr.mxu0 0.0
    %1920 = vmatpush1.msra.mxu0 0.0
    %1921 = vmatprep.subr.mxu0 0.0
    %1922 = vmatpush1.msra.mxu0 0.0
    %1923 = vmatprep.mubr.f32.mxu0 0.0
    %1924 = vmatmul.mubr.f32.gmra.mrb[0].mxu0 %v1842
    %v1925 = vpop.f32.mrb[0].mxu0
    %v1926 = vadd.f32 0.0, %v1925
    %v1927 = vpop.f32.mrb[0].mxu0
    %v1928 = vadd.f32 0.0, %v1927
    %1929 = vdwg.mxu0
    %v1932 = vcombine.low %v1926, %v1928
    %v1933 = vcombine.high %v1926, %v1928
    %v1935 = vunpack.c.l.s4 1966171168
    %v1936 = vunpack.c.0.s8 %v1935
    %v1937 = vlaneseq
    %v1938 = vshrl.u32 %v1937, 7
    %v1939 = vsub.s32 %v1936, %v1938
    %v1940 = vrot.slane %v1932, %v1939
    %v1942 = vunpack.c.l.s4 1966171168
    %v1943 = vunpack.c.0.s8 %v1942
    %v1944 = vlaneseq
    %v1945 = vshrl.u32 %v1944, 7
    %v1946 = vsub.s32 %v1943, %v1945
    %v1947 = vrot.slane %v1933, %v1946
    %v1948 = vcombine.high %v1940, %v1940
    %v1949 = vcombine.high %v1947, %v1947
    %v1951 = vunpack.c.l.s4 1966171168
    %v1952 = vunpack.c.0.s8 %v1951
    %v1953 = vlaneseq
    %v1954 = vshrl.u32 %v1953, 7
    %v1955 = vsub.s32 %v1952, %v1954
    %v1956 = vrot.slane %v1940, %v1955
    %v1958 = vunpack.c.l.s4 1966171168
    %v1959 = vunpack.c.0.s8 %v1958
    %v1960 = vlaneseq
    %v1961 = vshrl.u32 %v1960, 7
    %v1962 = vsub.s32 %v1959, %v1961
    %v1963 = vrot.slane %v1947, %v1962
    %v1965 = vunpack.c.l.s4 1966171168
    %v1966 = vunpack.c.0.s8 %v1965
    %v1967 = vlaneseq
    %v1968 = vshrl.u32 %v1967, 7
    %v1969 = vsub.s32 %v1966, %v1968
    %v1970 = vrot.slane %v1948, %v1969
    %v1972 = vunpack.c.l.s4 1966171168
    %v1973 = vunpack.c.0.s8 %v1972
    %v1974 = vlaneseq
    %v1975 = vshrl.u32 %v1974, 7
    %v1976 = vsub.s32 %v1973, %v1975
    %v1977 = vrot.slane %v1949, %v1976
    %v1978 = vcombine.high %v1956, %v1956
    %v1979 = vcombine.high %v1963, %v1963
    %v1980 = vcombine.high %v1970, %v1970
    %v1981 = vcombine.high %v1977, %v1977
    %v1990 = vadd.f32 %v1844, %v1956
    %v1991 = vadd.f32 %v1846, %v1970
    %v1992 = vadd.f32 %v1848, %v1978
    %v1993 = vadd.f32 %v1850, %v1980
    %v1994 = vadd.f32 %v1852, %v1963
    %v1995 = vadd.f32 %v1854, %v1977
    %v1996 = vadd.f32 %v1856, %v1979
    %v1997 = vadd.f32 %v1858, %v1981
    %v1998 = vmul.f32 %v1990, 0.5
    %v1999 = vmul.f32 %v1991, 0.5
    %v2000 = vmul.f32 %v1992, 0.5
    %v2001 = vmul.f32 %v1993, 0.5
    %v2002 = vmul.f32 %v1994, 0.5
    %v2003 = vmul.f32 %v1995, 0.5
    %v2004 = vmul.f32 %v1996, 0.5
    %v2005 = vmul.f32 %v1997, 0.5
    %v2006 = vtanh.pop %v1998
    %v2007 = vtanh.pop %v1999
    %v2008 = vtanh.pop %v2000
    %v2009 = vtanh.pop %v2001
    %v2010 = vtanh.pop %v2002
    %v2011 = vtanh.pop %v2003
    %v2012 = vtanh.pop %v2004
    %v2013 = vtanh.pop %v2005
    %v2014 = vadd.f32 %v2006, 1.0
    %v2015 = vadd.f32 %v2007, 1.0
    %v2016 = vadd.f32 %v2008, 1.0
    %v2017 = vadd.f32 %v2009, 1.0
    %v2018 = vadd.f32 %v2010, 1.0
    %v2019 = vadd.f32 %v2011, 1.0
    %v2020 = vadd.f32 %v2012, 1.0
    %v2021 = vadd.f32 %v2013, 1.0
    %v2022 = vmul.f32 %v2014, 0.5
    %v2023 = vmul.f32 %v2015, 0.5
    %v2024 = vmul.f32 %v2016, 0.5
    %v2025 = vmul.f32 %v2017, 0.5
    %v2026 = vmul.f32 %v2018, 0.5
    %v2027 = vmul.f32 %v2019, 0.5
    %v2028 = vmul.f32 %v2020, 0.5
    %v2029 = vmul.f32 %v2021, 0.5
    %v2038 = vrot.slane %v2022, 1
    %v2039 = vrot.slane %v2023, 1
    %v2040 = vrot.slane %v2024, 1
    %v2041 = vrot.slane %v2025, 1
    %v2042 = vrot.slane %v2026, 1
    %v2043 = vrot.slane %v2027, 1
    %v2044 = vrot.slane %v2028, 1
    %v2045 = vrot.slane %v2029, 1
    %v2055 = vcombine.high %v1842, %v1842
    %v2057 = vunpack.c.l.s4 1966171168
    %v2058 = vunpack.c.0.s8 %v2057
    %v2059 = vlaneseq
    %v2060 = vshrl.u32 %v2059, 7
    %v2061 = vsub.s32 %v2058, %v2060
    %v2062 = vrot.slane %v1842, %v2061
    %v2064 = vunpack.c.l.s4 1966171168
    %v2065 = vunpack.c.0.s8 %v2064
    %v2066 = vlaneseq
    %v2067 = vshrl.u32 %v2066, 7
    %v2068 = vsub.s32 %v2065, %v2067
    %v2069 = vrot.slane %v2055, %v2068
    %v2070 = vcombine.high %v2062, %v2062
    %v2071 = vcombine.high %v2069, %v2069
    %v2073 = vunpack.c.l.s4 1966171168
    %v2074 = vunpack.c.0.s8 %v2073
    %v2075 = vlaneseq
    %v2076 = vshrl.u32 %v2075, 7
    %v2077 = vsub.s32 %v2074, %v2076
    %v2078 = vrot.slane %v2062, %v2077
    %v2080 = vunpack.c.l.s4 1966171168
    %v2081 = vunpack.c.0.s8 %v2080
    %v2082 = vlaneseq
    %v2083 = vshrl.u32 %v2082, 7
    %v2084 = vsub.s32 %v2081, %v2083
    %v2085 = vrot.slane %v2069, %v2084
    %v2087 = vunpack.c.l.s4 1966171168
    %v2088 = vunpack.c.0.s8 %v2087
    %v2089 = vlaneseq
    %v2090 = vshrl.u32 %v2089, 7
    %v2091 = vsub.s32 %v2088, %v2090
    %v2092 = vrot.slane %v2070, %v2091
    %v2094 = vunpack.c.l.s4 1966171168
    %v2095 = vunpack.c.0.s8 %v2094
    %v2096 = vlaneseq
    %v2097 = vshrl.u32 %v2096, 7
    %v2098 = vsub.s32 %v2095, %v2097
    %v2099 = vrot.slane %v2071, %v2098
    %v2100 = vcombine.high %v2078, %v2078
    %v2101 = vcombine.high %v2085, %v2085
    %v2102 = vcombine.high %v2092, %v2092
    %v2103 = vcombine.high %v2099, %v2099
    %v2112 = vmul.f32 %v2038, %v2078
    %v2113 = vmul.f32 %v2039, %v2092
    %v2114 = vmul.f32 %v2040, %v2100
    %v2115 = vmul.f32 %v2041, %v2102
    %v2116 = vmul.f32 %v2042, %v2085
    %v2117 = vmul.f32 %v2043, %v2099
    %v2118 = vmul.f32 %v2044, %v2101
    %v2119 = vmul.f32 %v2045, %v2103
    %v2128 = vcombine.low %v2112, %v2113
    %v2129 = vcombine.low %v2114, %v2115
    %v2130 = vcombine.low %v2116, %v2117
    %v2131 = vcombine.low %v2118, %v2119
    %v2133 = vunpack.c.l.s4 1966171168
    %v2134 = vunpack.c.0.s8 %v2133
    %v2135 = vlaneseq
    %v2136 = vshrl.u32 %v2135, 7
    %v2137 = vsub.s32 %v2134, %v2136
    %v2138 = vrot.slane %v2128, %v2137
    %v2140 = vunpack.c.l.s4 1966171168
    %v2141 = vunpack.c.0.s8 %v2140
    %v2142 = vlaneseq
    %v2143 = vshrl.u32 %v2142, 7
    %v2144 = vsub.s32 %v2141, %v2143
    %v2145 = vrot.slane %v2129, %v2144
    %v2147 = vunpack.c.l.s4 1966171168
    %v2148 = vunpack.c.0.s8 %v2147
    %v2149 = vlaneseq
    %v2150 = vshrl.u32 %v2149, 7
    %v2151 = vsub.s32 %v2148, %v2150
    %v2152 = vrot.slane %v2130, %v2151
    %v2154 = vunpack.c.l.s4 1966171168
    %v2155 = vunpack.c.0.s8 %v2154
    %v2156 = vlaneseq
    %v2157 = vshrl.u32 %v2156, 7
    %v2158 = vsub.s32 %v2155, %v2157
    %v2159 = vrot.slane %v2131, %v2158
    %v2160 = vcombine.low %v2138, %v2145
    %v2161 = vcombine.low %v2152, %v2159
    %v2163 = vunpack.c.l.s4 1966171168
    %v2164 = vunpack.c.0.s8 %v2163
    %v2165 = vlaneseq
    %v2166 = vshrl.u32 %v2165, 7
    %v2167 = vsub.s32 %v2164, %v2166
    %v2168 = vrot.slane %v2160, %v2167
    %v2170 = vunpack.c.l.s4 1966171168
    %v2171 = vunpack.c.0.s8 %v2170
    %v2172 = vlaneseq
    %v2173 = vshrl.u32 %v2172, 7
    %v2174 = vsub.s32 %v2171, %v2173
    %v2175 = vrot.slane %v2161, %v2174
    %v2176 = vcombine.low %v2168, %v2175
    %2178 = vmatprep.subr.mxu0 0.0
    %2179 = vmatpush1.msra.mxu0 %v93
    %2180 = vmatprep.subr.mxu0 0.0
    %2181 = vmatpush1.msra.mxu0 %v94
    %2182 = vmatprep.subr.mxu0 0.0
    %2183 = vmatpush1.msra.mxu0 %v95
    %2184 = vmatprep.subr.mxu0 0.0
    %2185 = vmatpush1.msra.mxu0 %v96
    %2186 = vmatprep.subr.mxu0 0.0
    %2187 = vmatpush1.msra.mxu0 %v97
    %2188 = vmatprep.subr.mxu0 0.0
    %2189 = vmatpush1.msra.mxu0 %v98
    %2190 = vmatprep.subr.mxu0 0.0
    %2191 = vmatpush1.msra.mxu0 %v99
    %2192 = vmatprep.subr.mxu0 0.0
    %2193 = vmatpush1.msra.mxu0 %v100
    %2194 = vmatprep.subr.mxu0 0.0
    %2195 = vmatpush1.msra.mxu0 %v101
    %2196 = vmatprep.subr.mxu0 0.0
    %2197 = vmatpush1.msra.mxu0 %v102
    %2198 = vmatprep.subr.mxu0 0.0
    %2199 = vmatpush1.msra.mxu0 %v103
    %2200 = vmatprep.subr.mxu0 0.0
    %2201 = vmatpush1.msra.mxu0 %v104
    %2202 = vmatprep.subr.mxu0 0.0
    %2203 = vmatpush1.msra.mxu0 %v105
    %2204 = vmatprep.subr.mxu0 0.0
    %2205 = vmatpush1.msra.mxu0 %v106
    %2206 = vmatprep.subr.mxu0 0.0
    %2207 = vmatpush1.msra.mxu0 %v107
    %2208 = vmatprep.subr.mxu0 0.0
    %2209 = vmatpush1.msra.mxu0 %v108
    %2210 = vmatprep.subr.mxu0 0.0
    %2211 = vmatpush1.msra.mxu0 0.0
    %2212 = vmatprep.subr.mxu0 0.0
    %2213 = vmatpush1.msra.mxu0 0.0
    %2214 = vmatprep.subr.mxu0 0.0
    %2215 = vmatpush1.msra.mxu0 0.0
    %2216 = vmatprep.subr.mxu0 0.0
    %2217 = vmatpush1.msra.mxu0 0.0
    %2218 = vmatprep.subr.mxu0 0.0
    %2219 = vmatpush1.msra.mxu0 0.0
    %2220 = vmatprep.subr.mxu0 0.0
    %2221 = vmatpush1.msra.mxu0 0.0
    %2222 = vmatprep.subr.mxu0 0.0
    %2223 = vmatpush1.msra.mxu0 0.0
    %2224 = vmatprep.subr.mxu0 0.0
    %2225 = vmatpush1.msra.mxu0 0.0
    %2226 = vmatprep.subr.mxu0 0.0
    %2227 = vmatpush1.msra.mxu0 0.0
    %2228 = vmatprep.subr.mxu0 0.0
    %2229 = vmatpush1.msra.mxu0 0.0
    %2230 = vmatprep.subr.mxu0 0.0
    %2231 = vmatpush1.msra.mxu0 0.0
    %2232 = vmatprep.subr.mxu0 0.0
    %2233 = vmatpush1.msra.mxu0 0.0
    %2234 = vmatprep.subr.mxu0 0.0
    %2235 = vmatpush1.msra.mxu0 0.0
    %2236 = vmatprep.subr.mxu0 0.0
    %2237 = vmatpush1.msra.mxu0 0.0
    %2238 = vmatprep.subr.mxu0 0.0
    %2239 = vmatpush1.msra.mxu0 0.0
    %2240 = vmatprep.subr.mxu0 0.0
    %2241 = vmatpush1.msra.mxu0 0.0
    %2242 = vmatprep.mubr.f32.mxu0 0.0
    %2243 = vmatmul.mubr.f32.gmra.mrb[0].mxu0 %v2176
    %v2244 = vpop.f32.mrb[0].mxu0
    %v2245 = vadd.f32 0.0, %v2244
    %v2246 = vpop.f32.mrb[0].mxu0
    %2247 = vdwg.mxu0
    %v2256 = vrot.slane %v1844, 2
    %v2257 = vrot.slane %v1846, 2
    %v2258 = vrot.slane %v1848, 2
    %v2259 = vrot.slane %v1850, 2
    %v2260 = vrot.slane %v1852, 2
    %v2261 = vrot.slane %v1854, 2
    %v2262 = vrot.slane %v1856, 2
    %v2263 = vrot.slane %v1858, 2
    %v2273 = vcombine.high %v2245, %v2245
    %v2275 = vunpack.c.l.s4 1966171168
    %v2276 = vunpack.c.0.s8 %v2275
    %v2277 = vlaneseq
    %v2278 = vshrl.u32 %v2277, 7
    %v2279 = vsub.s32 %v2276, %v2278
    %v2280 = vrot.slane %v2245, %v2279
    %v2282 = vunpack.c.l.s4 1966171168
    %v2283 = vunpack.c.0.s8 %v2282
    %v2284 = vlaneseq
    %v2285 = vshrl.u32 %v2284, 7
    %v2286 = vsub.s32 %v2283, %v2285
    %v2287 = vrot.slane %v2273, %v2286
    %v2288 = vcombine.high %v2280, %v2280
    %v2289 = vcombine.high %v2287, %v2287
    %v2291 = vunpack.c.l.s4 1966171168
    %v2292 = vunpack.c.0.s8 %v2291
    %v2293 = vlaneseq
    %v2294 = vshrl.u32 %v2293, 7
    %v2295 = vsub.s32 %v2292, %v2294
    %v2296 = vrot.slane %v2280, %v2295
    %v2298 = vunpack.c.l.s4 1966171168
    %v2299 = vunpack.c.0.s8 %v2298
    %v2300 = vlaneseq
    %v2301 = vshrl.u32 %v2300, 7
    %v2302 = vsub.s32 %v2299, %v2301
    %v2303 = vrot.slane %v2287, %v2302
    %v2305 = vunpack.c.l.s4 1966171168
    %v2306 = vunpack.c.0.s8 %v2305
    %v2307 = vlaneseq
    %v2308 = vshrl.u32 %v2307, 7
    %v2309 = vsub.s32 %v2306, %v2308
    %v2310 = vrot.slane %v2288, %v2309
    %v2312 = vunpack.c.l.s4 1966171168
    %v2313 = vunpack.c.0.s8 %v2312
    %v2314 = vlaneseq
    %v2315 = vshrl.u32 %v2314, 7
    %v2316 = vsub.s32 %v2313, %v2315
    %v2317 = vrot.slane %v2289, %v2316
    %v2318 = vcombine.high %v2296, %v2296
    %v2319 = vcombine.high %v2303, %v2303
    %v2320 = vcombine.high %v2310, %v2310
    %v2321 = vcombine.high %v2317, %v2317
    %v2330 = vadd.f32 %v2256, %v2296
    %v2331 = vadd.f32 %v2257, %v2310
    %v2332 = vadd.f32 %v2258, %v2318
    %v2333 = vadd.f32 %v2259, %v2320
    %v2334 = vadd.f32 %v2260, %v2303
    %v2335 = vadd.f32 %v2261, %v2317
    %v2336 = vadd.f32 %v2262, %v2319
    %v2337 = vadd.f32 %v2263, %v2321
    %v2338 = vtanh.pop %v2330
    %v2339 = vtanh.pop %v2331
    %v2340 = vtanh.pop %v2332
    %v2341 = vtanh.pop %v2333
    %v2342 = vtanh.pop %v2334
    %v2343 = vtanh.pop %v2335
    %v2344 = vtanh.pop %v2336
    %v2345 = vtanh.pop %v2337
    %v2346 = vsub.f32 %v2338, %v2078
    %v2347 = vsub.f32 %v2339, %v2092
    %v2348 = vsub.f32 %v2340, %v2100
    %v2349 = vsub.f32 %v2341, %v2102
    %v2350 = vsub.f32 %v2342, %v2085
    %v2351 = vsub.f32 %v2343, %v2099
    %v2352 = vsub.f32 %v2344, %v2101
    %v2353 = vsub.f32 %v2345, %v2103
    %v2354 = vmul.f32 %v2022, %v2346
    %v2355 = vmul.f32 %v2023, %v2347
    %v2356 = vmul.f32 %v2024, %v2348
    %v2357 = vmul.f32 %v2025, %v2349
    %v2358 = vmul.f32 %v2026, %v2350
    %v2359 = vmul.f32 %v2027, %v2351
    %v2360 = vmul.f32 %v2028, %v2352
    %v2361 = vmul.f32 %v2029, %v2353
    %v2370 = vcombine.low %v2354, %v2355
    %v2371 = vcombine.low %v2356, %v2357
    %v2372 = vcombine.low %v2358, %v2359
    %v2373 = vcombine.low %v2360, %v2361
    %v2375 = vunpack.c.l.s4 1966171168
    %v2376 = vunpack.c.0.s8 %v2375
    %v2377 = vlaneseq
    %v2378 = vshrl.u32 %v2377, 7
    %v2379 = vsub.s32 %v2376, %v2378
    %v2380 = vrot.slane %v2370, %v2379
    %v2382 = vunpack.c.l.s4 1966171168
    %v2383 = vunpack.c.0.s8 %v2382
    %v2384 = vlaneseq
    %v2385 = vshrl.u32 %v2384, 7
    %v2386 = vsub.s32 %v2383, %v2385
    %v2387 = vrot.slane %v2371, %v2386
    %v2389 = vunpack.c.l.s4 1966171168
    %v2390 = vunpack.c.0.s8 %v2389
    %v2391 = vlaneseq
    %v2392 = vshrl.u32 %v2391, 7
    %v2393 = vsub.s32 %v2390, %v2392
    %v2394 = vrot.slane %v2372, %v2393
    %v2396 = vunpack.c.l.s4 1966171168
    %v2397 = vunpack.c.0.s8 %v2396
    %v2398 = vlaneseq
    %v2399 = vshrl.u32 %v2398, 7
    %v2400 = vsub.s32 %v2397, %v2399
    %v2401 = vrot.slane %v2373, %v2400
    %v2402 = vcombine.low %v2380, %v2387
    %v2403 = vcombine.low %v2394, %v2401
    %v2405 = vunpack.c.l.s4 1966171168
    %v2406 = vunpack.c.0.s8 %v2405
    %v2407 = vlaneseq
    %v2408 = vshrl.u32 %v2407, 7
    %v2409 = vsub.s32 %v2406, %v2408
    %v2410 = vrot.slane %v2402, %v2409
    %v2412 = vunpack.c.l.s4 1966171168
    %v2413 = vunpack.c.0.s8 %v2412
    %v2414 = vlaneseq
    %v2415 = vshrl.u32 %v2414, 7
    %v2416 = vsub.s32 %v2413, %v2415
    %v2417 = vrot.slane %v2403, %v2416
    %v2418 = vcombine.low %v2410, %v2417
    %v2420 = vadd.f32 %v1842, %v2418
    %s2421 = scalar_lea.vmem [#allocation2], 4
    %v2422 = vld [vmem:[%s2421] ss:$8 sm:$0x7]
    %s2423 = scalar_lea.vmem [#allocation2], 28
    %v2424 = vld [vmem:[%s2423] ss:$8 sm:$0x7]
    %s2425 = scalar_lea.vmem [#allocation2], 52
    %v2426 = vld [vmem:[%s2425] ss:$8 sm:$0x7]
    %s2427 = scalar_lea.vmem [#allocation2], 76
    %v2428 = vld [vmem:[%s2427] ss:$8 sm:$0x7]
    %s2429 = scalar_lea.vmem [#allocation2], 100
    %v2430 = vld [vmem:[%s2429] ss:$8 sm:$0x7]
    %s2431 = scalar_lea.vmem [#allocation2], 124
    %v2432 = vld [vmem:[%s2431] ss:$8 sm:$0x7]
    %s2433 = scalar_lea.vmem [#allocation2], 148
    %v2434 = vld [vmem:[%s2433] ss:$8 sm:$0x7]
    %s2435 = scalar_lea.vmem [#allocation2], 172
    %v2436 = vld [vmem:[%s2435] ss:$8 sm:$0x7]
    %2437 = vmatprep.subr.mxu0 %v62
    %2438 = vmatpush1.msra.mxu0 %v61
    %2439 = vmatprep.subr.mxu0 %v64
    %2440 = vmatpush1.msra.mxu0 %v63
    %2441 = vmatprep.subr.mxu0 %v66
    %2442 = vmatpush1.msra.mxu0 %v65
    %2443 = vmatprep.subr.mxu0 %v68
    %2444 = vmatpush1.msra.mxu0 %v67
    %2445 = vmatprep.subr.mxu0 %v70
    %2446 = vmatpush1.msra.mxu0 %v69
    %2447 = vmatprep.subr.mxu0 %v72
    %2448 = vmatpush1.msra.mxu0 %v71
    %2449 = vmatprep.subr.mxu0 %v74
    %2450 = vmatpush1.msra.mxu0 %v73
    %2451 = vmatprep.subr.mxu0 %v76
    %2452 = vmatpush1.msra.mxu0 %v75
    %2453 = vmatprep.subr.mxu0 %v78
    %2454 = vmatpush1.msra.mxu0 %v77
    %2455 = vmatprep.subr.mxu0 %v80
    %2456 = vmatpush1.msra.mxu0 %v79
    %2457 = vmatprep.subr.mxu0 %v82
    %2458 = vmatpush1.msra.mxu0 %v81
    %2459 = vmatprep.subr.mxu0 %v84
    %2460 = vmatpush1.msra.mxu0 %v83
    %2461 = vmatprep.subr.mxu0 %v86
    %2462 = vmatpush1.msra.mxu0 %v85
    %2463 = vmatprep.subr.mxu0 %v88
    %2464 = vmatpush1.msra.mxu0 %v87
    %2465 = vmatprep.subr.mxu0 %v90
    %2466 = vmatpush1.msra.mxu0 %v89
    %2467 = vmatprep.subr.mxu0 %v92
    %2468 = vmatpush1.msra.mxu0 %v91
    %2469 = vmatprep.subr.mxu0 0.0
    %2470 = vmatpush1.msra.mxu0 0.0
    %2471 = vmatprep.subr.mxu0 0.0
    %2472 = vmatpush1.msra.mxu0 0.0
    %2473 = vmatprep.subr.mxu0 0.0
    %2474 = vmatpush1.msra.mxu0 0.0
    %2475 = vmatprep.subr.mxu0 0.0
    %2476 = vmatpush1.msra.mxu0 0.0
    %2477 = vmatprep.subr.mxu0 0.0
    %2478 = vmatpush1.msra.mxu0 0.0
    %2479 = vmatprep.subr.mxu0 0.0
    %2480 = vmatpush1.msra.mxu0 0.0
    %2481 = vmatprep.subr.mxu0 0.0
    %2482 = vmatpush1.msra.mxu0 0.0
    %2483 = vmatprep.subr.mxu0 0.0
    %2484 = vmatpush1.msra.mxu0 0.0
    %2485 = vmatprep.subr.mxu0 0.0
    %2486 = vmatpush1.msra.mxu0 0.0
    %2487 = vmatprep.subr.mxu0 0.0
    %2488 = vmatpush1.msra.mxu0 0.0
    %2489 = vmatprep.subr.mxu0 0.0
    %2490 = vmatpush1.msra.mxu0 0.0
    %2491 = vmatprep.subr.mxu0 0.0
    %2492 = vmatpush1.msra.mxu0 0.0
    %2493 = vmatprep.subr.mxu0 0.0
    %2494 = vmatpush1.msra.mxu0 0.0
    %2495 = vmatprep.subr.mxu0 0.0
    %2496 = vmatpush1.msra.mxu0 0.0
    %2497 = vmatprep.subr.mxu0 0.0
    %2498 = vmatpush1.msra.mxu0 0.0
    %2499 = vmatprep.subr.mxu0 0.0
    %2500 = vmatpush1.msra.mxu0 0.0
    %2501 = vmatprep.mubr.f32.mxu0 0.0
    %2502 = vmatmul.mubr.f32.gmra.mrb[0].mxu0 %v2420
    %v2503 = vpop.f32.mrb[0].mxu0
    %v2504 = vadd.f32 0.0, %v2503
    %v2505 = vpop.f32.mrb[0].mxu0
    %v2506 = vadd.f32 0.0, %v2505
    %2507 = vdwg.mxu0
    %v2510 = vcombine.low %v2504, %v2506
    %v2511 = vcombine.high %v2504, %v2506
    %v2513 = vunpack.c.l.s4 1966171168
    %v2514 = vunpack.c.0.s8 %v2513
    %v2515 = vlaneseq
    %v2516 = vshrl.u32 %v2515, 7
    %v2517 = vsub.s32 %v2514, %v2516
    %v2518 = vrot.slane %v2510, %v2517
    %v2520 = vunpack.c.l.s4 1966171168
    %v2521 = vunpack.c.0.s8 %v2520
    %v2522 = vlaneseq
    %v2523 = vshrl.u32 %v2522, 7
    %v2524 = vsub.s32 %v2521, %v2523
    %v2525 = vrot.slane %v2511, %v2524
    %v2526 = vcombine.high %v2518, %v2518
    %v2527 = vcombine.high %v2525, %v2525
    %v2529 = vunpack.c.l.s4 1966171168
    %v2530 = vunpack.c.0.s8 %v2529
    %v2531 = vlaneseq
    %v2532 = vshrl.u32 %v2531, 7
    %v2533 = vsub.s32 %v2530, %v2532
    %v2534 = vrot.slane %v2518, %v2533
    %v2536 = vunpack.c.l.s4 1966171168
    %v2537 = vunpack.c.0.s8 %v2536
    %v2538 = vlaneseq
    %v2539 = vshrl.u32 %v2538, 7
    %v2540 = vsub.s32 %v2537, %v2539
    %v2541 = vrot.slane %v2525, %v2540
    %v2543 = vunpack.c.l.s4 1966171168
    %v2544 = vunpack.c.0.s8 %v2543
    %v2545 = vlaneseq
    %v2546 = vshrl.u32 %v2545, 7
    %v2547 = vsub.s32 %v2544, %v2546
    %v2548 = vrot.slane %v2526, %v2547
    %v2550 = vunpack.c.l.s4 1966171168
    %v2551 = vunpack.c.0.s8 %v2550
    %v2552 = vlaneseq
    %v2553 = vshrl.u32 %v2552, 7
    %v2554 = vsub.s32 %v2551, %v2553
    %v2555 = vrot.slane %v2527, %v2554
    %v2556 = vcombine.high %v2534, %v2534
    %v2557 = vcombine.high %v2541, %v2541
    %v2558 = vcombine.high %v2548, %v2548
    %v2559 = vcombine.high %v2555, %v2555
    %v2568 = vadd.f32 %v2422, %v2534
    %v2569 = vadd.f32 %v2424, %v2548
    %v2570 = vadd.f32 %v2426, %v2556
    %v2571 = vadd.f32 %v2428, %v2558
    %v2572 = vadd.f32 %v2430, %v2541
    %v2573 = vadd.f32 %v2432, %v2555
    %v2574 = vadd.f32 %v2434, %v2557
    %v2575 = vadd.f32 %v2436, %v2559
    %v2576 = vmul.f32 %v2568, 0.5
    %v2577 = vmul.f32 %v2569, 0.5
    %v2578 = vmul.f32 %v2570, 0.5
    %v2579 = vmul.f32 %v2571, 0.5
    %v2580 = vmul.f32 %v2572, 0.5
    %v2581 = vmul.f32 %v2573, 0.5
    %v2582 = vmul.f32 %v2574, 0.5
    %v2583 = vmul.f32 %v2575, 0.5
    %v2584 = vtanh.pop %v2576
    %v2585 = vtanh.pop %v2577
    %v2586 = vtanh.pop %v2578
    %v2587 = vtanh.pop %v2579
    %v2588 = vtanh.pop %v2580
    %v2589 = vtanh.pop %v2581
    %v2590 = vtanh.pop %v2582
    %v2591 = vtanh.pop %v2583
    %v2592 = vadd.f32 %v2584, 1.0
    %v2593 = vadd.f32 %v2585, 1.0
    %v2594 = vadd.f32 %v2586, 1.0
    %v2595 = vadd.f32 %v2587, 1.0
    %v2596 = vadd.f32 %v2588, 1.0
    %v2597 = vadd.f32 %v2589, 1.0
    %v2598 = vadd.f32 %v2590, 1.0
    %v2599 = vadd.f32 %v2591, 1.0
    %v2600 = vmul.f32 %v2592, 0.5
    %v2601 = vmul.f32 %v2593, 0.5
    %v2602 = vmul.f32 %v2594, 0.5
    %v2603 = vmul.f32 %v2595, 0.5
    %v2604 = vmul.f32 %v2596, 0.5
    %v2605 = vmul.f32 %v2597, 0.5
    %v2606 = vmul.f32 %v2598, 0.5
    %v2607 = vmul.f32 %v2599, 0.5
    %v2616 = vrot.slane %v2600, 1
    %v2617 = vrot.slane %v2601, 1
    %v2618 = vrot.slane %v2602, 1
    %v2619 = vrot.slane %v2603, 1
    %v2620 = vrot.slane %v2604, 1
    %v2621 = vrot.slane %v2605, 1
    %v2622 = vrot.slane %v2606, 1
    %v2623 = vrot.slane %v2607, 1
    %v2633 = vcombine.high %v2420, %v2420
    %v2635 = vunpack.c.l.s4 1966171168
    %v2636 = vunpack.c.0.s8 %v2635
    %v2637 = vlaneseq
    %v2638 = vshrl.u32 %v2637, 7
    %v2639 = vsub.s32 %v2636, %v2638
    %v2640 = vrot.slane %v2420, %v2639
    %v2642 = vunpack.c.l.s4 1966171168
    %v2643 = vunpack.c.0.s8 %v2642
    %v2644 = vlaneseq
    %v2645 = vshrl.u32 %v2644, 7
    %v2646 = vsub.s32 %v2643, %v2645
    %v2647 = vrot.slane %v2633, %v2646
    %v2648 = vcombine.high %v2640, %v2640
    %v2649 = vcombine.high %v2647, %v2647
    %v2651 = vunpack.c.l.s4 1966171168
    %v2652 = vunpack.c.0.s8 %v2651
    %v2653 = vlaneseq
    %v2654 = vshrl.u32 %v2653, 7
    %v2655 = vsub.s32 %v2652, %v2654
    %v2656 = vrot.slane %v2640, %v2655
    %v2658 = vunpack.c.l.s4 1966171168
    %v2659 = vunpack.c.0.s8 %v2658
    %v2660 = vlaneseq
    %v2661 = vshrl.u32 %v2660, 7
    %v2662 = vsub.s32 %v2659, %v2661
    %v2663 = vrot.slane %v2647, %v2662
    %v2665 = vunpack.c.l.s4 1966171168
    %v2666 = vunpack.c.0.s8 %v2665
    %v2667 = vlaneseq
    %v2668 = vshrl.u32 %v2667, 7
    %v2669 = vsub.s32 %v2666, %v2668
    %v2670 = vrot.slane %v2648, %v2669
    %v2672 = vunpack.c.l.s4 1966171168
    %v2673 = vunpack.c.0.s8 %v2672
    %v2674 = vlaneseq
    %v2675 = vshrl.u32 %v2674, 7
    %v2676 = vsub.s32 %v2673, %v2675
    %v2677 = vrot.slane %v2649, %v2676
    %v2678 = vcombine.high %v2656, %v2656
    %v2679 = vcombine.high %v2663, %v2663
    %v2680 = vcombine.high %v2670, %v2670
    %v2681 = vcombine.high %v2677, %v2677
    %v2690 = vmul.f32 %v2616, %v2656
    %v2691 = vmul.f32 %v2617, %v2670
    %v2692 = vmul.f32 %v2618, %v2678
    %v2693 = vmul.f32 %v2619, %v2680
    %v2694 = vmul.f32 %v2620, %v2663
    %v2695 = vmul.f32 %v2621, %v2677
    %v2696 = vmul.f32 %v2622, %v2679
    %v2697 = vmul.f32 %v2623, %v2681
    %v2706 = vcombine.low %v2690, %v2691
    %v2707 = vcombine.low %v2692, %v2693
    %v2708 = vcombine.low %v2694, %v2695
    %v2709 = vcombine.low %v2696, %v2697
    %v2711 = vunpack.c.l.s4 1966171168
    %v2712 = vunpack.c.0.s8 %v2711
    %v2713 = vlaneseq
    %v2714 = vshrl.u32 %v2713, 7
    %v2715 = vsub.s32 %v2712, %v2714
    %v2716 = vrot.slane %v2706, %v2715
    %v2718 = vunpack.c.l.s4 1966171168
    %v2719 = vunpack.c.0.s8 %v2718
    %v2720 = vlaneseq
    %v2721 = vshrl.u32 %v2720, 7
    %v2722 = vsub.s32 %v2719, %v2721
    %v2723 = vrot.slane %v2707, %v2722
    %v2725 = vunpack.c.l.s4 1966171168
    %v2726 = vunpack.c.0.s8 %v2725
    %v2727 = vlaneseq
    %v2728 = vshrl.u32 %v2727, 7
    %v2729 = vsub.s32 %v2726, %v2728
    %v2730 = vrot.slane %v2708, %v2729
    %v2732 = vunpack.c.l.s4 1966171168
    %v2733 = vunpack.c.0.s8 %v2732
    %v2734 = vlaneseq
    %v2735 = vshrl.u32 %v2734, 7
    %v2736 = vsub.s32 %v2733, %v2735
    %v2737 = vrot.slane %v2709, %v2736
    %v2738 = vcombine.low %v2716, %v2723
    %v2739 = vcombine.low %v2730, %v2737
    %v2741 = vunpack.c.l.s4 1966171168
    %v2742 = vunpack.c.0.s8 %v2741
    %v2743 = vlaneseq
    %v2744 = vshrl.u32 %v2743, 7
    %v2745 = vsub.s32 %v2742, %v2744
    %v2746 = vrot.slane %v2738, %v2745
    %v2748 = vunpack.c.l.s4 1966171168
    %v2749 = vunpack.c.0.s8 %v2748
    %v2750 = vlaneseq
    %v2751 = vshrl.u32 %v2750, 7
    %v2752 = vsub.s32 %v2749, %v2751
    %v2753 = vrot.slane %v2739, %v2752
    %v2754 = vcombine.low %v2746, %v2753
    %2756 = vmatprep.subr.mxu0 0.0
    %2757 = vmatpush1.msra.mxu0 %v93
    %2758 = vmatprep.subr.mxu0 0.0
    %2759 = vmatpush1.msra.mxu0 %v94
    %2760 = vmatprep.subr.mxu0 0.0
    %2761 = vmatpush1.msra.mxu0 %v95
    %2762 = vmatprep.subr.mxu0 0.0
    %2763 = vmatpush1.msra.mxu0 %v96
    %2764 = vmatprep.subr.mxu0 0.0
    %2765 = vmatpush1.msra.mxu0 %v97
    %2766 = vmatprep.subr.mxu0 0.0
    %2767 = vmatpush1.msra.mxu0 %v98
    %2768 = vmatprep.subr.mxu0 0.0
    %2769 = vmatpush1.msra.mxu0 %v99
    %2770 = vmatprep.subr.mxu0 0.0
    %2771 = vmatpush1.msra.mxu0 %v100
    %2772 = vmatprep.subr.mxu0 0.0
    %2773 = vmatpush1.msra.mxu0 %v101
    %2774 = vmatprep.subr.mxu0 0.0
    %2775 = vmatpush1.msra.mxu0 %v102
    %2776 = vmatprep.subr.mxu0 0.0
    %2777 = vmatpush1.msra.mxu0 %v103
    %2778 = vmatprep.subr.mxu0 0.0
    %2779 = vmatpush1.msra.mxu0 %v104
    %2780 = vmatprep.subr.mxu0 0.0
    %2781 = vmatpush1.msra.mxu0 %v105
    %2782 = vmatprep.subr.mxu0 0.0
    %2783 = vmatpush1.msra.mxu0 %v106
    %2784 = vmatprep.subr.mxu0 0.0
    %2785 = vmatpush1.msra.mxu0 %v107
    %2786 = vmatprep.subr.mxu0 0.0
    %2787 = vmatpush1.msra.mxu0 %v108
    %2788 = vmatprep.subr.mxu0 0.0
    %2789 = vmatpush1.msra.mxu0 0.0
    %2790 = vmatprep.subr.mxu0 0.0
    %2791 = vmatpush1.msra.mxu0 0.0
    %2792 = vmatprep.subr.mxu0 0.0
    %2793 = vmatpush1.msra.mxu0 0.0
    %2794 = vmatprep.subr.mxu0 0.0
    %2795 = vmatpush1.msra.mxu0 0.0
    %2796 = vmatprep.subr.mxu0 0.0
    %2797 = vmatpush1.msra.mxu0 0.0
    %2798 = vmatprep.subr.mxu0 0.0
    %2799 = vmatpush1.msra.mxu0 0.0
    %2800 = vmatprep.subr.mxu0 0.0
    %2801 = vmatpush1.msra.mxu0 0.0
    %2802 = vmatprep.subr.mxu0 0.0
    %2803 = vmatpush1.msra.mxu0 0.0
    %2804 = vmatprep.subr.mxu0 0.0
    %2805 = vmatpush1.msra.mxu0 0.0
    %2806 = vmatprep.subr.mxu0 0.0
    %2807 = vmatpush1.msra.mxu0 0.0
    %2808 = vmatprep.subr.mxu0 0.0
    %2809 = vmatpush1.msra.mxu0 0.0
    %2810 = vmatprep.subr.mxu0 0.0
    %2811 = vmatpush1.msra.mxu0 0.0
    %2812 = vmatprep.subr.mxu0 0.0
    %2813 = vmatpush1.msra.mxu0 0.0
    %2814 = vmatprep.subr.mxu0 0.0
    %2815 = vmatpush1.msra.mxu0 0.0
    %2816 = vmatprep.subr.mxu0 0.0
    %2817 = vmatpush1.msra.mxu0 0.0
    %2818 = vmatprep.subr.mxu0 0.0
    %2819 = vmatpush1.msra.mxu0 0.0
    %2820 = vmatprep.mubr.f32.mxu0 0.0
    %2821 = vmatmul.mubr.f32.gmra.mrb[0].mxu0 %v2754
    %v2822 = vpop.f32.mrb[0].mxu0
    %v2823 = vadd.f32 0.0, %v2822
    %v2824 = vpop.f32.mrb[0].mxu0
    %2825 = vdwg.mxu0
    %v2834 = vrot.slane %v2422, 2
    %v2835 = vrot.slane %v2424, 2
    %v2836 = vrot.slane %v2426, 2
    %v2837 = vrot.slane %v2428, 2
    %v2838 = vrot.slane %v2430, 2
    %v2839 = vrot.slane %v2432, 2
    %v2840 = vrot.slane %v2434, 2
    %v2841 = vrot.slane %v2436, 2
    %v2851 = vcombine.high %v2823, %v2823
    %v2853 = vunpack.c.l.s4 1966171168
    %v2854 = vunpack.c.0.s8 %v2853
    %v2855 = vlaneseq
    %v2856 = vshrl.u32 %v2855, 7
    %v2857 = vsub.s32 %v2854, %v2856
    %v2858 = vrot.slane %v2823, %v2857
    %v2860 = vunpack.c.l.s4 1966171168
    %v2861 = vunpack.c.0.s8 %v2860
    %v2862 = vlaneseq
    %v2863 = vshrl.u32 %v2862, 7
    %v2864 = vsub.s32 %v2861, %v2863
    %v2865 = vrot.slane %v2851, %v2864
    %v2866 = vcombine.high %v2858, %v2858
    %v2867 = vcombine.high %v2865, %v2865
    %v2869 = vunpack.c.l.s4 1966171168
    %v2870 = vunpack.c.0.s8 %v2869
    %v2871 = vlaneseq
    %v2872 = vshrl.u32 %v2871, 7
    %v2873 = vsub.s32 %v2870, %v2872
    %v2874 = vrot.slane %v2858, %v2873
    %v2876 = vunpack.c.l.s4 1966171168
    %v2877 = vunpack.c.0.s8 %v2876
    %v2878 = vlaneseq
    %v2879 = vshrl.u32 %v2878, 7
    %v2880 = vsub.s32 %v2877, %v2879
    %v2881 = vrot.slane %v2865, %v2880
    %v2883 = vunpack.c.l.s4 1966171168
    %v2884 = vunpack.c.0.s8 %v2883
    %v2885 = vlaneseq
    %v2886 = vshrl.u32 %v2885, 7
    %v2887 = vsub.s32 %v2884, %v2886
    %v2888 = vrot.slane %v2866, %v2887
    %v2890 = vunpack.c.l.s4 1966171168
    %v2891 = vunpack.c.0.s8 %v2890
    %v2892 = vlaneseq
    %v2893 = vshrl.u32 %v2892, 7
    %v2894 = vsub.s32 %v2891, %v2893
    %v2895 = vrot.slane %v2867, %v2894
    %v2896 = vcombine.high %v2874, %v2874
    %v2897 = vcombine.high %v2881, %v2881
    %v2898 = vcombine.high %v2888, %v2888
    %v2899 = vcombine.high %v2895, %v2895
    %v2908 = vadd.f32 %v2834, %v2874
    %v2909 = vadd.f32 %v2835, %v2888
    %v2910 = vadd.f32 %v2836, %v2896
    %v2911 = vadd.f32 %v2837, %v2898
    %v2912 = vadd.f32 %v2838, %v2881
    %v2913 = vadd.f32 %v2839, %v2895
    %v2914 = vadd.f32 %v2840, %v2897
    %v2915 = vadd.f32 %v2841, %v2899
    %v2916 = vtanh.pop %v2908
    %v2917 = vtanh.pop %v2909
    %v2918 = vtanh.pop %v2910
    %v2919 = vtanh.pop %v2911
    %v2920 = vtanh.pop %v2912
    %v2921 = vtanh.pop %v2913
    %v2922 = vtanh.pop %v2914
    %v2923 = vtanh.pop %v2915
    %v2924 = vsub.f32 %v2916, %v2656
    %v2925 = vsub.f32 %v2917, %v2670
    %v2926 = vsub.f32 %v2918, %v2678
    %v2927 = vsub.f32 %v2919, %v2680
    %v2928 = vsub.f32 %v2920, %v2663
    %v2929 = vsub.f32 %v2921, %v2677
    %v2930 = vsub.f32 %v2922, %v2679
    %v2931 = vsub.f32 %v2923, %v2681
    %v2932 = vmul.f32 %v2600, %v2924
    %v2933 = vmul.f32 %v2601, %v2925
    %v2934 = vmul.f32 %v2602, %v2926
    %v2935 = vmul.f32 %v2603, %v2927
    %v2936 = vmul.f32 %v2604, %v2928
    %v2937 = vmul.f32 %v2605, %v2929
    %v2938 = vmul.f32 %v2606, %v2930
    %v2939 = vmul.f32 %v2607, %v2931
    %v2948 = vcombine.low %v2932, %v2933
    %v2949 = vcombine.low %v2934, %v2935
    %v2950 = vcombine.low %v2936, %v2937
    %v2951 = vcombine.low %v2938, %v2939
    %v2953 = vunpack.c.l.s4 1966171168
    %v2954 = vunpack.c.0.s8 %v2953
    %v2955 = vlaneseq
    %v2956 = vshrl.u32 %v2955, 7
    %v2957 = vsub.s32 %v2954, %v2956
    %v2958 = vrot.slane %v2948, %v2957
    %v2960 = vunpack.c.l.s4 1966171168
    %v2961 = vunpack.c.0.s8 %v2960
    %v2962 = vlaneseq
    %v2963 = vshrl.u32 %v2962, 7
    %v2964 = vsub.s32 %v2961, %v2963
    %v2965 = vrot.slane %v2949, %v2964
    %v2967 = vunpack.c.l.s4 1966171168
    %v2968 = vunpack.c.0.s8 %v2967
    %v2969 = vlaneseq
    %v2970 = vshrl.u32 %v2969, 7
    %v2971 = vsub.s32 %v2968, %v2970
    %v2972 = vrot.slane %v2950, %v2971
    %v2974 = vunpack.c.l.s4 1966171168
    %v2975 = vunpack.c.0.s8 %v2974
    %v2976 = vlaneseq
    %v2977 = vshrl.u32 %v2976, 7
    %v2978 = vsub.s32 %v2975, %v2977
    %v2979 = vrot.slane %v2951, %v2978
    %v2980 = vcombine.low %v2958, %v2965
    %v2981 = vcombine.low %v2972, %v2979
    %v2983 = vunpack.c.l.s4 1966171168
    %v2984 = vunpack.c.0.s8 %v2983
    %v2985 = vlaneseq
    %v2986 = vshrl.u32 %v2985, 7
    %v2987 = vsub.s32 %v2984, %v2986
    %v2988 = vrot.slane %v2980, %v2987
    %v2990 = vunpack.c.l.s4 1966171168
    %v2991 = vunpack.c.0.s8 %v2990
    %v2992 = vlaneseq
    %v2993 = vshrl.u32 %v2992, 7
    %v2994 = vsub.s32 %v2991, %v2993
    %v2995 = vrot.slane %v2981, %v2994
    %v2996 = vcombine.low %v2988, %v2995
    %v2998 = vadd.f32 %v2420, %v2996
    %s2999 = scalar_lea.vmem [#allocation2], 5
    %v3000 = vld [vmem:[%s2999] ss:$8 sm:$0x7]
    %s3001 = scalar_lea.vmem [#allocation2], 29
    %v3002 = vld [vmem:[%s3001] ss:$8 sm:$0x7]
    %s3003 = scalar_lea.vmem [#allocation2], 53
    %v3004 = vld [vmem:[%s3003] ss:$8 sm:$0x7]
    %s3005 = scalar_lea.vmem [#allocation2], 77
    %v3006 = vld [vmem:[%s3005] ss:$8 sm:$0x7]
    %s3007 = scalar_lea.vmem [#allocation2], 101
    %v3008 = vld [vmem:[%s3007] ss:$8 sm:$0x7]
    %s3009 = scalar_lea.vmem [#allocation2], 125
    %v3010 = vld [vmem:[%s3009] ss:$8 sm:$0x7]
    %s3011 = scalar_lea.vmem [#allocation2], 149
    %v3012 = vld [vmem:[%s3011] ss:$8 sm:$0x7]
    %s3013 = scalar_lea.vmem [#allocation2], 173
    %v3014 = vld [vmem:[%s3013] ss:$8 sm:$0x7]
    %3015 = vmatprep.subr.mxu0 %v62
    %3016 = vmatpush1.msra.mxu0 %v61
    %3017 = vmatprep.subr.mxu0 %v64
    %3018 = vmatpush1.msra.mxu0 %v63
    %3019 = vmatprep.subr.mxu0 %v66
    %3020 = vmatpush1.msra.mxu0 %v65
    %3021 = vmatprep.subr.mxu0 %v68
    %3022 = vmatpush1.msra.mxu0 %v67
    %3023 = vmatprep.subr.mxu0 %v70
    %3024 = vmatpush1.msra.mxu0 %v69
    %3025 = vmatprep.subr.mxu0 %v72
    %3026 = vmatpush1.msra.mxu0 %v71
    %3027 = vmatprep.subr.mxu0 %v74
    %3028 = vmatpush1.msra.mxu0 %v73
    %3029 = vmatprep.subr.mxu0 %v76
    %3030 = vmatpush1.msra.mxu0 %v75
    %3031 = vmatprep.subr.mxu0 %v78
    %3032 = vmatpush1.msra.mxu0 %v77
    %3033 = vmatprep.subr.mxu0 %v80
    %3034 = vmatpush1.msra.mxu0 %v79
    %3035 = vmatprep.subr.mxu0 %v82
    %3036 = vmatpush1.msra.mxu0 %v81
    %3037 = vmatprep.subr.mxu0 %v84
    %3038 = vmatpush1.msra.mxu0 %v83
    %3039 = vmatprep.subr.mxu0 %v86
    %3040 = vmatpush1.msra.mxu0 %v85
    %3041 = vmatprep.subr.mxu0 %v88
    %3042 = vmatpush1.msra.mxu0 %v87
    %3043 = vmatprep.subr.mxu0 %v90
    %3044 = vmatpush1.msra.mxu0 %v89
    %3045 = vmatprep.subr.mxu0 %v92
    %3046 = vmatpush1.msra.mxu0 %v91
    %3047 = vmatprep.subr.mxu0 0.0
    %3048 = vmatpush1.msra.mxu0 0.0
    %3049 = vmatprep.subr.mxu0 0.0
    %3050 = vmatpush1.msra.mxu0 0.0
    %3051 = vmatprep.subr.mxu0 0.0
    %3052 = vmatpush1.msra.mxu0 0.0
    %3053 = vmatprep.subr.mxu0 0.0
    %3054 = vmatpush1.msra.mxu0 0.0
    %3055 = vmatprep.subr.mxu0 0.0
    %3056 = vmatpush1.msra.mxu0 0.0
    %3057 = vmatprep.subr.mxu0 0.0
    %3058 = vmatpush1.msra.mxu0 0.0
    %3059 = vmatprep.subr.mxu0 0.0
    %3060 = vmatpush1.msra.mxu0 0.0
    %3061 = vmatprep.subr.mxu0 0.0
    %3062 = vmatpush1.msra.mxu0 0.0
    %3063 = vmatprep.subr.mxu0 0.0
    %3064 = vmatpush1.msra.mxu0 0.0
    %3065 = vmatprep.subr.mxu0 0.0
    %3066 = vmatpush1.msra.mxu0 0.0
    %3067 = vmatprep.subr.mxu0 0.0
    %3068 = vmatpush1.msra.mxu0 0.0
    %3069 = vmatprep.subr.mxu0 0.0
    %3070 = vmatpush1.msra.mxu0 0.0
    %3071 = vmatprep.subr.mxu0 0.0
    %3072 = vmatpush1.msra.mxu0 0.0
    %3073 = vmatprep.subr.mxu0 0.0
    %3074 = vmatpush1.msra.mxu0 0.0
    %3075 = vmatprep.subr.mxu0 0.0
    %3076 = vmatpush1.msra.mxu0 0.0
    %3077 = vmatprep.subr.mxu0 0.0
    %3078 = vmatpush1.msra.mxu0 0.0
    %3079 = vmatprep.mubr.f32.mxu0 0.0
    %3080 = vmatmul.mubr.f32.gmra.mrb[0].mxu0 %v2998
    %v3081 = vpop.f32.mrb[0].mxu0
    %v3082 = vadd.f32 0.0, %v3081
    %v3083 = vpop.f32.mrb[0].mxu0
    %v3084 = vadd.f32 0.0, %v3083
    %3085 = vdwg.mxu0
    %v3088 = vcombine.low %v3082, %v3084
    %v3089 = vcombine.high %v3082, %v3084
    %v3091 = vunpack.c.l.s4 1966171168
    %v3092 = vunpack.c.0.s8 %v3091
    %v3093 = vlaneseq
    %v3094 = vshrl.u32 %v3093, 7
    %v3095 = vsub.s32 %v3092, %v3094
    %v3096 = vrot.slane %v3088, %v3095
    %v3098 = vunpack.c.l.s4 1966171168
    %v3099 = vunpack.c.0.s8 %v3098
    %v3100 = vlaneseq
    %v3101 = vshrl.u32 %v3100, 7
    %v3102 = vsub.s32 %v3099, %v3101
    %v3103 = vrot.slane %v3089, %v3102
    %v3104 = vcombine.high %v3096, %v3096
    %v3105 = vcombine.high %v3103, %v3103
    %v3107 = vunpack.c.l.s4 1966171168
    %v3108 = vunpack.c.0.s8 %v3107
    %v3109 = vlaneseq
    %v3110 = vshrl.u32 %v3109, 7
    %v3111 = vsub.s32 %v3108, %v3110
    %v3112 = vrot.slane %v3096, %v3111
    %v3114 = vunpack.c.l.s4 1966171168
    %v3115 = vunpack.c.0.s8 %v3114
    %v3116 = vlaneseq
    %v3117 = vshrl.u32 %v3116, 7
    %v3118 = vsub.s32 %v3115, %v3117
    %v3119 = vrot.slane %v3103, %v3118
    %v3121 = vunpack.c.l.s4 1966171168
    %v3122 = vunpack.c.0.s8 %v3121
    %v3123 = vlaneseq
    %v3124 = vshrl.u32 %v3123, 7
    %v3125 = vsub.s32 %v3122, %v3124
    %v3126 = vrot.slane %v3104, %v3125
    %v3128 = vunpack.c.l.s4 1966171168
    %v3129 = vunpack.c.0.s8 %v3128
    %v3130 = vlaneseq
    %v3131 = vshrl.u32 %v3130, 7
    %v3132 = vsub.s32 %v3129, %v3131
    %v3133 = vrot.slane %v3105, %v3132
    %v3134 = vcombine.high %v3112, %v3112
    %v3135 = vcombine.high %v3119, %v3119
    %v3136 = vcombine.high %v3126, %v3126
    %v3137 = vcombine.high %v3133, %v3133
    %v3146 = vadd.f32 %v3000, %v3112
    %v3147 = vadd.f32 %v3002, %v3126
    %v3148 = vadd.f32 %v3004, %v3134
    %v3149 = vadd.f32 %v3006, %v3136
    %v3150 = vadd.f32 %v3008, %v3119
    %v3151 = vadd.f32 %v3010, %v3133
    %v3152 = vadd.f32 %v3012, %v3135
    %v3153 = vadd.f32 %v3014, %v3137
    %v3154 = vmul.f32 %v3146, 0.5
    %v3155 = vmul.f32 %v3147, 0.5
    %v3156 = vmul.f32 %v3148, 0.5
    %v3157 = vmul.f32 %v3149, 0.5
    %v3158 = vmul.f32 %v3150, 0.5
    %v3159 = vmul.f32 %v3151, 0.5
    %v3160 = vmul.f32 %v3152, 0.5
    %v3161 = vmul.f32 %v3153, 0.5
    %v3162 = vtanh.pop %v3154
    %v3163 = vtanh.pop %v3155
    %v3164 = vtanh.pop %v3156
    %v3165 = vtanh.pop %v3157
    %v3166 = vtanh.pop %v3158
    %v3167 = vtanh.pop %v3159
    %v3168 = vtanh.pop %v3160
    %v3169 = vtanh.pop %v3161
    %v3170 = vadd.f32 %v3162, 1.0
    %v3171 = vadd.f32 %v3163, 1.0
    %v3172 = vadd.f32 %v3164, 1.0
    %v3173 = vadd.f32 %v3165, 1.0
    %v3174 = vadd.f32 %v3166, 1.0
    %v3175 = vadd.f32 %v3167, 1.0
    %v3176 = vadd.f32 %v3168, 1.0
    %v3177 = vadd.f32 %v3169, 1.0
    %v3178 = vmul.f32 %v3170, 0.5
    %v3179 = vmul.f32 %v3171, 0.5
    %v3180 = vmul.f32 %v3172, 0.5
    %v3181 = vmul.f32 %v3173, 0.5
    %v3182 = vmul.f32 %v3174, 0.5
    %v3183 = vmul.f32 %v3175, 0.5
    %v3184 = vmul.f32 %v3176, 0.5
    %v3185 = vmul.f32 %v3177, 0.5
    %v3194 = vrot.slane %v3178, 1
    %v3195 = vrot.slane %v3179, 1
    %v3196 = vrot.slane %v3180, 1
    %v3197 = vrot.slane %v3181, 1
    %v3198 = vrot.slane %v3182, 1
    %v3199 = vrot.slane %v3183, 1
    %v3200 = vrot.slane %v3184, 1
    %v3201 = vrot.slane %v3185, 1
    %v3211 = vcombine.high %v2998, %v2998
    %v3213 = vunpack.c.l.s4 1966171168
    %v3214 = vunpack.c.0.s8 %v3213
    %v3215 = vlaneseq
    %v3216 = vshrl.u32 %v3215, 7
    %v3217 = vsub.s32 %v3214, %v3216
    %v3218 = vrot.slane %v2998, %v3217
    %v3220 = vunpack.c.l.s4 1966171168
    %v3221 = vunpack.c.0.s8 %v3220
    %v3222 = vlaneseq
    %v3223 = vshrl.u32 %v3222, 7
    %v3224 = vsub.s32 %v3221, %v3223
    %v3225 = vrot.slane %v3211, %v3224
    %v3226 = vcombine.high %v3218, %v3218
    %v3227 = vcombine.high %v3225, %v3225
    %v3229 = vunpack.c.l.s4 1966171168
    %v3230 = vunpack.c.0.s8 %v3229
    %v3231 = vlaneseq
    %v3232 = vshrl.u32 %v3231, 7
    %v3233 = vsub.s32 %v3230, %v3232
    %v3234 = vrot.slane %v3218, %v3233
    %v3236 = vunpack.c.l.s4 1966171168
    %v3237 = vunpack.c.0.s8 %v3236
    %v3238 = vlaneseq
    %v3239 = vshrl.u32 %v3238, 7
    %v3240 = vsub.s32 %v3237, %v3239
    %v3241 = vrot.slane %v3225, %v3240
    %v3243 = vunpack.c.l.s4 1966171168
    %v3244 = vunpack.c.0.s8 %v3243
    %v3245 = vlaneseq
    %v3246 = vshrl.u32 %v3245, 7
    %v3247 = vsub.s32 %v3244, %v3246
    %v3248 = vrot.slane %v3226, %v3247
    %v3250 = vunpack.c.l.s4 1966171168
    %v3251 = vunpack.c.0.s8 %v3250
    %v3252 = vlaneseq
    %v3253 = vshrl.u32 %v3252, 7
    %v3254 = vsub.s32 %v3251, %v3253
    %v3255 = vrot.slane %v3227, %v3254
    %v3256 = vcombine.high %v3234, %v3234
    %v3257 = vcombine.high %v3241, %v3241
    %v3258 = vcombine.high %v3248, %v3248
    %v3259 = vcombine.high %v3255, %v3255
    %v3268 = vmul.f32 %v3194, %v3234
    %v3269 = vmul.f32 %v3195, %v3248
    %v3270 = vmul.f32 %v3196, %v3256
    %v3271 = vmul.f32 %v3197, %v3258
    %v3272 = vmul.f32 %v3198, %v3241
    %v3273 = vmul.f32 %v3199, %v3255
    %v3274 = vmul.f32 %v3200, %v3257
    %v3275 = vmul.f32 %v3201, %v3259
    %v3284 = vcombine.low %v3268, %v3269
    %v3285 = vcombine.low %v3270, %v3271
    %v3286 = vcombine.low %v3272, %v3273
    %v3287 = vcombine.low %v3274, %v3275
    %v3289 = vunpack.c.l.s4 1966171168
    %v3290 = vunpack.c.0.s8 %v3289
    %v3291 = vlaneseq
    %v3292 = vshrl.u32 %v3291, 7
    %v3293 = vsub.s32 %v3290, %v3292
    %v3294 = vrot.slane %v3284, %v3293
    %v3296 = vunpack.c.l.s4 1966171168
    %v3297 = vunpack.c.0.s8 %v3296
    %v3298 = vlaneseq
    %v3299 = vshrl.u32 %v3298, 7
    %v3300 = vsub.s32 %v3297, %v3299
    %v3301 = vrot.slane %v3285, %v3300
    %v3303 = vunpack.c.l.s4 1966171168
    %v3304 = vunpack.c.0.s8 %v3303
    %v3305 = vlaneseq
    %v3306 = vshrl.u32 %v3305, 7
    %v3307 = vsub.s32 %v3304, %v3306
    %v3308 = vrot.slane %v3286, %v3307
    %v3310 = vunpack.c.l.s4 1966171168
    %v3311 = vunpack.c.0.s8 %v3310
    %v3312 = vlaneseq
    %v3313 = vshrl.u32 %v3312, 7
    %v3314 = vsub.s32 %v3311, %v3313
    %v3315 = vrot.slane %v3287, %v3314
    %v3316 = vcombine.low %v3294, %v3301
    %v3317 = vcombine.low %v3308, %v3315
    %v3319 = vunpack.c.l.s4 1966171168
    %v3320 = vunpack.c.0.s8 %v3319
    %v3321 = vlaneseq
    %v3322 = vshrl.u32 %v3321, 7
    %v3323 = vsub.s32 %v3320, %v3322
    %v3324 = vrot.slane %v3316, %v3323
    %v3326 = vunpack.c.l.s4 1966171168
    %v3327 = vunpack.c.0.s8 %v3326
    %v3328 = vlaneseq
    %v3329 = vshrl.u32 %v3328, 7
    %v3330 = vsub.s32 %v3327, %v3329
    %v3331 = vrot.slane %v3317, %v3330
    %v3332 = vcombine.low %v3324, %v3331
    %3334 = vmatprep.subr.mxu0 0.0
    %3335 = vmatpush1.msra.mxu0 %v93
    %3336 = vmatprep.subr.mxu0 0.0
    %3337 = vmatpush1.msra.mxu0 %v94
    %3338 = vmatprep.subr.mxu0 0.0
    %3339 = vmatpush1.msra.mxu0 %v95
    %3340 = vmatprep.subr.mxu0 0.0
    %3341 = vmatpush1.msra.mxu0 %v96
    %3342 = vmatprep.subr.mxu0 0.0
    %3343 = vmatpush1.msra.mxu0 %v97
    %3344 = vmatprep.subr.mxu0 0.0
    %3345 = vmatpush1.msra.mxu0 %v98
    %3346 = vmatprep.subr.mxu0 0.0
    %3347 = vmatpush1.msra.mxu0 %v99
    %3348 = vmatprep.subr.mxu0 0.0
    %3349 = vmatpush1.msra.mxu0 %v100
    %3350 = vmatprep.subr.mxu0 0.0
    %3351 = vmatpush1.msra.mxu0 %v101
    %3352 = vmatprep.subr.mxu0 0.0
    %3353 = vmatpush1.msra.mxu0 %v102
    %3354 = vmatprep.subr.mxu0 0.0
    %3355 = vmatpush1.msra.mxu0 %v103
    %3356 = vmatprep.subr.mxu0 0.0
    %3357 = vmatpush1.msra.mxu0 %v104
    %3358 = vmatprep.subr.mxu0 0.0
    %3359 = vmatpush1.msra.mxu0 %v105
    %3360 = vmatprep.subr.mxu0 0.0
    %3361 = vmatpush1.msra.mxu0 %v106
    %3362 = vmatprep.subr.mxu0 0.0
    %3363 = vmatpush1.msra.mxu0 %v107
    %3364 = vmatprep.subr.mxu0 0.0
    %3365 = vmatpush1.msra.mxu0 %v108
    %3366 = vmatprep.subr.mxu0 0.0
    %3367 = vmatpush1.msra.mxu0 0.0
    %3368 = vmatprep.subr.mxu0 0.0
    %3369 = vmatpush1.msra.mxu0 0.0
    %3370 = vmatprep.subr.mxu0 0.0
    %3371 = vmatpush1.msra.mxu0 0.0
    %3372 = vmatprep.subr.mxu0 0.0
    %3373 = vmatpush1.msra.mxu0 0.0
    %3374 = vmatprep.subr.mxu0 0.0
    %3375 = vmatpush1.msra.mxu0 0.0
    %3376 = vmatprep.subr.mxu0 0.0
    %3377 = vmatpush1.msra.mxu0 0.0
    %3378 = vmatprep.subr.mxu0 0.0
    %3379 = vmatpush1.msra.mxu0 0.0
    %3380 = vmatprep.subr.mxu0 0.0
    %3381 = vmatpush1.msra.mxu0 0.0
    %3382 = vmatprep.subr.mxu0 0.0
    %3383 = vmatpush1.msra.mxu0 0.0
    %3384 = vmatprep.subr.mxu0 0.0
    %3385 = vmatpush1.msra.mxu0 0.0
    %3386 = vmatprep.subr.mxu0 0.0
    %3387 = vmatpush1.msra.mxu0 0.0
    %3388 = vmatprep.subr.mxu0 0.0
    %3389 = vmatpush1.msra.mxu0 0.0
    %3390 = vmatprep.subr.mxu0 0.0
    %3391 = vmatpush1.msra.mxu0 0.0
    %3392 = vmatprep.subr.mxu0 0.0
    %3393 = vmatpush1.msra.mxu0 0.0
    %3394 = vmatprep.subr.mxu0 0.0
    %3395 = vmatpush1.msra.mxu0 0.0
    %3396 = vmatprep.subr.mxu0 0.0
    %3397 = vmatpush1.msra.mxu0 0.0
    %3398 = vmatprep.mubr.f32.mxu0 0.0
    %3399 = vmatmul.mubr.f32.gmra.mrb[0].mxu0 %v3332
    %v3400 = vpop.f32.mrb[0].mxu0
    %v3401 = vadd.f32 0.0, %v3400
    %v3402 = vpop.f32.mrb[0].mxu0
    %3403 = vdwg.mxu0
    %v3412 = vrot.slane %v3000, 2
    %v3413 = vrot.slane %v3002, 2
    %v3414 = vrot.slane %v3004, 2
    %v3415 = vrot.slane %v3006, 2
    %v3416 = vrot.slane %v3008, 2
    %v3417 = vrot.slane %v3010, 2
    %v3418 = vrot.slane %v3012, 2
    %v3419 = vrot.slane %v3014, 2
    %v3429 = vcombine.high %v3401, %v3401
    %v3431 = vunpack.c.l.s4 1966171168
    %v3432 = vunpack.c.0.s8 %v3431
    %v3433 = vlaneseq
    %v3434 = vshrl.u32 %v3433, 7
    %v3435 = vsub.s32 %v3432, %v3434
    %v3436 = vrot.slane %v3401, %v3435
    %v3438 = vunpack.c.l.s4 1966171168
    %v3439 = vunpack.c.0.s8 %v3438
    %v3440 = vlaneseq
    %v3441 = vshrl.u32 %v3440, 7
    %v3442 = vsub.s32 %v3439, %v3441
    %v3443 = vrot.slane %v3429, %v3442
    %v3444 = vcombine.high %v3436, %v3436
    %v3445 = vcombine.high %v3443, %v3443
    %v3447 = vunpack.c.l.s4 1966171168
    %v3448 = vunpack.c.0.s8 %v3447
    %v3449 = vlaneseq
    %v3450 = vshrl.u32 %v3449, 7
    %v3451 = vsub.s32 %v3448, %v3450
    %v3452 = vrot.slane %v3436, %v3451
    %v3454 = vunpack.c.l.s4 1966171168
    %v3455 = vunpack.c.0.s8 %v3454
    %v3456 = vlaneseq
    %v3457 = vshrl.u32 %v3456, 7
    %v3458 = vsub.s32 %v3455, %v3457
    %v3459 = vrot.slane %v3443, %v3458
    %v3461 = vunpack.c.l.s4 1966171168
    %v3462 = vunpack.c.0.s8 %v3461
    %v3463 = vlaneseq
    %v3464 = vshrl.u32 %v3463, 7
    %v3465 = vsub.s32 %v3462, %v3464
    %v3466 = vrot.slane %v3444, %v3465
    %v3468 = vunpack.c.l.s4 1966171168
    %v3469 = vunpack.c.0.s8 %v3468
    %v3470 = vlaneseq
    %v3471 = vshrl.u32 %v3470, 7
    %v3472 = vsub.s32 %v3469, %v3471
    %v3473 = vrot.slane %v3445, %v3472
    %v3474 = vcombine.high %v3452, %v3452
    %v3475 = vcombine.high %v3459, %v3459
    %v3476 = vcombine.high %v3466, %v3466
    %v3477 = vcombine.high %v3473, %v3473
    %v3486 = vadd.f32 %v3412, %v3452
    %v3487 = vadd.f32 %v3413, %v3466
    %v3488 = vadd.f32 %v3414, %v3474
    %v3489 = vadd.f32 %v3415, %v3476
    %v3490 = vadd.f32 %v3416, %v3459
    %v3491 = vadd.f32 %v3417, %v3473
    %v3492 = vadd.f32 %v3418, %v3475
    %v3493 = vadd.f32 %v3419, %v3477
    %v3494 = vtanh.pop %v3486
    %v3495 = vtanh.pop %v3487
    %v3496 = vtanh.pop %v3488
    %v3497 = vtanh.pop %v3489
    %v3498 = vtanh.pop %v3490
    %v3499 = vtanh.pop %v3491
    %v3500 = vtanh.pop %v3492
    %v3501 = vtanh.pop %v3493
    %v3502 = vsub.f32 %v3494, %v3234
    %v3503 = vsub.f32 %v3495, %v3248
    %v3504 = vsub.f32 %v3496, %v3256
    %v3505 = vsub.f32 %v3497, %v3258
    %v3506 = vsub.f32 %v3498, %v3241
    %v3507 = vsub.f32 %v3499, %v3255
    %v3508 = vsub.f32 %v3500, %v3257
    %v3509 = vsub.f32 %v3501, %v3259
    %v3510 = vmul.f32 %v3178, %v3502
    %v3511 = vmul.f32 %v3179, %v3503
    %v3512 = vmul.f32 %v3180, %v3504
    %v3513 = vmul.f32 %v3181, %v3505
    %v3514 = vmul.f32 %v3182, %v3506
    %v3515 = vmul.f32 %v3183, %v3507
    %v3516 = vmul.f32 %v3184, %v3508
    %v3517 = vmul.f32 %v3185, %v3509
    %v3526 = vcombine.low %v3510, %v3511
    %v3527 = vcombine.low %v3512, %v3513
    %v3528 = vcombine.low %v3514, %v3515
    %v3529 = vcombine.low %v3516, %v3517
    %v3531 = vunpack.c.l.s4 1966171168
    %v3532 = vunpack.c.0.s8 %v3531
    %v3533 = vlaneseq
    %v3534 = vshrl.u32 %v3533, 7
    %v3535 = vsub.s32 %v3532, %v3534
    %v3536 = vrot.slane %v3526, %v3535
    %v3538 = vunpack.c.l.s4 1966171168
    %v3539 = vunpack.c.0.s8 %v3538
    %v3540 = vlaneseq
    %v3541 = vshrl.u32 %v3540, 7
    %v3542 = vsub.s32 %v3539, %v3541
    %v3543 = vrot.slane %v3527, %v3542
    %v3545 = vunpack.c.l.s4 1966171168
    %v3546 = vunpack.c.0.s8 %v3545
    %v3547 = vlaneseq
    %v3548 = vshrl.u32 %v3547, 7
    %v3549 = vsub.s32 %v3546, %v3548
    %v3550 = vrot.slane %v3528, %v3549
    %v3552 = vunpack.c.l.s4 1966171168
    %v3553 = vunpack.c.0.s8 %v3552
    %v3554 = vlaneseq
    %v3555 = vshrl.u32 %v3554, 7
    %v3556 = vsub.s32 %v3553, %v3555
    %v3557 = vrot.slane %v3529, %v3556
    %v3558 = vcombine.low %v3536, %v3543
    %v3559 = vcombine.low %v3550, %v3557
    %v3561 = vunpack.c.l.s4 1966171168
    %v3562 = vunpack.c.0.s8 %v3561
    %v3563 = vlaneseq
    %v3564 = vshrl.u32 %v3563, 7
    %v3565 = vsub.s32 %v3562, %v3564
    %v3566 = vrot.slane %v3558, %v3565
    %v3568 = vunpack.c.l.s4 1966171168
    %v3569 = vunpack.c.0.s8 %v3568
    %v3570 = vlaneseq
    %v3571 = vshrl.u32 %v3570, 7
    %v3572 = vsub.s32 %v3569, %v3571
    %v3573 = vrot.slane %v3559, %v3572
    %v3574 = vcombine.low %v3566, %v3573
    %v3576 = vadd.f32 %v2998, %v3574
    %s3577 = scalar_lea.vmem [#allocation2], 6
    %v3578 = vld [vmem:[%s3577] ss:$8 sm:$0x7]
    %s3579 = scalar_lea.vmem [#allocation2], 30
    %v3580 = vld [vmem:[%s3579] ss:$8 sm:$0x7]
    %s3581 = scalar_lea.vmem [#allocation2], 54
    %v3582 = vld [vmem:[%s3581] ss:$8 sm:$0x7]
    %s3583 = scalar_lea.vmem [#allocation2], 78
    %v3584 = vld [vmem:[%s3583] ss:$8 sm:$0x7]
    %s3585 = scalar_lea.vmem [#allocation2], 102
    %v3586 = vld [vmem:[%s3585] ss:$8 sm:$0x7]
    %s3587 = scalar_lea.vmem [#allocation2], 126
    %v3588 = vld [vmem:[%s3587] ss:$8 sm:$0x7]
    %s3589 = scalar_lea.vmem [#allocation2], 150
    %v3590 = vld [vmem:[%s3589] ss:$8 sm:$0x7]
    %s3591 = scalar_lea.vmem [#allocation2], 174
    %v3592 = vld [vmem:[%s3591] ss:$8 sm:$0x7]
    %3593 = vmatprep.subr.mxu0 %v62
    %3594 = vmatpush1.msra.mxu0 %v61
    %3595 = vmatprep.subr.mxu0 %v64
    %3596 = vmatpush1.msra.mxu0 %v63
    %3597 = vmatprep.subr.mxu0 %v66
    %3598 = vmatpush1.msra.mxu0 %v65
    %3599 = vmatprep.subr.mxu0 %v68
    %3600 = vmatpush1.msra.mxu0 %v67
    %3601 = vmatprep.subr.mxu0 %v70
    %3602 = vmatpush1.msra.mxu0 %v69
    %3603 = vmatprep.subr.mxu0 %v72
    %3604 = vmatpush1.msra.mxu0 %v71
    %3605 = vmatprep.subr.mxu0 %v74
    %3606 = vmatpush1.msra.mxu0 %v73
    %3607 = vmatprep.subr.mxu0 %v76
    %3608 = vmatpush1.msra.mxu0 %v75
    %3609 = vmatprep.subr.mxu0 %v78
    %3610 = vmatpush1.msra.mxu0 %v77
    %3611 = vmatprep.subr.mxu0 %v80
    %3612 = vmatpush1.msra.mxu0 %v79
    %3613 = vmatprep.subr.mxu0 %v82
    %3614 = vmatpush1.msra.mxu0 %v81
    %3615 = vmatprep.subr.mxu0 %v84
    %3616 = vmatpush1.msra.mxu0 %v83
    %3617 = vmatprep.subr.mxu0 %v86
    %3618 = vmatpush1.msra.mxu0 %v85
    %3619 = vmatprep.subr.mxu0 %v88
    %3620 = vmatpush1.msra.mxu0 %v87
    %3621 = vmatprep.subr.mxu0 %v90
    %3622 = vmatpush1.msra.mxu0 %v89
    %3623 = vmatprep.subr.mxu0 %v92
    %3624 = vmatpush1.msra.mxu0 %v91
    %3625 = vmatprep.subr.mxu0 0.0
    %3626 = vmatpush1.msra.mxu0 0.0
    %3627 = vmatprep.subr.mxu0 0.0
    %3628 = vmatpush1.msra.mxu0 0.0
    %3629 = vmatprep.subr.mxu0 0.0
    %3630 = vmatpush1.msra.mxu0 0.0
    %3631 = vmatprep.subr.mxu0 0.0
    %3632 = vmatpush1.msra.mxu0 0.0
    %3633 = vmatprep.subr.mxu0 0.0
    %3634 = vmatpush1.msra.mxu0 0.0
    %3635 = vmatprep.subr.mxu0 0.0
    %3636 = vmatpush1.msra.mxu0 0.0
    %3637 = vmatprep.subr.mxu0 0.0
    %3638 = vmatpush1.msra.mxu0 0.0
    %3639 = vmatprep.subr.mxu0 0.0
    %3640 = vmatpush1.msra.mxu0 0.0
    %3641 = vmatprep.subr.mxu0 0.0
    %3642 = vmatpush1.msra.mxu0 0.0
    %3643 = vmatprep.subr.mxu0 0.0
    %3644 = vmatpush1.msra.mxu0 0.0
    %3645 = vmatprep.subr.mxu0 0.0
    %3646 = vmatpush1.msra.mxu0 0.0
    %3647 = vmatprep.subr.mxu0 0.0
    %3648 = vmatpush1.msra.mxu0 0.0
    %3649 = vmatprep.subr.mxu0 0.0
    %3650 = vmatpush1.msra.mxu0 0.0
    %3651 = vmatprep.subr.mxu0 0.0
    %3652 = vmatpush1.msra.mxu0 0.0
    %3653 = vmatprep.subr.mxu0 0.0
    %3654 = vmatpush1.msra.mxu0 0.0
    %3655 = vmatprep.subr.mxu0 0.0
    %3656 = vmatpush1.msra.mxu0 0.0
    %3657 = vmatprep.mubr.f32.mxu0 0.0
    %3658 = vmatmul.mubr.f32.gmra.mrb[0].mxu0 %v3576
    %v3659 = vpop.f32.mrb[0].mxu0
    %v3660 = vadd.f32 0.0, %v3659
    %v3661 = vpop.f32.mrb[0].mxu0
    %v3662 = vadd.f32 0.0, %v3661
    %3663 = vdwg.mxu0
    %v3666 = vcombine.low %v3660, %v3662
    %v3667 = vcombine.high %v3660, %v3662
    %v3669 = vunpack.c.l.s4 1966171168
    %v3670 = vunpack.c.0.s8 %v3669
    %v3671 = vlaneseq
    %v3672 = vshrl.u32 %v3671, 7
    %v3673 = vsub.s32 %v3670, %v3672
    %v3674 = vrot.slane %v3666, %v3673
    %v3676 = vunpack.c.l.s4 1966171168
    %v3677 = vunpack.c.0.s8 %v3676
    %v3678 = vlaneseq
    %v3679 = vshrl.u32 %v3678, 7
    %v3680 = vsub.s32 %v3677, %v3679
    %v3681 = vrot.slane %v3667, %v3680
    %v3682 = vcombine.high %v3674, %v3674
    %v3683 = vcombine.high %v3681, %v3681
    %v3685 = vunpack.c.l.s4 1966171168
    %v3686 = vunpack.c.0.s8 %v3685
    %v3687 = vlaneseq
    %v3688 = vshrl.u32 %v3687, 7
    %v3689 = vsub.s32 %v3686, %v3688
    %v3690 = vrot.slane %v3674, %v3689
    %v3692 = vunpack.c.l.s4 1966171168
    %v3693 = vunpack.c.0.s8 %v3692
    %v3694 = vlaneseq
    %v3695 = vshrl.u32 %v3694, 7
    %v3696 = vsub.s32 %v3693, %v3695
    %v3697 = vrot.slane %v3681, %v3696
    %v3699 = vunpack.c.l.s4 1966171168
    %v3700 = vunpack.c.0.s8 %v3699
    %v3701 = vlaneseq
    %v3702 = vshrl.u32 %v3701, 7
    %v3703 = vsub.s32 %v3700, %v3702
    %v3704 = vrot.slane %v3682, %v3703
    %v3706 = vunpack.c.l.s4 1966171168
    %v3707 = vunpack.c.0.s8 %v3706
    %v3708 = vlaneseq
    %v3709 = vshrl.u32 %v3708, 7
    %v3710 = vsub.s32 %v3707, %v3709
    %v3711 = vrot.slane %v3683, %v3710
    %v3712 = vcombine.high %v3690, %v3690
    %v3713 = vcombine.high %v3697, %v3697
    %v3714 = vcombine.high %v3704, %v3704
    %v3715 = vcombine.high %v3711, %v3711
    %v3724 = vadd.f32 %v3578, %v3690
    %v3725 = vadd.f32 %v3580, %v3704
    %v3726 = vadd.f32 %v3582, %v3712
    %v3727 = vadd.f32 %v3584, %v3714
    %v3728 = vadd.f32 %v3586, %v3697
    %v3729 = vadd.f32 %v3588, %v3711
    %v3730 = vadd.f32 %v3590, %v3713
    %v3731 = vadd.f32 %v3592, %v3715
    %v3732 = vmul.f32 %v3724, 0.5
    %v3733 = vmul.f32 %v3725, 0.5
    %v3734 = vmul.f32 %v3726, 0.5
    %v3735 = vmul.f32 %v3727, 0.5
    %v3736 = vmul.f32 %v3728, 0.5
    %v3737 = vmul.f32 %v3729, 0.5
    %v3738 = vmul.f32 %v3730, 0.5
    %v3739 = vmul.f32 %v3731, 0.5
    %v3740 = vtanh.pop %v3732
    %v3741 = vtanh.pop %v3733
    %v3742 = vtanh.pop %v3734
    %v3743 = vtanh.pop %v3735
    %v3744 = vtanh.pop %v3736
    %v3745 = vtanh.pop %v3737
    %v3746 = vtanh.pop %v3738
    %v3747 = vtanh.pop %v3739
    %v3748 = vadd.f32 %v3740, 1.0
    %v3749 = vadd.f32 %v3741, 1.0
    %v3750 = vadd.f32 %v3742, 1.0
    %v3751 = vadd.f32 %v3743, 1.0
    %v3752 = vadd.f32 %v3744, 1.0
    %v3753 = vadd.f32 %v3745, 1.0
    %v3754 = vadd.f32 %v3746, 1.0
    %v3755 = vadd.f32 %v3747, 1.0
    %v3756 = vmul.f32 %v3748, 0.5
    %v3757 = vmul.f32 %v3749, 0.5
    %v3758 = vmul.f32 %v3750, 0.5
    %v3759 = vmul.f32 %v3751, 0.5
    %v3760 = vmul.f32 %v3752, 0.5
    %v3761 = vmul.f32 %v3753, 0.5
    %v3762 = vmul.f32 %v3754, 0.5
    %v3763 = vmul.f32 %v3755, 0.5
    %v3772 = vrot.slane %v3756, 1
    %v3773 = vrot.slane %v3757, 1
    %v3774 = vrot.slane %v3758, 1
    %v3775 = vrot.slane %v3759, 1
    %v3776 = vrot.slane %v3760, 1
    %v3777 = vrot.slane %v3761, 1
    %v3778 = vrot.slane %v3762, 1
    %v3779 = vrot.slane %v3763, 1
    %v3789 = vcombine.high %v3576, %v3576
    %v3791 = vunpack.c.l.s4 1966171168
    %v3792 = vunpack.c.0.s8 %v3791
    %v3793 = vlaneseq
    %v3794 = vshrl.u32 %v3793, 7
    %v3795 = vsub.s32 %v3792, %v3794
    %v3796 = vrot.slane %v3576, %v3795
    %v3798 = vunpack.c.l.s4 1966171168
    %v3799 = vunpack.c.0.s8 %v3798
    %v3800 = vlaneseq
    %v3801 = vshrl.u32 %v3800, 7
    %v3802 = vsub.s32 %v3799, %v3801
    %v3803 = vrot.slane %v3789, %v3802
    %v3804 = vcombine.high %v3796, %v3796
    %v3805 = vcombine.high %v3803, %v3803
    %v3807 = vunpack.c.l.s4 1966171168
    %v3808 = vunpack.c.0.s8 %v3807
    %v3809 = vlaneseq
    %v3810 = vshrl.u32 %v3809, 7
    %v3811 = vsub.s32 %v3808, %v3810
    %v3812 = vrot.slane %v3796, %v3811
    %v3814 = vunpack.c.l.s4 1966171168
    %v3815 = vunpack.c.0.s8 %v3814
    %v3816 = vlaneseq
    %v3817 = vshrl.u32 %v3816, 7
    %v3818 = vsub.s32 %v3815, %v3817
    %v3819 = vrot.slane %v3803, %v3818
    %v3821 = vunpack.c.l.s4 1966171168
    %v3822 = vunpack.c.0.s8 %v3821
    %v3823 = vlaneseq
    %v3824 = vshrl.u32 %v3823, 7
    %v3825 = vsub.s32 %v3822, %v3824
    %v3826 = vrot.slane %v3804, %v3825
    %v3828 = vunpack.c.l.s4 1966171168
    %v3829 = vunpack.c.0.s8 %v3828
    %v3830 = vlaneseq
    %v3831 = vshrl.u32 %v3830, 7
    %v3832 = vsub.s32 %v3829, %v3831
    %v3833 = vrot.slane %v3805, %v3832
    %v3834 = vcombine.high %v3812, %v3812
    %v3835 = vcombine.high %v3819, %v3819
    %v3836 = vcombine.high %v3826, %v3826
    %v3837 = vcombine.high %v3833, %v3833
    %v3846 = vmul.f32 %v3772, %v3812
    %v3847 = vmul.f32 %v3773, %v3826
    %v3848 = vmul.f32 %v3774, %v3834
    %v3849 = vmul.f32 %v3775, %v3836
    %v3850 = vmul.f32 %v3776, %v3819
    %v3851 = vmul.f32 %v3777, %v3833
    %v3852 = vmul.f32 %v3778, %v3835
    %v3853 = vmul.f32 %v3779, %v3837
    %v3862 = vcombine.low %v3846, %v3847
    %v3863 = vcombine.low %v3848, %v3849
    %v3864 = vcombine.low %v3850, %v3851
    %v3865 = vcombine.low %v3852, %v3853
    %v3867 = vunpack.c.l.s4 1966171168
    %v3868 = vunpack.c.0.s8 %v3867
    %v3869 = vlaneseq
    %v3870 = vshrl.u32 %v3869, 7
    %v3871 = vsub.s32 %v3868, %v3870
    %v3872 = vrot.slane %v3862, %v3871
    %v3874 = vunpack.c.l.s4 1966171168
    %v3875 = vunpack.c.0.s8 %v3874
    %v3876 = vlaneseq
    %v3877 = vshrl.u32 %v3876, 7
    %v3878 = vsub.s32 %v3875, %v3877
    %v3879 = vrot.slane %v3863, %v3878
    %v3881 = vunpack.c.l.s4 1966171168
    %v3882 = vunpack.c.0.s8 %v3881
    %v3883 = vlaneseq
    %v3884 = vshrl.u32 %v3883, 7
    %v3885 = vsub.s32 %v3882, %v3884
    %v3886 = vrot.slane %v3864, %v3885
    %v3888 = vunpack.c.l.s4 1966171168
    %v3889 = vunpack.c.0.s8 %v3888
    %v3890 = vlaneseq
    %v3891 = vshrl.u32 %v3890, 7
    %v3892 = vsub.s32 %v3889, %v3891
    %v3893 = vrot.slane %v3865, %v3892
    %v3894 = vcombine.low %v3872, %v3879
    %v3895 = vcombine.low %v3886, %v3893
    %v3897 = vunpack.c.l.s4 1966171168
    %v3898 = vunpack.c.0.s8 %v3897
    %v3899 = vlaneseq
    %v3900 = vshrl.u32 %v3899, 7
    %v3901 = vsub.s32 %v3898, %v3900
    %v3902 = vrot.slane %v3894, %v3901
    %v3904 = vunpack.c.l.s4 1966171168
    %v3905 = vunpack.c.0.s8 %v3904
    %v3906 = vlaneseq
    %v3907 = vshrl.u32 %v3906, 7
    %v3908 = vsub.s32 %v3905, %v3907
    %v3909 = vrot.slane %v3895, %v3908
    %v3910 = vcombine.low %v3902, %v3909
    %3912 = vmatprep.subr.mxu0 0.0
    %3913 = vmatpush1.msra.mxu0 %v93
    %3914 = vmatprep.subr.mxu0 0.0
    %3915 = vmatpush1.msra.mxu0 %v94
    %3916 = vmatprep.subr.mxu0 0.0
    %3917 = vmatpush1.msra.mxu0 %v95
    %3918 = vmatprep.subr.mxu0 0.0
    %3919 = vmatpush1.msra.mxu0 %v96
    %3920 = vmatprep.subr.mxu0 0.0
    %3921 = vmatpush1.msra.mxu0 %v97
    %3922 = vmatprep.subr.mxu0 0.0
    %3923 = vmatpush1.msra.mxu0 %v98
    %3924 = vmatprep.subr.mxu0 0.0
    %3925 = vmatpush1.msra.mxu0 %v99
    %3926 = vmatprep.subr.mxu0 0.0
    %3927 = vmatpush1.msra.mxu0 %v100
    %3928 = vmatprep.subr.mxu0 0.0
    %3929 = vmatpush1.msra.mxu0 %v101
    %3930 = vmatprep.subr.mxu0 0.0
    %3931 = vmatpush1.msra.mxu0 %v102
    %3932 = vmatprep.subr.mxu0 0.0
    %3933 = vmatpush1.msra.mxu0 %v103
    %3934 = vmatprep.subr.mxu0 0.0
    %3935 = vmatpush1.msra.mxu0 %v104
    %3936 = vmatprep.subr.mxu0 0.0
    %3937 = vmatpush1.msra.mxu0 %v105
    %3938 = vmatprep.subr.mxu0 0.0
    %3939 = vmatpush1.msra.mxu0 %v106
    %3940 = vmatprep.subr.mxu0 0.0
    %3941 = vmatpush1.msra.mxu0 %v107
    %3942 = vmatprep.subr.mxu0 0.0
    %3943 = vmatpush1.msra.mxu0 %v108
    %3944 = vmatprep.subr.mxu0 0.0
    %3945 = vmatpush1.msra.mxu0 0.0
    %3946 = vmatprep.subr.mxu0 0.0
    %3947 = vmatpush1.msra.mxu0 0.0
    %3948 = vmatprep.subr.mxu0 0.0
    %3949 = vmatpush1.msra.mxu0 0.0
    %3950 = vmatprep.subr.mxu0 0.0
    %3951 = vmatpush1.msra.mxu0 0.0
    %3952 = vmatprep.subr.mxu0 0.0
    %3953 = vmatpush1.msra.mxu0 0.0
    %3954 = vmatprep.subr.mxu0 0.0
    %3955 = vmatpush1.msra.mxu0 0.0
    %3956 = vmatprep.subr.mxu0 0.0
    %3957 = vmatpush1.msra.mxu0 0.0
    %3958 = vmatprep.subr.mxu0 0.0
    %3959 = vmatpush1.msra.mxu0 0.0
    %3960 = vmatprep.subr.mxu0 0.0
    %3961 = vmatpush1.msra.mxu0 0.0
    %3962 = vmatprep.subr.mxu0 0.0
    %3963 = vmatpush1.msra.mxu0 0.0
    %3964 = vmatprep.subr.mxu0 0.0
    %3965 = vmatpush1.msra.mxu0 0.0
    %3966 = vmatprep.subr.mxu0 0.0
    %3967 = vmatpush1.msra.mxu0 0.0
    %3968 = vmatprep.subr.mxu0 0.0
    %3969 = vmatpush1.msra.mxu0 0.0
    %3970 = vmatprep.subr.mxu0 0.0
    %3971 = vmatpush1.msra.mxu0 0.0
    %3972 = vmatprep.subr.mxu0 0.0
    %3973 = vmatpush1.msra.mxu0 0.0
    %3974 = vmatprep.subr.mxu0 0.0
    %3975 = vmatpush1.msra.mxu0 0.0
    %3976 = vmatprep.mubr.f32.mxu0 0.0
    %3977 = vmatmul.mubr.f32.gmra.mrb[0].mxu0 %v3910
    %v3978 = vpop.f32.mrb[0].mxu0
    %v3979 = vadd.f32 0.0, %v3978
    %v3980 = vpop.f32.mrb[0].mxu0
    %3981 = vdwg.mxu0
    %v3990 = vrot.slane %v3578, 2
    %v3991 = vrot.slane %v3580, 2
    %v3992 = vrot.slane %v3582, 2
    %v3993 = vrot.slane %v3584, 2
    %v3994 = vrot.slane %v3586, 2
    %v3995 = vrot.slane %v3588, 2
    %v3996 = vrot.slane %v3590, 2
    %v3997 = vrot.slane %v3592, 2
    %v4007 = vcombine.high %v3979, %v3979
    %v4009 = vunpack.c.l.s4 1966171168
    %v4010 = vunpack.c.0.s8 %v4009
    %v4011 = vlaneseq
    %v4012 = vshrl.u32 %v4011, 7
    %v4013 = vsub.s32 %v4010, %v4012
    %v4014 = vrot.slane %v3979, %v4013
    %v4016 = vunpack.c.l.s4 1966171168
    %v4017 = vunpack.c.0.s8 %v4016
    %v4018 = vlaneseq
    %v4019 = vshrl.u32 %v4018, 7
    %v4020 = vsub.s32 %v4017, %v4019
    %v4021 = vrot.slane %v4007, %v4020
    %v4022 = vcombine.high %v4014, %v4014
    %v4023 = vcombine.high %v4021, %v4021
    %v4025 = vunpack.c.l.s4 1966171168
    %v4026 = vunpack.c.0.s8 %v4025
    %v4027 = vlaneseq
    %v4028 = vshrl.u32 %v4027, 7
    %v4029 = vsub.s32 %v4026, %v4028
    %v4030 = vrot.slane %v4014, %v4029
    %v4032 = vunpack.c.l.s4 1966171168
    %v4033 = vunpack.c.0.s8 %v4032
    %v4034 = vlaneseq
    %v4035 = vshrl.u32 %v4034, 7
    %v4036 = vsub.s32 %v4033, %v4035
    %v4037 = vrot.slane %v4021, %v4036
    %v4039 = vunpack.c.l.s4 1966171168
    %v4040 = vunpack.c.0.s8 %v4039
    %v4041 = vlaneseq
    %v4042 = vshrl.u32 %v4041, 7
    %v4043 = vsub.s32 %v4040, %v4042
    %v4044 = vrot.slane %v4022, %v4043
    %v4046 = vunpack.c.l.s4 1966171168
    %v4047 = vunpack.c.0.s8 %v4046
    %v4048 = vlaneseq
    %v4049 = vshrl.u32 %v4048, 7
    %v4050 = vsub.s32 %v4047, %v4049
    %v4051 = vrot.slane %v4023, %v4050
    %v4052 = vcombine.high %v4030, %v4030
    %v4053 = vcombine.high %v4037, %v4037
    %v4054 = vcombine.high %v4044, %v4044
    %v4055 = vcombine.high %v4051, %v4051
    %v4064 = vadd.f32 %v3990, %v4030
    %v4065 = vadd.f32 %v3991, %v4044
    %v4066 = vadd.f32 %v3992, %v4052
    %v4067 = vadd.f32 %v3993, %v4054
    %v4068 = vadd.f32 %v3994, %v4037
    %v4069 = vadd.f32 %v3995, %v4051
    %v4070 = vadd.f32 %v3996, %v4053
    %v4071 = vadd.f32 %v3997, %v4055
    %v4072 = vtanh.pop %v4064
    %v4073 = vtanh.pop %v4065
    %v4074 = vtanh.pop %v4066
    %v4075 = vtanh.pop %v4067
    %v4076 = vtanh.pop %v4068
    %v4077 = vtanh.pop %v4069
    %v4078 = vtanh.pop %v4070
    %v4079 = vtanh.pop %v4071
    %v4080 = vsub.f32 %v4072, %v3812
    %v4081 = vsub.f32 %v4073, %v3826
    %v4082 = vsub.f32 %v4074, %v3834
    %v4083 = vsub.f32 %v4075, %v3836
    %v4084 = vsub.f32 %v4076, %v3819
    %v4085 = vsub.f32 %v4077, %v3833
    %v4086 = vsub.f32 %v4078, %v3835
    %v4087 = vsub.f32 %v4079, %v3837
    %v4088 = vmul.f32 %v3756, %v4080
    %v4089 = vmul.f32 %v3757, %v4081
    %v4090 = vmul.f32 %v3758, %v4082
    %v4091 = vmul.f32 %v3759, %v4083
    %v4092 = vmul.f32 %v3760, %v4084
    %v4093 = vmul.f32 %v3761, %v4085
    %v4094 = vmul.f32 %v3762, %v4086
    %v4095 = vmul.f32 %v3763, %v4087
    %v4104 = vcombine.low %v4088, %v4089
    %v4105 = vcombine.low %v4090, %v4091
    %v4106 = vcombine.low %v4092, %v4093
    %v4107 = vcombine.low %v4094, %v4095
    %v4109 = vunpack.c.l.s4 1966171168
    %v4110 = vunpack.c.0.s8 %v4109
    %v4111 = vlaneseq
    %v4112 = vshrl.u32 %v4111, 7
    %v4113 = vsub.s32 %v4110, %v4112
    %v4114 = vrot.slane %v4104, %v4113
    %v4116 = vunpack.c.l.s4 1966171168
    %v4117 = vunpack.c.0.s8 %v4116
    %v4118 = vlaneseq
    %v4119 = vshrl.u32 %v4118, 7
    %v4120 = vsub.s32 %v4117, %v4119
    %v4121 = vrot.slane %v4105, %v4120
    %v4123 = vunpack.c.l.s4 1966171168
    %v4124 = vunpack.c.0.s8 %v4123
    %v4125 = vlaneseq
    %v4126 = vshrl.u32 %v4125, 7
    %v4127 = vsub.s32 %v4124, %v4126
    %v4128 = vrot.slane %v4106, %v4127
    %v4130 = vunpack.c.l.s4 1966171168
    %v4131 = vunpack.c.0.s8 %v4130
    %v4132 = vlaneseq
    %v4133 = vshrl.u32 %v4132, 7
    %v4134 = vsub.s32 %v4131, %v4133
    %v4135 = vrot.slane %v4107, %v4134
    %v4136 = vcombine.low %v4114, %v4121
    %v4137 = vcombine.low %v4128, %v4135
    %v4139 = vunpack.c.l.s4 1966171168
    %v4140 = vunpack.c.0.s8 %v4139
    %v4141 = vlaneseq
    %v4142 = vshrl.u32 %v4141, 7
    %v4143 = vsub.s32 %v4140, %v4142
    %v4144 = vrot.slane %v4136, %v4143
    %v4146 = vunpack.c.l.s4 1966171168
    %v4147 = vunpack.c.0.s8 %v4146
    %v4148 = vlaneseq
    %v4149 = vshrl.u32 %v4148, 7
    %v4150 = vsub.s32 %v4147, %v4149
    %v4151 = vrot.slane %v4137, %v4150
    %v4152 = vcombine.low %v4144, %v4151
    %v4154 = vadd.f32 %v3576, %v4152
    %s4155 = scalar_lea.vmem [#allocation2], 7
    %v4156 = vld [vmem:[%s4155] ss:$8 sm:$0x7]
    %s4157 = scalar_lea.vmem [#allocation2], 31
    %v4158 = vld [vmem:[%s4157] ss:$8 sm:$0x7]
    %s4159 = scalar_lea.vmem [#allocation2], 55
    %v4160 = vld [vmem:[%s4159] ss:$8 sm:$0x7]
    %s4161 = scalar_lea.vmem [#allocation2], 79
    %v4162 = vld [vmem:[%s4161] ss:$8 sm:$0x7]
    %s4163 = scalar_lea.vmem [#allocation2], 103
    %v4164 = vld [vmem:[%s4163] ss:$8 sm:$0x7]
    %s4165 = scalar_lea.vmem [#allocation2], 127
    %v4166 = vld [vmem:[%s4165] ss:$8 sm:$0x7]
    %s4167 = scalar_lea.vmem [#allocation2], 151
    %v4168 = vld [vmem:[%s4167] ss:$8 sm:$0x7]
    %s4169 = scalar_lea.vmem [#allocation2], 175
    %v4170 = vld [vmem:[%s4169] ss:$8 sm:$0x7]
    %4171 = vmatprep.subr.mxu0 %v62
    %4172 = vmatpush1.msra.mxu0 %v61
    %4173 = vmatprep.subr.mxu0 %v64
    %4174 = vmatpush1.msra.mxu0 %v63
    %4175 = vmatprep.subr.mxu0 %v66
    %4176 = vmatpush1.msra.mxu0 %v65
    %4177 = vmatprep.subr.mxu0 %v68
    %4178 = vmatpush1.msra.mxu0 %v67
    %4179 = vmatprep.subr.mxu0 %v70
    %4180 = vmatpush1.msra.mxu0 %v69
    %4181 = vmatprep.subr.mxu0 %v72
    %4182 = vmatpush1.msra.mxu0 %v71
    %4183 = vmatprep.subr.mxu0 %v74
    %4184 = vmatpush1.msra.mxu0 %v73
    %4185 = vmatprep.subr.mxu0 %v76
    %4186 = vmatpush1.msra.mxu0 %v75
    %4187 = vmatprep.subr.mxu0 %v78
    %4188 = vmatpush1.msra.mxu0 %v77
    %4189 = vmatprep.subr.mxu0 %v80
    %4190 = vmatpush1.msra.mxu0 %v79
    %4191 = vmatprep.subr.mxu0 %v82
    %4192 = vmatpush1.msra.mxu0 %v81
    %4193 = vmatprep.subr.mxu0 %v84
    %4194 = vmatpush1.msra.mxu0 %v83
    %4195 = vmatprep.subr.mxu0 %v86
    %4196 = vmatpush1.msra.mxu0 %v85
    %4197 = vmatprep.subr.mxu0 %v88
    %4198 = vmatpush1.msra.mxu0 %v87
    %4199 = vmatprep.subr.mxu0 %v90
    %4200 = vmatpush1.msra.mxu0 %v89
    %4201 = vmatprep.subr.mxu0 %v92
    %4202 = vmatpush1.msra.mxu0 %v91
    %4203 = vmatprep.subr.mxu0 0.0
    %4204 = vmatpush1.msra.mxu0 0.0
    %4205 = vmatprep.subr.mxu0 0.0
    %4206 = vmatpush1.msra.mxu0 0.0
    %4207 = vmatprep.subr.mxu0 0.0
    %4208 = vmatpush1.msra.mxu0 0.0
    %4209 = vmatprep.subr.mxu0 0.0
    %4210 = vmatpush1.msra.mxu0 0.0
    %4211 = vmatprep.subr.mxu0 0.0
    %4212 = vmatpush1.msra.mxu0 0.0
    %4213 = vmatprep.subr.mxu0 0.0
    %4214 = vmatpush1.msra.mxu0 0.0
    %4215 = vmatprep.subr.mxu0 0.0
    %4216 = vmatpush1.msra.mxu0 0.0
    %4217 = vmatprep.subr.mxu0 0.0
    %4218 = vmatpush1.msra.mxu0 0.0
    %4219 = vmatprep.subr.mxu0 0.0
    %4220 = vmatpush1.msra.mxu0 0.0
    %4221 = vmatprep.subr.mxu0 0.0
    %4222 = vmatpush1.msra.mxu0 0.0
    %4223 = vmatprep.subr.mxu0 0.0
    %4224 = vmatpush1.msra.mxu0 0.0
    %4225 = vmatprep.subr.mxu0 0.0
    %4226 = vmatpush1.msra.mxu0 0.0
    %4227 = vmatprep.subr.mxu0 0.0
    %4228 = vmatpush1.msra.mxu0 0.0
    %4229 = vmatprep.subr.mxu0 0.0
    %4230 = vmatpush1.msra.mxu0 0.0
    %4231 = vmatprep.subr.mxu0 0.0
    %4232 = vmatpush1.msra.mxu0 0.0
    %4233 = vmatprep.subr.mxu0 0.0
    %4234 = vmatpush1.msra.mxu0 0.0
    %4235 = vmatprep.mubr.f32.mxu0 0.0
    %4236 = vmatmul.mubr.f32.gmra.mrb[0].mxu0 %v4154
    %v4237 = vpop.f32.mrb[0].mxu0
    %v4238 = vadd.f32 0.0, %v4237
    %v4239 = vpop.f32.mrb[0].mxu0
    %v4240 = vadd.f32 0.0, %v4239
    %4241 = vdwg.mxu0
    %v4244 = vcombine.low %v4238, %v4240
    %v4245 = vcombine.high %v4238, %v4240
    %v4247 = vunpack.c.l.s4 1966171168
    %v4248 = vunpack.c.0.s8 %v4247
    %v4249 = vlaneseq
    %v4250 = vshrl.u32 %v4249, 7
    %v4251 = vsub.s32 %v4248, %v4250
    %v4252 = vrot.slane %v4244, %v4251
    %v4254 = vunpack.c.l.s4 1966171168
    %v4255 = vunpack.c.0.s8 %v4254
    %v4256 = vlaneseq
    %v4257 = vshrl.u32 %v4256, 7
    %v4258 = vsub.s32 %v4255, %v4257
    %v4259 = vrot.slane %v4245, %v4258
    %v4260 = vcombine.high %v4252, %v4252
    %v4261 = vcombine.high %v4259, %v4259
    %v4263 = vunpack.c.l.s4 1966171168
    %v4264 = vunpack.c.0.s8 %v4263
    %v4265 = vlaneseq
    %v4266 = vshrl.u32 %v4265, 7
    %v4267 = vsub.s32 %v4264, %v4266
    %v4268 = vrot.slane %v4252, %v4267
    %v4270 = vunpack.c.l.s4 1966171168
    %v4271 = vunpack.c.0.s8 %v4270
    %v4272 = vlaneseq
    %v4273 = vshrl.u32 %v4272, 7
    %v4274 = vsub.s32 %v4271, %v4273
    %v4275 = vrot.slane %v4259, %v4274
    %v4277 = vunpack.c.l.s4 1966171168
    %v4278 = vunpack.c.0.s8 %v4277
    %v4279 = vlaneseq
    %v4280 = vshrl.u32 %v4279, 7
    %v4281 = vsub.s32 %v4278, %v4280
    %v4282 = vrot.slane %v4260, %v4281
    %v4284 = vunpack.c.l.s4 1966171168
    %v4285 = vunpack.c.0.s8 %v4284
    %v4286 = vlaneseq
    %v4287 = vshrl.u32 %v4286, 7
    %v4288 = vsub.s32 %v4285, %v4287
    %v4289 = vrot.slane %v4261, %v4288
    %v4290 = vcombine.high %v4268, %v4268
    %v4291 = vcombine.high %v4275, %v4275
    %v4292 = vcombine.high %v4282, %v4282
    %v4293 = vcombine.high %v4289, %v4289
    %v4302 = vadd.f32 %v4156, %v4268
    %v4303 = vadd.f32 %v4158, %v4282
    %v4304 = vadd.f32 %v4160, %v4290
    %v4305 = vadd.f32 %v4162, %v4292
    %v4306 = vadd.f32 %v4164, %v4275
    %v4307 = vadd.f32 %v4166, %v4289
    %v4308 = vadd.f32 %v4168, %v4291
    %v4309 = vadd.f32 %v4170, %v4293
    %v4310 = vmul.f32 %v4302, 0.5
    %v4311 = vmul.f32 %v4303, 0.5
    %v4312 = vmul.f32 %v4304, 0.5
    %v4313 = vmul.f32 %v4305, 0.5
    %v4314 = vmul.f32 %v4306, 0.5
    %v4315 = vmul.f32 %v4307, 0.5
    %v4316 = vmul.f32 %v4308, 0.5
    %v4317 = vmul.f32 %v4309, 0.5
    %v4318 = vtanh.pop %v4310
    %v4319 = vtanh.pop %v4311
    %v4320 = vtanh.pop %v4312
    %v4321 = vtanh.pop %v4313
    %v4322 = vtanh.pop %v4314
    %v4323 = vtanh.pop %v4315
    %v4324 = vtanh.pop %v4316
    %v4325 = vtanh.pop %v4317
    %v4326 = vadd.f32 %v4318, 1.0
    %v4327 = vadd.f32 %v4319, 1.0
    %v4328 = vadd.f32 %v4320, 1.0
    %v4329 = vadd.f32 %v4321, 1.0
    %v4330 = vadd.f32 %v4322, 1.0
    %v4331 = vadd.f32 %v4323, 1.0
    %v4332 = vadd.f32 %v4324, 1.0
    %v4333 = vadd.f32 %v4325, 1.0
    %v4334 = vmul.f32 %v4326, 0.5
    %v4335 = vmul.f32 %v4327, 0.5
    %v4336 = vmul.f32 %v4328, 0.5
    %v4337 = vmul.f32 %v4329, 0.5
    %v4338 = vmul.f32 %v4330, 0.5
    %v4339 = vmul.f32 %v4331, 0.5
    %v4340 = vmul.f32 %v4332, 0.5
    %v4341 = vmul.f32 %v4333, 0.5
    %v4350 = vrot.slane %v4334, 1
    %v4351 = vrot.slane %v4335, 1
    %v4352 = vrot.slane %v4336, 1
    %v4353 = vrot.slane %v4337, 1
    %v4354 = vrot.slane %v4338, 1
    %v4355 = vrot.slane %v4339, 1
    %v4356 = vrot.slane %v4340, 1
    %v4357 = vrot.slane %v4341, 1
    %v4367 = vcombine.high %v4154, %v4154
    %v4369 = vunpack.c.l.s4 1966171168
    %v4370 = vunpack.c.0.s8 %v4369
    %v4371 = vlaneseq
    %v4372 = vshrl.u32 %v4371, 7
    %v4373 = vsub.s32 %v4370, %v4372
    %v4374 = vrot.slane %v4154, %v4373
    %v4376 = vunpack.c.l.s4 1966171168
    %v4377 = vunpack.c.0.s8 %v4376
    %v4378 = vlaneseq
    %v4379 = vshrl.u32 %v4378, 7
    %v4380 = vsub.s32 %v4377, %v4379
    %v4381 = vrot.slane %v4367, %v4380
    %v4382 = vcombine.high %v4374, %v4374
    %v4383 = vcombine.high %v4381, %v4381
    %v4385 = vunpack.c.l.s4 1966171168
    %v4386 = vunpack.c.0.s8 %v4385
    %v4387 = vlaneseq
    %v4388 = vshrl.u32 %v4387, 7
    %v4389 = vsub.s32 %v4386, %v4388
    %v4390 = vrot.slane %v4374, %v4389
    %v4392 = vunpack.c.l.s4 1966171168
    %v4393 = vunpack.c.0.s8 %v4392
    %v4394 = vlaneseq
    %v4395 = vshrl.u32 %v4394, 7
    %v4396 = vsub.s32 %v4393, %v4395
    %v4397 = vrot.slane %v4381, %v4396
    %v4399 = vunpack.c.l.s4 1966171168
    %v4400 = vunpack.c.0.s8 %v4399
    %v4401 = vlaneseq
    %v4402 = vshrl.u32 %v4401, 7
    %v4403 = vsub.s32 %v4400, %v4402
    %v4404 = vrot.slane %v4382, %v4403
    %v4406 = vunpack.c.l.s4 1966171168
    %v4407 = vunpack.c.0.s8 %v4406
    %v4408 = vlaneseq
    %v4409 = vshrl.u32 %v4408, 7
    %v4410 = vsub.s32 %v4407, %v4409
    %v4411 = vrot.slane %v4383, %v4410
    %v4412 = vcombine.high %v4390, %v4390
    %v4413 = vcombine.high %v4397, %v4397
    %v4414 = vcombine.high %v4404, %v4404
    %v4415 = vcombine.high %v4411, %v4411
    %v4424 = vmul.f32 %v4350, %v4390
    %v4425 = vmul.f32 %v4351, %v4404
    %v4426 = vmul.f32 %v4352, %v4412
    %v4427 = vmul.f32 %v4353, %v4414
    %v4428 = vmul.f32 %v4354, %v4397
    %v4429 = vmul.f32 %v4355, %v4411
    %v4430 = vmul.f32 %v4356, %v4413
    %v4431 = vmul.f32 %v4357, %v4415
    %v4440 = vcombine.low %v4424, %v4425
    %v4441 = vcombine.low %v4426, %v4427
    %v4442 = vcombine.low %v4428, %v4429
    %v4443 = vcombine.low %v4430, %v4431
    %v4445 = vunpack.c.l.s4 1966171168
    %v4446 = vunpack.c.0.s8 %v4445
    %v4447 = vlaneseq
    %v4448 = vshrl.u32 %v4447, 7
    %v4449 = vsub.s32 %v4446, %v4448
    %v4450 = vrot.slane %v4440, %v4449
    %v4452 = vunpack.c.l.s4 1966171168
    %v4453 = vunpack.c.0.s8 %v4452
    %v4454 = vlaneseq
    %v4455 = vshrl.u32 %v4454, 7
    %v4456 = vsub.s32 %v4453, %v4455
    %v4457 = vrot.slane %v4441, %v4456
    %v4459 = vunpack.c.l.s4 1966171168
    %v4460 = vunpack.c.0.s8 %v4459
    %v4461 = vlaneseq
    %v4462 = vshrl.u32 %v4461, 7
    %v4463 = vsub.s32 %v4460, %v4462
    %v4464 = vrot.slane %v4442, %v4463
    %v4466 = vunpack.c.l.s4 1966171168
    %v4467 = vunpack.c.0.s8 %v4466
    %v4468 = vlaneseq
    %v4469 = vshrl.u32 %v4468, 7
    %v4470 = vsub.s32 %v4467, %v4469
    %v4471 = vrot.slane %v4443, %v4470
    %v4472 = vcombine.low %v4450, %v4457
    %v4473 = vcombine.low %v4464, %v4471
    %v4475 = vunpack.c.l.s4 1966171168
    %v4476 = vunpack.c.0.s8 %v4475
    %v4477 = vlaneseq
    %v4478 = vshrl.u32 %v4477, 7
    %v4479 = vsub.s32 %v4476, %v4478
    %v4480 = vrot.slane %v4472, %v4479
    %v4482 = vunpack.c.l.s4 1966171168
    %v4483 = vunpack.c.0.s8 %v4482
    %v4484 = vlaneseq
    %v4485 = vshrl.u32 %v4484, 7
    %v4486 = vsub.s32 %v4483, %v4485
    %v4487 = vrot.slane %v4473, %v4486
    %v4488 = vcombine.low %v4480, %v4487
    %4490 = vmatprep.subr.mxu0 0.0
    %4491 = vmatpush1.msra.mxu0 %v93
    %4492 = vmatprep.subr.mxu0 0.0
    %4493 = vmatpush1.msra.mxu0 %v94
    %4494 = vmatprep.subr.mxu0 0.0
    %4495 = vmatpush1.msra.mxu0 %v95
    %4496 = vmatprep.subr.mxu0 0.0
    %4497 = vmatpush1.msra.mxu0 %v96
    %4498 = vmatprep.subr.mxu0 0.0
    %4499 = vmatpush1.msra.mxu0 %v97
    %4500 = vmatprep.subr.mxu0 0.0
    %4501 = vmatpush1.msra.mxu0 %v98
    %4502 = vmatprep.subr.mxu0 0.0
    %4503 = vmatpush1.msra.mxu0 %v99
    %4504 = vmatprep.subr.mxu0 0.0
    %4505 = vmatpush1.msra.mxu0 %v100
    %4506 = vmatprep.subr.mxu0 0.0
    %4507 = vmatpush1.msra.mxu0 %v101
    %4508 = vmatprep.subr.mxu0 0.0
    %4509 = vmatpush1.msra.mxu0 %v102
    %4510 = vmatprep.subr.mxu0 0.0
    %4511 = vmatpush1.msra.mxu0 %v103
    %4512 = vmatprep.subr.mxu0 0.0
    %4513 = vmatpush1.msra.mxu0 %v104
    %4514 = vmatprep.subr.mxu0 0.0
    %4515 = vmatpush1.msra.mxu0 %v105
    %4516 = vmatprep.subr.mxu0 0.0
    %4517 = vmatpush1.msra.mxu0 %v106
    %4518 = vmatprep.subr.mxu0 0.0
    %4519 = vmatpush1.msra.mxu0 %v107
    %4520 = vmatprep.subr.mxu0 0.0
    %4521 = vmatpush1.msra.mxu0 %v108
    %4522 = vmatprep.subr.mxu0 0.0
    %4523 = vmatpush1.msra.mxu0 0.0
    %4524 = vmatprep.subr.mxu0 0.0
    %4525 = vmatpush1.msra.mxu0 0.0
    %4526 = vmatprep.subr.mxu0 0.0
    %4527 = vmatpush1.msra.mxu0 0.0
    %4528 = vmatprep.subr.mxu0 0.0
    %4529 = vmatpush1.msra.mxu0 0.0
    %4530 = vmatprep.subr.mxu0 0.0
    %4531 = vmatpush1.msra.mxu0 0.0
    %4532 = vmatprep.subr.mxu0 0.0
    %4533 = vmatpush1.msra.mxu0 0.0
    %4534 = vmatprep.subr.mxu0 0.0
    %4535 = vmatpush1.msra.mxu0 0.0
    %4536 = vmatprep.subr.mxu0 0.0
    %4537 = vmatpush1.msra.mxu0 0.0
    %4538 = vmatprep.subr.mxu0 0.0
    %4539 = vmatpush1.msra.mxu0 0.0
    %4540 = vmatprep.subr.mxu0 0.0
    %4541 = vmatpush1.msra.mxu0 0.0
    %4542 = vmatprep.subr.mxu0 0.0
    %4543 = vmatpush1.msra.mxu0 0.0
    %4544 = vmatprep.subr.mxu0 0.0
    %4545 = vmatpush1.msra.mxu0 0.0
    %4546 = vmatprep.subr.mxu0 0.0
    %4547 = vmatpush1.msra.mxu0 0.0
    %4548 = vmatprep.subr.mxu0 0.0
    %4549 = vmatpush1.msra.mxu0 0.0
    %4550 = vmatprep.subr.mxu0 0.0
    %4551 = vmatpush1.msra.mxu0 0.0
    %4552 = vmatprep.subr.mxu0 0.0
    %4553 = vmatpush1.msra.mxu0 0.0
    %4554 = vmatprep.mubr.f32.mxu0 0.0
    %4555 = vmatmul.mubr.f32.gmra.mrb[0].mxu0 %v4488
    %v4556 = vpop.f32.mrb[0].mxu0
    %v4557 = vadd.f32 0.0, %v4556
    %v4558 = vpop.f32.mrb[0].mxu0
    %4559 = vdwg.mxu0
    %v4568 = vrot.slane %v4156, 2
    %v4569 = vrot.slane %v4158, 2
    %v4570 = vrot.slane %v4160, 2
    %v4571 = vrot.slane %v4162, 2
    %v4572 = vrot.slane %v4164, 2
    %v4573 = vrot.slane %v4166, 2
    %v4574 = vrot.slane %v4168, 2
    %v4575 = vrot.slane %v4170, 2
    %v4585 = vcombine.high %v4557, %v4557
    %v4587 = vunpack.c.l.s4 1966171168
    %v4588 = vunpack.c.0.s8 %v4587
    %v4589 = vlaneseq
    %v4590 = vshrl.u32 %v4589, 7
    %v4591 = vsub.s32 %v4588, %v4590
    %v4592 = vrot.slane %v4557, %v4591
    %v4594 = vunpack.c.l.s4 1966171168
    %v4595 = vunpack.c.0.s8 %v4594
    %v4596 = vlaneseq
    %v4597 = vshrl.u32 %v4596, 7
    %v4598 = vsub.s32 %v4595, %v4597
    %v4599 = vrot.slane %v4585, %v4598
    %v4600 = vcombine.high %v4592, %v4592
    %v4601 = vcombine.high %v4599, %v4599
    %v4603 = vunpack.c.l.s4 1966171168
    %v4604 = vunpack.c.0.s8 %v4603
    %v4605 = vlaneseq
    %v4606 = vshrl.u32 %v4605, 7
    %v4607 = vsub.s32 %v4604, %v4606
    %v4608 = vrot.slane %v4592, %v4607
    %v4610 = vunpack.c.l.s4 1966171168
    %v4611 = vunpack.c.0.s8 %v4610
    %v4612 = vlaneseq
    %v4613 = vshrl.u32 %v4612, 7
    %v4614 = vsub.s32 %v4611, %v4613
    %v4615 = vrot.slane %v4599, %v4614
    %v4617 = vunpack.c.l.s4 1966171168
    %v4618 = vunpack.c.0.s8 %v4617
    %v4619 = vlaneseq
    %v4620 = vshrl.u32 %v4619, 7
    %v4621 = vsub.s32 %v4618, %v4620
    %v4622 = vrot.slane %v4600, %v4621
    %v4624 = vunpack.c.l.s4 1966171168
    %v4625 = vunpack.c.0.s8 %v4624
    %v4626 = vlaneseq
    %v4627 = vshrl.u32 %v4626, 7
    %v4628 = vsub.s32 %v4625, %v4627
    %v4629 = vrot.slane %v4601, %v4628
    %v4630 = vcombine.high %v4608, %v4608
    %v4631 = vcombine.high %v4615, %v4615
    %v4632 = vcombine.high %v4622, %v4622
    %v4633 = vcombine.high %v4629, %v4629
    %v4642 = vadd.f32 %v4568, %v4608
    %v4643 = vadd.f32 %v4569, %v4622
    %v4644 = vadd.f32 %v4570, %v4630
    %v4645 = vadd.f32 %v4571, %v4632
    %v4646 = vadd.f32 %v4572, %v4615
    %v4647 = vadd.f32 %v4573, %v4629
    %v4648 = vadd.f32 %v4574, %v4631
    %v4649 = vadd.f32 %v4575, %v4633
    %v4650 = vtanh.pop %v4642
    %v4651 = vtanh.pop %v4643
    %v4652 = vtanh.pop %v4644
    %v4653 = vtanh.pop %v4645
    %v4654 = vtanh.pop %v4646
    %v4655 = vtanh.pop %v4647
    %v4656 = vtanh.pop %v4648
    %v4657 = vtanh.pop %v4649
    %v4658 = vsub.f32 %v4650, %v4390
    %v4659 = vsub.f32 %v4651, %v4404
    %v4660 = vsub.f32 %v4652, %v4412
    %v4661 = vsub.f32 %v4653, %v4414
    %v4662 = vsub.f32 %v4654, %v4397
    %v4663 = vsub.f32 %v4655, %v4411
    %v4664 = vsub.f32 %v4656, %v4413
    %v4665 = vsub.f32 %v4657, %v4415
    %v4666 = vmul.f32 %v4334, %v4658
    %v4667 = vmul.f32 %v4335, %v4659
    %v4668 = vmul.f32 %v4336, %v4660
    %v4669 = vmul.f32 %v4337, %v4661
    %v4670 = vmul.f32 %v4338, %v4662
    %v4671 = vmul.f32 %v4339, %v4663
    %v4672 = vmul.f32 %v4340, %v4664
    %v4673 = vmul.f32 %v4341, %v4665
    %v4682 = vcombine.low %v4666, %v4667
    %v4683 = vcombine.low %v4668, %v4669
    %v4684 = vcombine.low %v4670, %v4671
    %v4685 = vcombine.low %v4672, %v4673
    %v4687 = vunpack.c.l.s4 1966171168
    %v4688 = vunpack.c.0.s8 %v4687
    %v4689 = vlaneseq
    %v4690 = vshrl.u32 %v4689, 7
    %v4691 = vsub.s32 %v4688, %v4690
    %v4692 = vrot.slane %v4682, %v4691
    %v4694 = vunpack.c.l.s4 1966171168
    %v4695 = vunpack.c.0.s8 %v4694
    %v4696 = vlaneseq
    %v4697 = vshrl.u32 %v4696, 7
    %v4698 = vsub.s32 %v4695, %v4697
    %v4699 = vrot.slane %v4683, %v4698
    %v4701 = vunpack.c.l.s4 1966171168
    %v4702 = vunpack.c.0.s8 %v4701
    %v4703 = vlaneseq
    %v4704 = vshrl.u32 %v4703, 7
    %v4705 = vsub.s32 %v4702, %v4704
    %v4706 = vrot.slane %v4684, %v4705
    %v4708 = vunpack.c.l.s4 1966171168
    %v4709 = vunpack.c.0.s8 %v4708
    %v4710 = vlaneseq
    %v4711 = vshrl.u32 %v4710, 7
    %v4712 = vsub.s32 %v4709, %v4711
    %v4713 = vrot.slane %v4685, %v4712
    %v4714 = vcombine.low %v4692, %v4699
    %v4715 = vcombine.low %v4706, %v4713
    %v4717 = vunpack.c.l.s4 1966171168
    %v4718 = vunpack.c.0.s8 %v4717
    %v4719 = vlaneseq
    %v4720 = vshrl.u32 %v4719, 7
    %v4721 = vsub.s32 %v4718, %v4720
    %v4722 = vrot.slane %v4714, %v4721
    %v4724 = vunpack.c.l.s4 1966171168
    %v4725 = vunpack.c.0.s8 %v4724
    %v4726 = vlaneseq
    %v4727 = vshrl.u32 %v4726, 7
    %v4728 = vsub.s32 %v4725, %v4727
    %v4729 = vrot.slane %v4715, %v4728
    %v4730 = vcombine.low %v4722, %v4729
    %v4732 = vadd.f32 %v4154, %v4730
    %4733 = vst [vmem:[#allocation8] sm:$0xff] %v4732
    // Predicated region
    $region30: #{tpu_custom_call.1} parent=1 // pred_check
      _
    $region31: #{tpu_custom_call.1} parent=1 // pred_check_branch
      %4735 = sbr.rel (0) target = $region33
    $region32: #{tpu_custom_call.1} parent=1 // pred_region
      %s4737 = ssub.s32 128, 128
      %4738 = vsyncadd [#allocation4], %s4737
      %s4740 = sshll.u32 [#allocation8], 4
      %s4741 = int_to_ptr.vmem [resolvable:$true] %s4740
      %4743 = dma.vmem_to_hbm [thread:$0]  %s4741, 128, %s3, [#allocation4]
    $region33: #{tpu_custom_call.1} parent=1 // pred_fallthru
      _
    // Predicated region
    $region34: #{tpu_custom_call.1} parent=1 // pred_check
      _
    $region35: #{tpu_custom_call.1} parent=1 // pred_check_branch
      %4745 = sbr.rel (0) target = $region37
    $region36: #{tpu_custom_call.1} parent=1 // pred_region
      %4746 = dma.done [#allocation4], 128
    $region37: #{tpu_custom_call.1} parent=1 // pred_fallthru
      _
    %4747 = vsyncpa [#allocation3], 1
    %4748 = vsyncpa [#allocation6], 1
    %4749 = vsyncpa [#allocation4], 1

</llo_original>
